<compile_context>
chip_gen: v7x
topology: tpu7x:2x2x1
jax: 0.10.0
libtpu: 0.0.40
codegen_flags: <defaults>
</compile_context>

<pallas_src>
import functools

import numpy as np
import jax
import jax.numpy as jnp
from jax.experimental import pallas as pl


# ----------------------------------------------------------------------------- kernel

def _fused_mnist_kernel(*refs, num_layers, n_batch, rb0, s_last, fc1_out):
    """Whole MNIST forward in one grid step.

    refs = [x1,
            (band, bias_row, sel_w_even, sel_w_odd, sel_h_even, sel_h_odd) * num_layers,
            w1big, b1, w2t, b2,
            out]
    Layouts:
      x1:        (N*(S0+2)+2, S0+2)     rows = n*(S0+2)+padded_h, lanes = padded_w
      conv acc:  (N*RB_i, Cout_i*S_i)   rows = n*RB_i + h,        lanes = c*S_i + w
      pooled:    (S_L*N, Cout_L*S_L)    rows = ph*N + n,          lanes = c*S_L + pw
    """
    x_ref = refs[0]
    conv_refs = refs[1:1 + 6 * num_layers]
    w1_ref, b1_ref, w2_ref, b2_ref = refs[1 + 6 * num_layers:5 + 6 * num_layers]
    o_ref = refs[5 + 6 * num_layers]

    # Layer-0 "kh-shifted" views come straight from the (padded) input ref.
    nrows0 = n_batch * rb0
    b_kh = [x_ref[pl.ds(kh, nrows0), :] for kh in range(3)]

    pooled = None
    for i in range(num_layers):
        band_ref, brow_ref, se_ref, so_ref, te_ref, to_ref = conv_refs[6 * i:6 * i + 6]

        # conv: 3 banded matmuls (one per kernel row) over the whole batch, + bias + ReLU.
        acc = jnp.dot(b_kh[0], band_ref[0], preferred_element_type=jnp.float32)
        acc = acc + jnp.dot(b_kh[1], band_ref[1], preferred_element_type=jnp.float32)
        acc = acc + jnp.dot(b_kh[2], band_ref[2], preferred_element_type=jnp.float32)
        acc = jnp.maximum(acc + brow_ref[...], 0.0)

        # 2x2 max-pool along w (+ lane re-blocking / padding) via selection matmuls.
        mw = jnp.maximum(
            jnp.dot(acc, se_ref[...], preferred_element_type=jnp.float32),
            jnp.dot(acc, so_ref[...], preferred_element_type=jnp.float32))

        if i + 1 < num_layers:
            # max-pool along h, row re-blocking and the kh shift for the NEXT conv layer,
            # producing the three row-shifted padded inputs directly (still in registers).
            b_kh = [
                jnp.maximum(
                    jnp.dot(te_ref[kh], mw, preferred_element_type=jnp.float32),
                    jnp.dot(to_ref[kh], mw, preferred_element_type=jnp.float32))
                for kh in range(3)
            ]
        else:
            # final h-pool: rows become ph*N + n, lanes are c*S_L + pw.
            pooled = jnp.maximum(
                jnp.dot(te_ref[0], mw, preferred_element_type=jnp.float32),
                jnp.dot(to_ref[0], mw, preferred_element_type=jnp.float32))

    # fc1 with the NCHW flatten folded into a permuted weight:
    #   g[ph*N + n, ph'*fc1_out + j] contracts over (c, pw);  summing the block-diagonal
    #   (ph == ph') pieces gives h1[n, j].
    g = jnp.dot(pooled, w1_ref[...], preferred_element_type=jnp.float32)
    h1 = None
    for p in range(s_last):
        blk = g[p * n_batch:(p + 1) * n_batch, p * fc1_out:(p + 1) * fc1_out]
        h1 = blk if h1 is None else h1 + blk
    h1 = h1 + b1_ref[...]

    # fc2 (no activation between fc1 and fc2, matching the PyTorch forward).
    out = jnp.dot(h1, w2_ref[...], preferred_element_type=jnp.float32) + b2_ref[...]
    o_ref[...] = out.astype(o_ref.dtype)


# ---------------------------------------------------------------------- host-side prep

def _build_kernel_operands(x_nchw, params):
    """Build the fused-kernel operands (banded conv matrices, pooling selections,
    permuted fc1 weight).  The 0/1 selection matrices are pure structure (numpy
    constants); only weight-dependent tensors are traced jnp ops."""
    convs = params["convs"]
    num_layers = len(convs)
    n = x_nchw.shape[0]
    s0 = x_nchw.shape[2]
    assert x_nchw.shape[2] == x_nchw.shape[3]

    operands = []

    # ---- layer-0 input: rows = image*(S0+2) + padded_h, lanes = padded_w (+2 slack rows)
    rb0 = s0 + 2
    xpad = jnp.pad(x_nchw[:, 0].astype(jnp.float32), ((0, 0), (1, 1), (1, 1)))
    x1 = xpad.reshape(n * rb0, s0 + 2)
    x1 = jnp.pad(x1, ((0, 2), (0, 0)))
    operands.append(x1)

    spatial = s0      # conv input spatial size of the current layer
    rb = rb0          # row-block (rows per image) of the current conv accumulator
    cin = 1
    for i, (w, b) in enumerate(convs):
        cout = w.shape[0]
        s_in = spatial
        lb_in = s_in + 2            # padded-width lane block of this layer's input
        s_out = s_in // 2           # spatial size after the 2x2 pool
        last = (i == num_layers - 1)

        # Banded conv matrices: band[kh][cin*lb_in + wp, c*s_in + w] = W[c, cin, kh, wp - w].
        mats = []
        for kh in range(3):
            m = 0.0
            for kw in range(3):
                d = np.zeros((lb_in, s_in), np.float32)
                idx = np.arange(s_in)
                d[idx + kw, idx] = 1.0
                m = m + jnp.einsum("oc,pq->cpoq",
                                   w[:, :, kh, kw].astype(jnp.float32),
                                   jnp.asarray(d))
            mats.append(jnp.reshape(m, (cin * lb_in, cout * s_in)))
        operands.append(jnp.stack(mats, 0))

        # Bias row, c-major blocks matching lanes c*s_in + w.
        operands.append(jnp.repeat(b.astype(jnp.float32), s_in)[None, :])

        # Pooling / re-layout selection matrices.
        if not last:
            lb_next = s_out + 2
            se = np.zeros((cout * s_in, cout * lb_next), np.float32)
            so = np.zeros_like(se)
            for c in range(cout):
                for pw in range(s_out):
                    se[c * s_in + 2 * pw, c * lb_next + pw + 1] = 1.0
                    so[c * s_in + 2 * pw + 1, c * lb_next + pw + 1] = 1.0
            te = np.zeros((3, n * s_out, n * rb), np.float32)
            to = np.zeros_like(te)
            for kh in range(3):
                for nn in range(n):
                    for h2 in range(s_out):
                        src = h2 + kh - 1          # pooled row feeding padded row h2+kh
                        if 0 <= src < s_out:
                            te[kh, nn * s_out + h2, nn * rb + 2 * src] = 1.0
                            to[kh, nn * s_out + h2, nn * rb + 2 * src + 1] = 1.0
        else:
            se = np.zeros((cout * s_in, cout * s_out), np.float32)
            so = np.zeros_like(se)
            for c in range(cout):
                for pw in range(s_out):
                    se[c * s_in + 2 * pw, c * s_out + pw] = 1.0
                    so[c * s_in + 2 * pw + 1, c * s_out + pw] = 1.0
            te = np.zeros((1, s_out * n, n * rb), np.float32)
            to = np.zeros_like(te)
            for nn in range(n):
                for ph in range(s_out):
                    te[0, ph * n + nn, nn * rb + 2 * ph] = 1.0
                    to[0, ph * n + nn, nn * rb + 2 * ph + 1] = 1.0
        operands += [jnp.asarray(se), jnp.asarray(so), jnp.asarray(te), jnp.asarray(to)]

        spatial = s_out
        rb = s_out
        cin = cout

    # fc1, with torch's NCHW flatten (feature = c*S^2 + ph*S + pw) folded into a
    # weight permutation: w1big[c*S + pw, ph*H1 + j] = fc1_w[j, c*S^2 + ph*S + pw].
    s_last = spatial
    cout_last = cin
    h1_dim = params["fc1_w"].shape[0]
    w1big = (params["fc1_w"].astype(jnp.float32)
             .reshape(h1_dim, cout_last, s_last, s_last)
             .transpose(1, 3, 2, 0)
             .reshape(cout_last * s_last, s_last * h1_dim))
    operands.append(w1big)
    operands.append(params["fc1_b"].astype(jnp.float32)[None, :])
    operands.append(params["fc2_w"].astype(jnp.float32).T)
    operands.append(params["fc2_b"].astype(jnp.float32)[None, :])

    meta = dict(num_layers=num_layers, n_batch=n, rb0=rb0,
                s_last=s_last, fc1_out=h1_dim)
    return operands, meta


def mnist_forward(x_nchw, params):
    """Full MNIST forward (NCHW input) as one fused Pallas TPU kernel call."""
    operands, meta = _build_kernel_operands(x_nchw, params)
    n = x_nchw.shape[0]
    n_out = params["fc2_w"].shape[0]
    kernel = functools.partial(_fused_mnist_kernel, **meta)
    return pl.pallas_call(
        kernel,
        out_shape=jax.ShapeDtypeStruct((n, n_out), jnp.float32),
    )(*operands)


# ----------------------------------------------------------------------------- reference

def reference_forward(x_nchw, params):
    """Pure-JAX reference of the PyTorch forward, for a correctness check."""
    x = x_nchw
    for w, b in params["convs"]:
        x = jax.lax.conv_general_dilated(
            x, w, window_strides=(1, 1), padding=((1, 1), (1, 1)),
            dimension_numbers=("NCHW", "OIHW", "NCHW"))
        x = jnp.maximum(x + b.reshape(1, -1, 1, 1), 0.0)
        n, c, h, w_ = x.shape
        x = x.reshape(n, c, h // 2, 2, w_ // 2, 2).max(axis=(3, 5))
    x = x.reshape(x.shape[0], -1)
    x = x @ params["fc1_w"].T + params["fc1_b"]
    x = x @ params["fc2_w"].T + params["fc2_b"]
    return x


def make_params(key, out_channels):
    """Deterministic synthetic parameters with the shapes nn.Module.__init__ implies."""
    keys = jax.random.split(key, 2 * len(out_channels) + 4)
    convs = []
    cin = 1
    ki = 0
    for cout in out_channels:
        w = 0.1 * jax.random.normal(keys[ki], (cout, cin, 3, 3), jnp.float32); ki += 1
        b = 0.1 * jax.random.normal(keys[ki], (cout,), jnp.float32); ki += 1
        convs.append((w, b))
        cin = cout
    # _get_conv_output_size((1, 28, 28), ...): 28 halved per conv block.
    spatial = 28 // (2 ** len(out_channels))
    feat = out_channels[-1] * spatial * spatial
    fc1_w = 0.1 * jax.random.normal(keys[ki], (256, feat), jnp.float32); ki += 1
    fc1_b = 0.1 * jax.random.normal(keys[ki], (256,), jnp.float32); ki += 1
    fc2_w = 0.1 * jax.random.normal(keys[ki], (10, 256), jnp.float32); ki += 1
    fc2_b = 0.1 * jax.random.normal(keys[ki], (10,), jnp.float32); ki += 1
    return {"convs": convs, "fc1_w": fc1_w, "fc1_b": fc1_b,
            "fc2_w": fc2_w, "fc2_b": fc2_b}


if __name__ == "__main__":
    out_channels = (4, 8)      # spatial must start at 28x28 (fc1 sizing in the module)
    key = jax.random.PRNGKey(0)
    kx, kp = jax.random.split(key)
    x = jax.random.normal(kx, (2, 1, 28, 28), jnp.float32)   # NCHW, batch=2
    params = make_params(kp, out_channels)

    out = jax.jit(mnist_forward)(x, params)
    out = jax.block_until_ready(out)
    assert out.shape == (2, 10), out.shape

    ref = reference_forward(x, params)
    assert jnp.allclose(out, ref, atol=1e-3, rtol=1e-3), (
        float(jnp.max(jnp.abs(out - ref))))

    print("KERNEL_OK")
</pallas_src>

<mosaic_0001>
module attributes {stable_mosaic.version = 11 : i64} {
  func.func @_fused_mnist_kernel(%arg0: memref<62x30xf32, #tpu.memory_space<vmem>>, %arg1: memref<3x30x112xf32, #tpu.memory_space<vmem>>, %arg2: memref<1x112xf32, #tpu.memory_space<vmem>>, %arg3: memref<112x64xf32, #tpu.memory_space<vmem>>, %arg4: memref<112x64xf32, #tpu.memory_space<vmem>>, %arg5: memref<3x28x60xf32, #tpu.memory_space<vmem>>, %arg6: memref<3x28x60xf32, #tpu.memory_space<vmem>>, %arg7: memref<3x64x112xf32, #tpu.memory_space<vmem>>, %arg8: memref<1x112xf32, #tpu.memory_space<vmem>>, %arg9: memref<112x56xf32, #tpu.memory_space<vmem>>, %arg10: memref<112x56xf32, #tpu.memory_space<vmem>>, %arg11: memref<1x14x28xf32, #tpu.memory_space<vmem>>, %arg12: memref<1x14x28xf32, #tpu.memory_space<vmem>>, %arg13: memref<56x1792xf32, #tpu.memory_space<vmem>>, %arg14: memref<1x256xf32, #tpu.memory_space<vmem>>, %arg15: memref<256x10xf32, #tpu.memory_space<vmem>>, %arg16: memref<1x10xf32, #tpu.memory_space<vmem>>, %arg17: memref<2x10xf32, #tpu.memory_space<vmem>>) attributes {dimension_semantics = [], scalar_prefetch = 0 : i64, scratch_operands = 0 : i64, tpu.core_type = #tpu.core_type<tc>} {
    %c0 = arith.constant 0 : index
    %c0_0 = arith.constant 0 : index
    %0 = vector.load %arg0[%c0, %c0_0] : memref<62x30xf32, #tpu.memory_space<vmem>>, vector<60x30xf32>
    %c1 = arith.constant 1 : index
    %c0_1 = arith.constant 0 : index
    %1 = vector.load %arg0[%c1, %c0_1] : memref<62x30xf32, #tpu.memory_space<vmem>>, vector<60x30xf32>
    %c2 = arith.constant 2 : index
    %c0_2 = arith.constant 0 : index
    %2 = vector.load %arg0[%c2, %c0_2] : memref<62x30xf32, #tpu.memory_space<vmem>>, vector<60x30xf32>
    %c0_3 = arith.constant 0 : index
    %c0_4 = arith.constant 0 : index
    %c0_5 = arith.constant 0 : index
    %3 = vector.load %arg1[%c0_3, %c0_4, %c0_5] : memref<3x30x112xf32, #tpu.memory_space<vmem>>, vector<1x30x112xf32>
    %4 = vector.shape_cast %3 : vector<1x30x112xf32> to vector<30x112xf32>
    %cst = arith.constant dense<0.000000e+00> : vector<60x112xf32>
    %5 = tpu.matmul %0, %4, %cst {dimension_numbers = #tpu.dot_dimension_numbers<[1], [0], [0], [1], [0, 0, 1, 1], [], []>} : vector<60x30xf32>, vector<30x112xf32>, vector<60x112xf32> -> vector<60x112xf32>
    %c1_6 = arith.constant 1 : index
    %c0_7 = arith.constant 0 : index
    %c0_8 = arith.constant 0 : index
    %6 = vector.load %arg1[%c1_6, %c0_7, %c0_8] : memref<3x30x112xf32, #tpu.memory_space<vmem>>, vector<1x30x112xf32>
    %7 = vector.shape_cast %6 : vector<1x30x112xf32> to vector<30x112xf32>
    %cst_9 = arith.constant dense<0.000000e+00> : vector<60x112xf32>
    %8 = tpu.matmul %1, %7, %cst_9 {dimension_numbers = #tpu.dot_dimension_numbers<[1], [0], [0], [1], [0, 0, 1, 1], [], []>} : vector<60x30xf32>, vector<30x112xf32>, vector<60x112xf32> -> vector<60x112xf32>
    %9 = arith.addf %5, %8 : vector<60x112xf32>
    %c2_10 = arith.constant 2 : index
    %c0_11 = arith.constant 0 : index
    %c0_12 = arith.constant 0 : index
    %10 = vector.load %arg1[%c2_10, %c0_11, %c0_12] : memref<3x30x112xf32, #tpu.memory_space<vmem>>, vector<1x30x112xf32>
    %11 = vector.shape_cast %10 : vector<1x30x112xf32> to vector<30x112xf32>
    %cst_13 = arith.constant dense<0.000000e+00> : vector<60x112xf32>
    %12 = tpu.matmul %2, %11, %cst_13 {dimension_numbers = #tpu.dot_dimension_numbers<[1], [0], [0], [1], [0, 0, 1, 1], [], []>} : vector<60x30xf32>, vector<30x112xf32>, vector<60x112xf32> -> vector<60x112xf32>
    %13 = arith.addf %9, %12 : vector<60x112xf32>
    %c0_14 = arith.constant 0 : index
    %c0_15 = arith.constant 0 : index
    %14 = vector.load %arg2[%c0_14, %c0_15] : memref<1x112xf32, #tpu.memory_space<vmem>>, vector<1x112xf32>
    %15 = vector.broadcast %14 : vector<1x112xf32> to vector<60x112xf32>
    %16 = arith.addf %13, %15 : vector<60x112xf32>
    %cst_16 = arith.constant 0.000000e+00 : f32
    %17 = vector.broadcast %cst_16 : f32 to vector<60x112xf32>
    %18 = arith.maximumf %16, %17 : vector<60x112xf32>
    %c0_17 = arith.constant 0 : index
    %c0_18 = arith.constant 0 : index
    %19 = vector.load %arg3[%c0_17, %c0_18] : memref<112x64xf32, #tpu.memory_space<vmem>>, vector<112x64xf32>
    %cst_19 = arith.constant dense<0.000000e+00> : vector<60x64xf32>
    %20 = tpu.matmul %18, %19, %cst_19 {dimension_numbers = #tpu.dot_dimension_numbers<[1], [0], [0], [1], [0, 0, 1, 1], [], []>} : vector<60x112xf32>, vector<112x64xf32>, vector<60x64xf32> -> vector<60x64xf32>
    %c0_20 = arith.constant 0 : index
    %c0_21 = arith.constant 0 : index
    %21 = vector.load %arg4[%c0_20, %c0_21] : memref<112x64xf32, #tpu.memory_space<vmem>>, vector<112x64xf32>
    %cst_22 = arith.constant dense<0.000000e+00> : vector<60x64xf32>
    %22 = tpu.matmul %18, %21, %cst_22 {dimension_numbers = #tpu.dot_dimension_numbers<[1], [0], [0], [1], [0, 0, 1, 1], [], []>} : vector<60x112xf32>, vector<112x64xf32>, vector<60x64xf32> -> vector<60x64xf32>
    %23 = arith.maximumf %20, %22 : vector<60x64xf32>
    %c0_23 = arith.constant 0 : index
    %c0_24 = arith.constant 0 : index
    %c0_25 = arith.constant 0 : index
    %24 = vector.load %arg5[%c0_23, %c0_24, %c0_25] : memref<3x28x60xf32, #tpu.memory_space<vmem>>, vector<1x28x60xf32>
    %25 = vector.shape_cast %24 : vector<1x28x60xf32> to vector<28x60xf32>
    %cst_26 = arith.constant dense<0.000000e+00> : vector<28x64xf32>
    %26 = tpu.matmul %25, %23, %cst_26 {dimension_numbers = #tpu.dot_dimension_numbers<[1], [0], [0], [1], [0, 0, 1, 1], [], []>} : vector<28x60xf32>, vector<60x64xf32>, vector<28x64xf32> -> vector<28x64xf32>
    %c0_27 = arith.constant 0 : index
    %c0_28 = arith.constant 0 : index
    %c0_29 = arith.constant 0 : index
    %27 = vector.load %arg6[%c0_27, %c0_28, %c0_29] : memref<3x28x60xf32, #tpu.memory_space<vmem>>, vector<1x28x60xf32>
    %28 = vector.shape_cast %27 : vector<1x28x60xf32> to vector<28x60xf32>
    %cst_30 = arith.constant dense<0.000000e+00> : vector<28x64xf32>
    %29 = tpu.matmul %28, %23, %cst_30 {dimension_numbers = #tpu.dot_dimension_numbers<[1], [0], [0], [1], [0, 0, 1, 1], [], []>} : vector<28x60xf32>, vector<60x64xf32>, vector<28x64xf32> -> vector<28x64xf32>
    %30 = arith.maximumf %26, %29 : vector<28x64xf32>
    %c1_31 = arith.constant 1 : index
    %c0_32 = arith.constant 0 : index
    %c0_33 = arith.constant 0 : index
    %31 = vector.load %arg5[%c1_31, %c0_32, %c0_33] : memref<3x28x60xf32, #tpu.memory_space<vmem>>, vector<1x28x60xf32>
    %32 = vector.shape_cast %31 : vector<1x28x60xf32> to vector<28x60xf32>
    %cst_34 = arith.constant dense<0.000000e+00> : vector<28x64xf32>
    %33 = tpu.matmul %32, %23, %cst_34 {dimension_numbers = #tpu.dot_dimension_numbers<[1], [0], [0], [1], [0, 0, 1, 1], [], []>} : vector<28x60xf32>, vector<60x64xf32>, vector<28x64xf32> -> vector<28x64xf32>
    %c1_35 = arith.constant 1 : index
    %c0_36 = arith.constant 0 : index
    %c0_37 = arith.constant 0 : index
    %34 = vector.load %arg6[%c1_35, %c0_36, %c0_37] : memref<3x28x60xf32, #tpu.memory_space<vmem>>, vector<1x28x60xf32>
    %35 = vector.shape_cast %34 : vector<1x28x60xf32> to vector<28x60xf32>
    %cst_38 = arith.constant dense<0.000000e+00> : vector<28x64xf32>
    %36 = tpu.matmul %35, %23, %cst_38 {dimension_numbers = #tpu.dot_dimension_numbers<[1], [0], [0], [1], [0, 0, 1, 1], [], []>} : vector<28x60xf32>, vector<60x64xf32>, vector<28x64xf32> -> vector<28x64xf32>
    %37 = arith.maximumf %33, %36 : vector<28x64xf32>
    %c2_39 = arith.constant 2 : index
    %c0_40 = arith.constant 0 : index
    %c0_41 = arith.constant 0 : index
    %38 = vector.load %arg5[%c2_39, %c0_40, %c0_41] : memref<3x28x60xf32, #tpu.memory_space<vmem>>, vector<1x28x60xf32>
    %39 = vector.shape_cast %38 : vector<1x28x60xf32> to vector<28x60xf32>
    %cst_42 = arith.constant dense<0.000000e+00> : vector<28x64xf32>
    %40 = tpu.matmul %39, %23, %cst_42 {dimension_numbers = #tpu.dot_dimension_numbers<[1], [0], [0], [1], [0, 0, 1, 1], [], []>} : vector<28x60xf32>, vector<60x64xf32>, vector<28x64xf32> -> vector<28x64xf32>
    %c2_43 = arith.constant 2 : index
    %c0_44 = arith.constant 0 : index
    %c0_45 = arith.constant 0 : index
    %41 = vector.load %arg6[%c2_43, %c0_44, %c0_45] : memref<3x28x60xf32, #tpu.memory_space<vmem>>, vector<1x28x60xf32>
    %42 = vector.shape_cast %41 : vector<1x28x60xf32> to vector<28x60xf32>
    %cst_46 = arith.constant dense<0.000000e+00> : vector<28x64xf32>
    %43 = tpu.matmul %42, %23, %cst_46 {dimension_numbers = #tpu.dot_dimension_numbers<[1], [0], [0], [1], [0, 0, 1, 1], [], []>} : vector<28x60xf32>, vector<60x64xf32>, vector<28x64xf32> -> vector<28x64xf32>
    %44 = arith.maximumf %40, %43 : vector<28x64xf32>
    %c0_47 = arith.constant 0 : index
    %c0_48 = arith.constant 0 : index
    %c0_49 = arith.constant 0 : index
    %45 = vector.load %arg7[%c0_47, %c0_48, %c0_49] : memref<3x64x112xf32, #tpu.memory_space<vmem>>, vector<1x64x112xf32>
    %46 = vector.shape_cast %45 : vector<1x64x112xf32> to vector<64x112xf32>
    %cst_50 = arith.constant dense<0.000000e+00> : vector<28x112xf32>
    %47 = tpu.matmul %30, %46, %cst_50 {dimension_numbers = #tpu.dot_dimension_numbers<[1], [0], [0], [1], [0, 0, 1, 1], [], []>} : vector<28x64xf32>, vector<64x112xf32>, vector<28x112xf32> -> vector<28x112xf32>
    %c1_51 = arith.constant 1 : index
    %c0_52 = arith.constant 0 : index
    %c0_53 = arith.constant 0 : index
    %48 = vector.load %arg7[%c1_51, %c0_52, %c0_53] : memref<3x64x112xf32, #tpu.memory_space<vmem>>, vector<1x64x112xf32>
    %49 = vector.shape_cast %48 : vector<1x64x112xf32> to vector<64x112xf32>
    %cst_54 = arith.constant dense<0.000000e+00> : vector<28x112xf32>
    %50 = tpu.matmul %37, %49, %cst_54 {dimension_numbers = #tpu.dot_dimension_numbers<[1], [0], [0], [1], [0, 0, 1, 1], [], []>} : vector<28x64xf32>, vector<64x112xf32>, vector<28x112xf32> -> vector<28x112xf32>
    %51 = arith.addf %47, %50 : vector<28x112xf32>
    %c2_55 = arith.constant 2 : index
    %c0_56 = arith.constant 0 : index
    %c0_57 = arith.constant 0 : index
    %52 = vector.load %arg7[%c2_55, %c0_56, %c0_57] : memref<3x64x112xf32, #tpu.memory_space<vmem>>, vector<1x64x112xf32>
    %53 = vector.shape_cast %52 : vector<1x64x112xf32> to vector<64x112xf32>
    %cst_58 = arith.constant dense<0.000000e+00> : vector<28x112xf32>
    %54 = tpu.matmul %44, %53, %cst_58 {dimension_numbers = #tpu.dot_dimension_numbers<[1], [0], [0], [1], [0, 0, 1, 1], [], []>} : vector<28x64xf32>, vector<64x112xf32>, vector<28x112xf32> -> vector<28x112xf32>
    %55 = arith.addf %51, %54 : vector<28x112xf32>
    %c0_59 = arith.constant 0 : index
    %c0_60 = arith.constant 0 : index
    %56 = vector.load %arg8[%c0_59, %c0_60] : memref<1x112xf32, #tpu.memory_space<vmem>>, vector<1x112xf32>
    %57 = vector.broadcast %56 : vector<1x112xf32> to vector<28x112xf32>
    %58 = arith.addf %55, %57 : vector<28x112xf32>
    %cst_61 = arith.constant 0.000000e+00 : f32
    %59 = vector.broadcast %cst_61 : f32 to vector<28x112xf32>
    %60 = arith.maximumf %58, %59 : vector<28x112xf32>
    %c0_62 = arith.constant 0 : index
    %c0_63 = arith.constant 0 : index
    %61 = vector.load %arg9[%c0_62, %c0_63] : memref<112x56xf32, #tpu.memory_space<vmem>>, vector<112x56xf32>
    %cst_64 = arith.constant dense<0.000000e+00> : vector<28x56xf32>
    %62 = tpu.matmul %60, %61, %cst_64 {dimension_numbers = #tpu.dot_dimension_numbers<[1], [0], [0], [1], [0, 0, 1, 1], [], []>} : vector<28x112xf32>, vector<112x56xf32>, vector<28x56xf32> -> vector<28x56xf32>
    %c0_65 = arith.constant 0 : index
    %c0_66 = arith.constant 0 : index
    %63 = vector.load %arg10[%c0_65, %c0_66] : memref<112x56xf32, #tpu.memory_space<vmem>>, vector<112x56xf32>
    %cst_67 = arith.constant dense<0.000000e+00> : vector<28x56xf32>
    %64 = tpu.matmul %60, %63, %cst_67 {dimension_numbers = #tpu.dot_dimension_numbers<[1], [0], [0], [1], [0, 0, 1, 1], [], []>} : vector<28x112xf32>, vector<112x56xf32>, vector<28x56xf32> -> vector<28x56xf32>
    %65 = arith.maximumf %62, %64 : vector<28x56xf32>
    %c0_68 = arith.constant 0 : index
    %c0_69 = arith.constant 0 : index
    %c0_70 = arith.constant 0 : index
    %66 = vector.load %arg11[%c0_68, %c0_69, %c0_70] : memref<1x14x28xf32, #tpu.memory_space<vmem>>, vector<1x14x28xf32>
    %67 = vector.shape_cast %66 : vector<1x14x28xf32> to vector<14x28xf32>
    %cst_71 = arith.constant dense<0.000000e+00> : vector<14x56xf32>
    %68 = tpu.matmul %67, %65, %cst_71 {dimension_numbers = #tpu.dot_dimension_numbers<[1], [0], [0], [1], [0, 0, 1, 1], [], []>} : vector<14x28xf32>, vector<28x56xf32>, vector<14x56xf32> -> vector<14x56xf32>
    %c0_72 = arith.constant 0 : index
    %c0_73 = arith.constant 0 : index
    %c0_74 = arith.constant 0 : index
    %69 = vector.load %arg12[%c0_72, %c0_73, %c0_74] : memref<1x14x28xf32, #tpu.memory_space<vmem>>, vector<1x14x28xf32>
    %70 = vector.shape_cast %69 : vector<1x14x28xf32> to vector<14x28xf32>
    %cst_75 = arith.constant dense<0.000000e+00> : vector<14x56xf32>
    %71 = tpu.matmul %70, %65, %cst_75 {dimension_numbers = #tpu.dot_dimension_numbers<[1], [0], [0], [1], [0, 0, 1, 1], [], []>} : vector<14x28xf32>, vector<28x56xf32>, vector<14x56xf32> -> vector<14x56xf32>
    %72 = arith.maximumf %68, %71 : vector<14x56xf32>
    %c0_76 = arith.constant 0 : index
    %c0_77 = arith.constant 0 : index
    %73 = vector.load %arg13[%c0_76, %c0_77] : memref<56x1792xf32, #tpu.memory_space<vmem>>, vector<56x1792xf32>
    %cst_78 = arith.constant dense<0.000000e+00> : vector<14x1792xf32>
    %74 = tpu.matmul %72, %73, %cst_78 {dimension_numbers = #tpu.dot_dimension_numbers<[1], [0], [0], [1], [0, 0, 1, 1], [], []>} : vector<14x56xf32>, vector<56x1792xf32>, vector<14x1792xf32> -> vector<14x1792xf32>
    %75 = vector.extract_strided_slice %74 {offsets = [0, 0], sizes = [2, 256], strides = [1, 1]} : vector<14x1792xf32> to vector<2x256xf32>
    %76 = vector.extract_strided_slice %74 {offsets = [2, 256], sizes = [2, 256], strides = [1, 1]} : vector<14x1792xf32> to vector<2x256xf32>
    %77 = arith.addf %75, %76 : vector<2x256xf32>
    %78 = vector.extract_strided_slice %74 {offsets = [4, 512], sizes = [2, 256], strides = [1, 1]} : vector<14x1792xf32> to vector<2x256xf32>
    %79 = arith.addf %77, %78 : vector<2x256xf32>
    %80 = vector.extract_strided_slice %74 {offsets = [6, 768], sizes = [2, 256], strides = [1, 1]} : vector<14x1792xf32> to vector<2x256xf32>
    %81 = arith.addf %79, %80 : vector<2x256xf32>
    %82 = vector.extract_strided_slice %74 {offsets = [8, 1024], sizes = [2, 256], strides = [1, 1]} : vector<14x1792xf32> to vector<2x256xf32>
    %83 = arith.addf %81, %82 : vector<2x256xf32>
    %84 = vector.extract_strided_slice %74 {offsets = [10, 1280], sizes = [2, 256], strides = [1, 1]} : vector<14x1792xf32> to vector<2x256xf32>
    %85 = arith.addf %83, %84 : vector<2x256xf32>
    %86 = vector.extract_strided_slice %74 {offsets = [12, 1536], sizes = [2, 256], strides = [1, 1]} : vector<14x1792xf32> to vector<2x256xf32>
    %87 = arith.addf %85, %86 : vector<2x256xf32>
    %c0_79 = arith.constant 0 : index
    %c0_80 = arith.constant 0 : index
    %88 = vector.load %arg14[%c0_79, %c0_80] : memref<1x256xf32, #tpu.memory_space<vmem>>, vector<1x256xf32>
    %89 = vector.broadcast %88 : vector<1x256xf32> to vector<2x256xf32>
    %90 = arith.addf %87, %89 : vector<2x256xf32>
    %c0_81 = arith.constant 0 : index
    %c0_82 = arith.constant 0 : index
    %91 = vector.load %arg15[%c0_81, %c0_82] : memref<256x10xf32, #tpu.memory_space<vmem>>, vector<256x10xf32>
    %cst_83 = arith.constant dense<0.000000e+00> : vector<2x10xf32>
    %92 = tpu.matmul %90, %91, %cst_83 {dimension_numbers = #tpu.dot_dimension_numbers<[1], [0], [0], [1], [0, 0, 1, 1], [], []>} : vector<2x256xf32>, vector<256x10xf32>, vector<2x10xf32> -> vector<2x10xf32>
    %c0_84 = arith.constant 0 : index
    %c0_85 = arith.constant 0 : index
    %93 = vector.load %arg16[%c0_84, %c0_85] : memref<1x10xf32, #tpu.memory_space<vmem>>, vector<1x10xf32>
    %94 = vector.broadcast %93 : vector<1x10xf32> to vector<2x10xf32>
    %95 = arith.addf %92, %94 : vector<2x10xf32>
    %c0_86 = arith.constant 0 : index
    %c0_87 = arith.constant 0 : index
    %96 = vector.load %arg17[%c0_86, %c0_87] : memref<2x10xf32, #tpu.memory_space<vmem>>, vector<2x10xf32>
    tpu.vector_store %arg17[%c0_86, %c0_87], %95 {strides = array<i32>} : memref<2x10xf32, #tpu.memory_space<vmem>>, vector<2x10xf32>,
    return
  }
}

</mosaic_0001>

<llo_original>
// kernel: mnist_forward.1
$region0: #{mnist_forward.1}
  #allocation0 [shape = 'u32[]', space=smem, size = 0x4, offset = 0x4, fixed_abs, tag = 'smem constant byte address 0x4 - core index']
  #allocation1 [shape = 'u32[144,128]{1,0:T(1,128)}', space=vmem, size = 0x12000, scoped, tag = 'internal scratch']
  %s0 = inlined_call_operand.vmem [shape: f32[62,30], index: 0, kind: input, shape index: {}]
  %s1 = inlined_call_operand.vmem [shape: f32[3,30,112], index: 1, kind: input, shape index: {}]
  %s2 = inlined_call_operand.vmem [shape: f32[1,112], index: 2, kind: input, shape index: {}]
  %s3 = inlined_call_operand.vmem [shape: f32[112,64], index: 3, kind: input, shape index: {}]
  %s4 = inlined_call_operand.vmem [shape: f32[112,64], index: 4, kind: input, shape index: {}]
  %s5 = inlined_call_operand.vmem [shape: f32[3,28,60], index: 5, kind: input, shape index: {}]
  %s6 = inlined_call_operand.vmem [shape: f32[3,28,60], index: 6, kind: input, shape index: {}]
  %s7 = inlined_call_operand.vmem [shape: f32[3,64,112], index: 7, kind: input, shape index: {}]
  %s8 = inlined_call_operand.vmem [shape: f32[1,112], index: 8, kind: input, shape index: {}]
  %s9 = inlined_call_operand.vmem [shape: f32[112,56], index: 9, kind: input, shape index: {}]
  %s10 = inlined_call_operand.vmem [shape: f32[112,56], index: 10, kind: input, shape index: {}]
  %s11 = inlined_call_operand.vmem [shape: f32[1,14,28], index: 11, kind: input, shape index: {}]
  %s12 = inlined_call_operand.vmem [shape: f32[1,14,28], index: 12, kind: input, shape index: {}]
  %s13 = inlined_call_operand.vmem [shape: f32[56,1792], index: 13, kind: input, shape index: {}]
  %s14 = inlined_call_operand.vmem [shape: f32[1,256], index: 14, kind: input, shape index: {}]
  %s15 = inlined_call_operand.vmem [shape: f32[256,10], index: 15, kind: input, shape index: {}]
  %s16 = inlined_call_operand.vmem [shape: f32[1,10], index: 16, kind: input, shape index: {}]
  %s17 = inlined_call_operand.hbm [shape: f32[2,10], index: 17, kind: output, shape index: {}]
  %s18 = sld [smem:[#allocation0]]
  $region78: #{mnist_forward.1} parent=0
    _
  %s20 = ssub.s32 1, %s18
  %s21 = scalar_select 0, %s20, %s18
  $region1: #{mnist_forward.1} parent=0
    #allocation2 [shape = 'u8[1024]{0}', space=vmem, size = 0x400, scoped, tag = 'output window, operand 0, single buffered']
    #allocation3 [shape = 's32[1]{0}', space=sflag, size = 0x4, scoped, tag = 'scoped memory for mnist_forward.1']
    %22 = vsyncpa [#allocation3], 0
    // Predicated region
    $region2: #{mnist_forward.1} parent=1 // pred_check
      _
    $region3: #{mnist_forward.1} parent=1 // pred_check_branch
      %24 = sbr.rel (0) target = $region5
    $region4: #{mnist_forward.1} parent=1 // pred_region
      _
    $region5: #{mnist_forward.1} parent=1 // pred_fallthru
      _
    // Predicated region
    $region6: #{mnist_forward.1} parent=1 // pred_check
      _
    $region7: #{mnist_forward.1} parent=1 // pred_check_branch
      %26 = sbr.rel (0) target = $region9
    $region8: #{mnist_forward.1} parent=1 // pred_region
      _
    $region9: #{mnist_forward.1} parent=1 // pred_fallthru
      _
    // Predicated region
    $region10: #{mnist_forward.1} parent=1 // pred_check
      _
    $region11: #{mnist_forward.1} parent=1 // pred_check_branch
      %28 = sbr.rel (0) target = $region13
    $region12: #{mnist_forward.1} parent=1 // pred_region
      _
    $region13: #{mnist_forward.1} parent=1 // pred_fallthru
      _
    // Predicated region
    $region14: #{mnist_forward.1} parent=1 // pred_check
      _
    $region15: #{mnist_forward.1} parent=1 // pred_check_branch
      %30 = sbr.rel (0) target = $region17
    $region16: #{mnist_forward.1} parent=1 // pred_region
      _
    $region17: #{mnist_forward.1} parent=1 // pred_fallthru
      _
    // Predicated region
    $region18: #{mnist_forward.1} parent=1 // pred_check
      _
    $region19: #{mnist_forward.1} parent=1 // pred_check_branch
      %32 = sbr.rel (0) target = $region21
    $region20: #{mnist_forward.1} parent=1 // pred_region
      _
    $region21: #{mnist_forward.1} parent=1 // pred_fallthru
      _
    // Predicated region
    $region22: #{mnist_forward.1} parent=1 // pred_check
      _
    $region23: #{mnist_forward.1} parent=1 // pred_check_branch
      %34 = sbr.rel (0) target = $region25
    $region24: #{mnist_forward.1} parent=1 // pred_region
      _
    $region25: #{mnist_forward.1} parent=1 // pred_fallthru
      _
    // Predicated region
    $region26: #{mnist_forward.1} parent=1 // pred_check
      _
    $region27: #{mnist_forward.1} parent=1 // pred_check_branch
      %36 = sbr.rel (0) target = $region29
    $region28: #{mnist_forward.1} parent=1 // pred_region
      _
    $region29: #{mnist_forward.1} parent=1 // pred_fallthru
      _
    // Predicated region
    $region30: #{mnist_forward.1} parent=1 // pred_check
      _
    $region31: #{mnist_forward.1} parent=1 // pred_check_branch
      %38 = sbr.rel (0) target = $region33
    $region32: #{mnist_forward.1} parent=1 // pred_region
      _
    $region33: #{mnist_forward.1} parent=1 // pred_fallthru
      _
    // Predicated region
    $region34: #{mnist_forward.1} parent=1 // pred_check
      _
    $region35: #{mnist_forward.1} parent=1 // pred_check_branch
      %40 = sbr.rel (0) target = $region37
    $region36: #{mnist_forward.1} parent=1 // pred_region
      _
    $region37: #{mnist_forward.1} parent=1 // pred_fallthru
      _
    // Predicated region
    $region38: #{mnist_forward.1} parent=1 // pred_check
      _
    $region39: #{mnist_forward.1} parent=1 // pred_check_branch
      %42 = sbr.rel (0) target = $region41
    $region40: #{mnist_forward.1} parent=1 // pred_region
      _
    $region41: #{mnist_forward.1} parent=1 // pred_fallthru
      _
    // Predicated region
    $region42: #{mnist_forward.1} parent=1 // pred_check
      _
    $region43: #{mnist_forward.1} parent=1 // pred_check_branch
      %44 = sbr.rel (0) target = $region45
    $region44: #{mnist_forward.1} parent=1 // pred_region
      _
    $region45: #{mnist_forward.1} parent=1 // pred_fallthru
      _
    // Predicated region
    $region46: #{mnist_forward.1} parent=1 // pred_check
      _
    $region47: #{mnist_forward.1} parent=1 // pred_check_branch
      %46 = sbr.rel (0) target = $region49
    $region48: #{mnist_forward.1} parent=1 // pred_region
      _
    $region49: #{mnist_forward.1} parent=1 // pred_fallthru
      _
    // Predicated region
    $region50: #{mnist_forward.1} parent=1 // pred_check
      _
    $region51: #{mnist_forward.1} parent=1 // pred_check_branch
      %48 = sbr.rel (0) target = $region53
    $region52: #{mnist_forward.1} parent=1 // pred_region
      _
    $region53: #{mnist_forward.1} parent=1 // pred_fallthru
      _
    // Predicated region
    $region54: #{mnist_forward.1} parent=1 // pred_check
      _
    $region55: #{mnist_forward.1} parent=1 // pred_check_branch
      %50 = sbr.rel (0) target = $region57
    $region56: #{mnist_forward.1} parent=1 // pred_region
      _
    $region57: #{mnist_forward.1} parent=1 // pred_fallthru
      _
    // Predicated region
    $region58: #{mnist_forward.1} parent=1 // pred_check
      _
    $region59: #{mnist_forward.1} parent=1 // pred_check_branch
      %52 = sbr.rel (0) target = $region61
    $region60: #{mnist_forward.1} parent=1 // pred_region
      _
    $region61: #{mnist_forward.1} parent=1 // pred_fallthru
      _
    // Predicated region
    $region62: #{mnist_forward.1} parent=1 // pred_check
      _
    $region63: #{mnist_forward.1} parent=1 // pred_check_branch
      %54 = sbr.rel (0) target = $region65
    $region64: #{mnist_forward.1} parent=1 // pred_region
      _
    $region65: #{mnist_forward.1} parent=1 // pred_fallthru
      _
    // Predicated region
    $region66: #{mnist_forward.1} parent=1 // pred_check
      _
    $region67: #{mnist_forward.1} parent=1 // pred_check_branch
      %56 = sbr.rel (0) target = $region69
    $region68: #{mnist_forward.1} parent=1 // pred_region
      _
    $region69: #{mnist_forward.1} parent=1 // pred_fallthru
      _
    %v57 = vld [vmem:[%s0] sm:$0xff]
    %v58 = vld [vmem:[%s0 + $0x8] sm:$0xff]
    %v59 = vld [vmem:[%s0 + $0x10] sm:$0xff]
    %v60 = vld [vmem:[%s0 + $0x18] sm:$0xff]
    %v61 = vld [vmem:[%s0 + $0x20] sm:$0xff]
    %v62 = vld [vmem:[%s0 + $0x28] sm:$0xff]
    %v63 = vld [vmem:[%s0 + $0x30] sm:$0xff]
    %v64 = vld [vmem:[%s0 + $0x38] sm:$0xf]
    %v65 = vld [vmem:[%s0 + $0x1] sm:$0xff]
    %v66 = vld [vmem:[%s0 + $0x9] sm:$0xff]
    %v67 = vld [vmem:[%s0 + $0x11] sm:$0xff]
    %v68 = vld [vmem:[%s0 + $0x19] sm:$0xff]
    %v69 = vld [vmem:[%s0 + $0x21] sm:$0xff]
    %v70 = vld [vmem:[%s0 + $0x29] sm:$0xff]
    %v71 = vld [vmem:[%s0 + $0x31] sm:$0xff]
    %v72 = vld [vmem:[%s0 + $0x39] sm:$0xf]
    %v73 = vld [vmem:[%s0 + $0x2] sm:$0xff]
    %v74 = vld [vmem:[%s0 + $0xa] sm:$0xff]
    %v75 = vld [vmem:[%s0 + $0x12] sm:$0xff]
    %v76 = vld [vmem:[%s0 + $0x1a] sm:$0xff]
    %v77 = vld [vmem:[%s0 + $0x22] sm:$0xff]
    %v78 = vld [vmem:[%s0 + $0x2a] sm:$0xff]
    %v79 = vld [vmem:[%s0 + $0x32] sm:$0xff]
    %v80 = vld [vmem:[%s0 + $0x3a] sm:$0xf]
    %v81 = vld [vmem:[%s1] sm:$0xff]
    %v82 = vld [vmem:[%s1 + $0x8] sm:$0xff]
    %v83 = vld [vmem:[%s1 + $0x10] sm:$0xff]
    %v84 = vld [vmem:[%s1 + $0x18] sm:$0x3f]
    %s85 = scalar_lea.vmem %s1, 32
    %v86 = vld [vmem:[%s85] sm:$0xff]
    %v87 = vld [vmem:[%s85 + $0x8] sm:$0xff]
    %v88 = vld [vmem:[%s85 + $0x10] sm:$0xff]
    %v89 = vld [vmem:[%s85 + $0x18] sm:$0x3f]
    %vm90 = vcmask 244736
    %v92 = vsel %vm90, %v65, 0
    %v95 = vsel %vm90, %v66, 0
    %v98 = vsel %vm90, %v67, 0
    %v101 = vsel %vm90, %v68, 0
    %v104 = vsel %vm90, %v69, 0
    %v107 = vsel %vm90, %v70, 0
    %v110 = vsel %vm90, %v71, 0
    %v113 = vsel %vm90, %v72, 0
    %vm115 = vcmask 1045504
    %v117 = vsel %vm115, %v89, 0
    %119 = vmatprep.subr.mxu0 0.0
    %120 = vmatpush1.msra.mxu0 %v86
    %121 = vmatprep.subr.mxu0 0.0
    %122 = vmatpush1.msra.mxu0 %v87
    %123 = vmatprep.subr.mxu0 0.0
    %124 = vmatpush1.msra.mxu0 %v88
    %125 = vmatprep.subr.mxu0 0.0
    %126 = vmatpush1.msra.mxu0 %v117
    %127 = vmatprep.subr.mxu0 0.0
    %128 = vmatpush1.msra.mxu0 0.0
    %129 = vmatprep.subr.mxu0 0.0
    %130 = vmatpush1.msra.mxu0 0.0
    %131 = vmatprep.subr.mxu0 0.0
    %132 = vmatpush1.msra.mxu0 0.0
    %133 = vmatprep.subr.mxu0 0.0
    %134 = vmatpush1.msra.mxu0 0.0
    %135 = vmatprep.subr.mxu0 0.0
    %136 = vmatpush1.msra.mxu0 0.0
    %137 = vmatprep.subr.mxu0 0.0
    %138 = vmatpush1.msra.mxu0 0.0
    %139 = vmatprep.subr.mxu0 0.0
    %140 = vmatpush1.msra.mxu0 0.0
    %141 = vmatprep.subr.mxu0 0.0
    %142 = vmatpush1.msra.mxu0 0.0
    %143 = vmatprep.subr.mxu0 0.0
    %144 = vmatpush1.msra.mxu0 0.0
    %145 = vmatprep.subr.mxu0 0.0
    %146 = vmatpush1.msra.mxu0 0.0
    %147 = vmatprep.subr.mxu0 0.0
    %148 = vmatpush1.msra.mxu0 0.0
    %149 = vmatprep.subr.mxu0 0.0
    %150 = vmatpush1.msra.mxu0 0.0
    %151 = vmatprep.subr.mxu0 0.0
    %152 = vmatpush1.msra.mxu0 0.0
    %153 = vmatprep.subr.mxu0 0.0
    %154 = vmatpush1.msra.mxu0 0.0
    %155 = vmatprep.subr.mxu0 0.0
    %156 = vmatpush1.msra.mxu0 0.0
    %157 = vmatprep.subr.mxu0 0.0
    %158 = vmatpush1.msra.mxu0 0.0
    %159 = vmatprep.subr.mxu0 0.0
    %160 = vmatpush1.msra.mxu0 0.0
    %161 = vmatprep.subr.mxu0 0.0
    %162 = vmatpush1.msra.mxu0 0.0
    %163 = vmatprep.subr.mxu0 0.0
    %164 = vmatpush1.msra.mxu0 0.0
    %165 = vmatprep.subr.mxu0 0.0
    %166 = vmatpush1.msra.mxu0 0.0
    %167 = vmatprep.subr.mxu0 0.0
    %168 = vmatpush1.msra.mxu0 0.0
    %169 = vmatprep.subr.mxu0 0.0
    %170 = vmatpush1.msra.mxu0 0.0
    %171 = vmatprep.subr.mxu0 0.0
    %172 = vmatpush1.msra.mxu0 0.0
    %173 = vmatprep.subr.mxu0 0.0
    %174 = vmatpush1.msra.mxu0 0.0
    %175 = vmatprep.subr.mxu0 0.0
    %176 = vmatpush1.msra.mxu0 0.0
    %177 = vmatprep.subr.mxu0 0.0
    %178 = vmatpush1.msra.mxu0 0.0
    %179 = vmatprep.subr.mxu0 0.0
    %180 = vmatpush1.msra.mxu0 0.0
    %181 = vmatprep.subr.mxu0 0.0
    %182 = vmatpush1.msra.mxu0 0.0
    %183 = vmatprep.mubr.f32.mxu0 0.0
    %184 = vmatmul.mubr.f32.gmra.mrb[0].mxu0 %v92
    %v185 = vpop.f32.mrb[0].mxu0
    %v186 = vadd.f32 0.0, %v185
    %v187 = vpop.f32.mrb[0].mxu0
    %188 = vmatprep.mubr.f32.mxu0 0.0
    %189 = vmatmul.mubr.f32.gmra.mrb[0].mxu0 %v95
    %v190 = vpop.f32.mrb[0].mxu0
    %v191 = vadd.f32 0.0, %v190
    %v192 = vpop.f32.mrb[0].mxu0
    %193 = vmatprep.mubr.f32.mxu0 0.0
    %194 = vmatmul.mubr.f32.gmra.mrb[0].mxu0 %v98
    %v195 = vpop.f32.mrb[0].mxu0
    %v196 = vadd.f32 0.0, %v195
    %v197 = vpop.f32.mrb[0].mxu0
    %198 = vmatprep.mubr.f32.mxu0 0.0
    %199 = vmatmul.mubr.f32.gmra.mrb[0].mxu0 %v101
    %v200 = vpop.f32.mrb[0].mxu0
    %v201 = vadd.f32 0.0, %v200
    %v202 = vpop.f32.mrb[0].mxu0
    %203 = vmatprep.mubr.f32.mxu0 0.0
    %204 = vmatmul.mubr.f32.gmra.mrb[0].mxu0 %v104
    %v205 = vpop.f32.mrb[0].mxu0
    %v206 = vadd.f32 0.0, %v205
    %v207 = vpop.f32.mrb[0].mxu0
    %208 = vmatprep.mubr.f32.mxu0 0.0
    %209 = vmatmul.mubr.f32.gmra.mrb[0].mxu0 %v107
    %v210 = vpop.f32.mrb[0].mxu0
    %v211 = vadd.f32 0.0, %v210
    %v212 = vpop.f32.mrb[0].mxu0
    %213 = vmatprep.mubr.f32.mxu0 0.0
    %214 = vmatmul.mubr.f32.gmra.mrb[0].mxu0 %v110
    %v215 = vpop.f32.mrb[0].mxu0
    %v216 = vadd.f32 0.0, %v215
    %v217 = vpop.f32.mrb[0].mxu0
    %218 = vmatprep.mubr.f32.mxu0 0.0
    %219 = vmatmul.mubr.f32.gmra.mrb[0].mxu0 %v113
    %v220 = vpop.f32.mrb[0].mxu0
    %v221 = vadd.f32 0.0, %v220
    %v222 = vpop.f32.mrb[0].mxu0
    %223 = vdwg.mxu0
    %v225 = vsel %vm90, %v57, 0
    %v228 = vsel %vm90, %v58, 0
    %v231 = vsel %vm90, %v59, 0
    %v234 = vsel %vm90, %v60, 0
    %v237 = vsel %vm90, %v61, 0
    %v240 = vsel %vm90, %v62, 0
    %v243 = vsel %vm90, %v63, 0
    %v246 = vsel %vm90, %v64, 0
    %v249 = vsel %vm115, %v84, 0
    %251 = vmatprep.subr.mxu0 0.0
    %252 = vmatpush1.msra.mxu0 %v81
    %253 = vmatprep.subr.mxu0 0.0
    %254 = vmatpush1.msra.mxu0 %v82
    %255 = vmatprep.subr.mxu0 0.0
    %256 = vmatpush1.msra.mxu0 %v83
    %257 = vmatprep.subr.mxu0 0.0
    %258 = vmatpush1.msra.mxu0 %v249
    %259 = vmatprep.subr.mxu0 0.0
    %260 = vmatpush1.msra.mxu0 0.0
    %261 = vmatprep.subr.mxu0 0.0
    %262 = vmatpush1.msra.mxu0 0.0
    %263 = vmatprep.subr.mxu0 0.0
    %264 = vmatpush1.msra.mxu0 0.0
    %265 = vmatprep.subr.mxu0 0.0
    %266 = vmatpush1.msra.mxu0 0.0
    %267 = vmatprep.subr.mxu0 0.0
    %268 = vmatpush1.msra.mxu0 0.0
    %269 = vmatprep.subr.mxu0 0.0
    %270 = vmatpush1.msra.mxu0 0.0
    %271 = vmatprep.subr.mxu0 0.0
    %272 = vmatpush1.msra.mxu0 0.0
    %273 = vmatprep.subr.mxu0 0.0
    %274 = vmatpush1.msra.mxu0 0.0
    %275 = vmatprep.subr.mxu0 0.0
    %276 = vmatpush1.msra.mxu0 0.0
    %277 = vmatprep.subr.mxu0 0.0
    %278 = vmatpush1.msra.mxu0 0.0
    %279 = vmatprep.subr.mxu0 0.0
    %280 = vmatpush1.msra.mxu0 0.0
    %281 = vmatprep.subr.mxu0 0.0
    %282 = vmatpush1.msra.mxu0 0.0
    %283 = vmatprep.subr.mxu0 0.0
    %284 = vmatpush1.msra.mxu0 0.0
    %285 = vmatprep.subr.mxu0 0.0
    %286 = vmatpush1.msra.mxu0 0.0
    %287 = vmatprep.subr.mxu0 0.0
    %288 = vmatpush1.msra.mxu0 0.0
    %289 = vmatprep.subr.mxu0 0.0
    %290 = vmatpush1.msra.mxu0 0.0
    %291 = vmatprep.subr.mxu0 0.0
    %292 = vmatpush1.msra.mxu0 0.0
    %293 = vmatprep.subr.mxu0 0.0
    %294 = vmatpush1.msra.mxu0 0.0
    %295 = vmatprep.subr.mxu0 0.0
    %296 = vmatpush1.msra.mxu0 0.0
    %297 = vmatprep.subr.mxu0 0.0
    %298 = vmatpush1.msra.mxu0 0.0
    %299 = vmatprep.subr.mxu0 0.0
    %300 = vmatpush1.msra.mxu0 0.0
    %301 = vmatprep.subr.mxu0 0.0
    %302 = vmatpush1.msra.mxu0 0.0
    %303 = vmatprep.subr.mxu0 0.0
    %304 = vmatpush1.msra.mxu0 0.0
    %305 = vmatprep.subr.mxu0 0.0
    %306 = vmatpush1.msra.mxu0 0.0
    %307 = vmatprep.subr.mxu0 0.0
    %308 = vmatpush1.msra.mxu0 0.0
    %309 = vmatprep.subr.mxu0 0.0
    %310 = vmatpush1.msra.mxu0 0.0
    %311 = vmatprep.subr.mxu0 0.0
    %312 = vmatpush1.msra.mxu0 0.0
    %313 = vmatprep.subr.mxu0 0.0
    %314 = vmatpush1.msra.mxu0 0.0
    %315 = vmatprep.mubr.f32.mxu0 0.0
    %316 = vmatmul.mubr.f32.gmra.mrb[0].mxu0 %v225
    %v317 = vpop.f32.mrb[0].mxu0
    %v318 = vadd.f32 %v186, %v317
    %v319 = vpop.f32.mrb[0].mxu0
    %320 = vmatprep.mubr.f32.mxu0 0.0
    %321 = vmatmul.mubr.f32.gmra.mrb[0].mxu0 %v228
    %v322 = vpop.f32.mrb[0].mxu0
    %v323 = vadd.f32 %v191, %v322
    %v324 = vpop.f32.mrb[0].mxu0
    %325 = vmatprep.mubr.f32.mxu0 0.0
    %326 = vmatmul.mubr.f32.gmra.mrb[0].mxu0 %v231
    %v327 = vpop.f32.mrb[0].mxu0
    %v328 = vadd.f32 %v196, %v327
    %v329 = vpop.f32.mrb[0].mxu0
    %330 = vmatprep.mubr.f32.mxu0 0.0
    %331 = vmatmul.mubr.f32.gmra.mrb[0].mxu0 %v234
    %v332 = vpop.f32.mrb[0].mxu0
    %v333 = vadd.f32 %v201, %v332
    %v334 = vpop.f32.mrb[0].mxu0
    %335 = vmatprep.mubr.f32.mxu0 0.0
    %336 = vmatmul.mubr.f32.gmra.mrb[0].mxu0 %v237
    %v337 = vpop.f32.mrb[0].mxu0
    %v338 = vadd.f32 %v206, %v337
    %v339 = vpop.f32.mrb[0].mxu0
    %340 = vmatprep.mubr.f32.mxu0 0.0
    %341 = vmatmul.mubr.f32.gmra.mrb[0].mxu0 %v240
    %v342 = vpop.f32.mrb[0].mxu0
    %v343 = vadd.f32 %v211, %v342
    %v344 = vpop.f32.mrb[0].mxu0
    %345 = vmatprep.mubr.f32.mxu0 0.0
    %346 = vmatmul.mubr.f32.gmra.mrb[0].mxu0 %v243
    %v347 = vpop.f32.mrb[0].mxu0
    %v348 = vadd.f32 %v216, %v347
    %v349 = vpop.f32.mrb[0].mxu0
    %350 = vmatprep.mubr.f32.mxu0 0.0
    %351 = vmatmul.mubr.f32.gmra.mrb[0].mxu0 %v246
    %v352 = vpop.f32.mrb[0].mxu0
    %v353 = vadd.f32 %v221, %v352
    %v354 = vpop.f32.mrb[0].mxu0
    %355 = vdwg.mxu0
    %s356 = scalar_lea.vmem %s1, 64
    %v357 = vld [vmem:[%s356] sm:$0xff]
    %v358 = vld [vmem:[%s356 + $0x8] sm:$0xff]
    %v359 = vld [vmem:[%s356 + $0x10] sm:$0xff]
    %v360 = vld [vmem:[%s356 + $0x18] sm:$0x3f]
    %v362 = vsel %vm90, %v73, 0
    %v365 = vsel %vm90, %v74, 0
    %v368 = vsel %vm90, %v75, 0
    %v371 = vsel %vm90, %v76, 0
    %v374 = vsel %vm90, %v77, 0
    %v377 = vsel %vm90, %v78, 0
    %v380 = vsel %vm90, %v79, 0
    %v383 = vsel %vm90, %v80, 0
    %v386 = vsel %vm115, %v360, 0
    %388 = vmatprep.subr.mxu0 0.0
    %389 = vmatpush1.msra.mxu0 %v357
    %390 = vmatprep.subr.mxu0 0.0
    %391 = vmatpush1.msra.mxu0 %v358
    %392 = vmatprep.subr.mxu0 0.0
    %393 = vmatpush1.msra.mxu0 %v359
    %394 = vmatprep.subr.mxu0 0.0
    %395 = vmatpush1.msra.mxu0 %v386
    %396 = vmatprep.subr.mxu0 0.0
    %397 = vmatpush1.msra.mxu0 0.0
    %398 = vmatprep.subr.mxu0 0.0
    %399 = vmatpush1.msra.mxu0 0.0
    %400 = vmatprep.subr.mxu0 0.0
    %401 = vmatpush1.msra.mxu0 0.0
    %402 = vmatprep.subr.mxu0 0.0
    %403 = vmatpush1.msra.mxu0 0.0
    %404 = vmatprep.subr.mxu0 0.0
    %405 = vmatpush1.msra.mxu0 0.0
    %406 = vmatprep.subr.mxu0 0.0
    %407 = vmatpush1.msra.mxu0 0.0
    %408 = vmatprep.subr.mxu0 0.0
    %409 = vmatpush1.msra.mxu0 0.0
    %410 = vmatprep.subr.mxu0 0.0
    %411 = vmatpush1.msra.mxu0 0.0
    %412 = vmatprep.subr.mxu0 0.0
    %413 = vmatpush1.msra.mxu0 0.0
    %414 = vmatprep.subr.mxu0 0.0
    %415 = vmatpush1.msra.mxu0 0.0
    %416 = vmatprep.subr.mxu0 0.0
    %417 = vmatpush1.msra.mxu0 0.0
    %418 = vmatprep.subr.mxu0 0.0
    %419 = vmatpush1.msra.mxu0 0.0
    %420 = vmatprep.subr.mxu0 0.0
    %421 = vmatpush1.msra.mxu0 0.0
    %422 = vmatprep.subr.mxu0 0.0
    %423 = vmatpush1.msra.mxu0 0.0
    %424 = vmatprep.subr.mxu0 0.0
    %425 = vmatpush1.msra.mxu0 0.0
    %426 = vmatprep.subr.mxu0 0.0
    %427 = vmatpush1.msra.mxu0 0.0
    %428 = vmatprep.subr.mxu0 0.0
    %429 = vmatpush1.msra.mxu0 0.0
    %430 = vmatprep.subr.mxu0 0.0
    %431 = vmatpush1.msra.mxu0 0.0
    %432 = vmatprep.subr.mxu0 0.0
    %433 = vmatpush1.msra.mxu0 0.0
    %434 = vmatprep.subr.mxu0 0.0
    %435 = vmatpush1.msra.mxu0 0.0
    %436 = vmatprep.subr.mxu0 0.0
    %437 = vmatpush1.msra.mxu0 0.0
    %438 = vmatprep.subr.mxu0 0.0
    %439 = vmatpush1.msra.mxu0 0.0
    %440 = vmatprep.subr.mxu0 0.0
    %441 = vmatpush1.msra.mxu0 0.0
    %442 = vmatprep.subr.mxu0 0.0
    %443 = vmatpush1.msra.mxu0 0.0
    %444 = vmatprep.subr.mxu0 0.0
    %445 = vmatpush1.msra.mxu0 0.0
    %446 = vmatprep.subr.mxu0 0.0
    %447 = vmatpush1.msra.mxu0 0.0
    %448 = vmatprep.subr.mxu0 0.0
    %449 = vmatpush1.msra.mxu0 0.0
    %450 = vmatprep.subr.mxu0 0.0
    %451 = vmatpush1.msra.mxu0 0.0
    %452 = vmatprep.mubr.f32.mxu0 0.0
    %453 = vmatmul.mubr.f32.gmra.mrb[0].mxu0 %v362
    %v454 = vpop.f32.mrb[0].mxu0
    %v455 = vadd.f32 0.0, %v454
    %v456 = vpop.f32.mrb[0].mxu0
    %457 = vmatprep.mubr.f32.mxu0 0.0
    %458 = vmatmul.mubr.f32.gmra.mrb[0].mxu0 %v365
    %v459 = vpop.f32.mrb[0].mxu0
    %v460 = vadd.f32 0.0, %v459
    %v461 = vpop.f32.mrb[0].mxu0
    %462 = vmatprep.mubr.f32.mxu0 0.0
    %463 = vmatmul.mubr.f32.gmra.mrb[0].mxu0 %v368
    %v464 = vpop.f32.mrb[0].mxu0
    %v465 = vadd.f32 0.0, %v464
    %v466 = vpop.f32.mrb[0].mxu0
    %467 = vmatprep.mubr.f32.mxu0 0.0
    %468 = vmatmul.mubr.f32.gmra.mrb[0].mxu0 %v371
    %v469 = vpop.f32.mrb[0].mxu0
    %v470 = vadd.f32 0.0, %v469
    %v471 = vpop.f32.mrb[0].mxu0
    %472 = vmatprep.mubr.f32.mxu0 0.0
    %473 = vmatmul.mubr.f32.gmra.mrb[0].mxu0 %v374
    %v474 = vpop.f32.mrb[0].mxu0
    %v475 = vadd.f32 0.0, %v474
    %v476 = vpop.f32.mrb[0].mxu0
    %477 = vmatprep.mubr.f32.mxu0 0.0
    %478 = vmatmul.mubr.f32.gmra.mrb[0].mxu0 %v377
    %v479 = vpop.f32.mrb[0].mxu0
    %v480 = vadd.f32 0.0, %v479
    %v481 = vpop.f32.mrb[0].mxu0
    %482 = vmatprep.mubr.f32.mxu0 0.0
    %483 = vmatmul.mubr.f32.gmra.mrb[0].mxu0 %v380
    %v484 = vpop.f32.mrb[0].mxu0
    %v485 = vadd.f32 0.0, %v484
    %v486 = vpop.f32.mrb[0].mxu0
    %487 = vmatprep.mubr.f32.mxu0 0.0
    %488 = vmatmul.mubr.f32.gmra.mrb[0].mxu0 %v383
    %v489 = vpop.f32.mrb[0].mxu0
    %v490 = vadd.f32 0.0, %v489
    %v491 = vpop.f32.mrb[0].mxu0
    %492 = vdwg.mxu0
    %v493 = vadd.f32 %v318, %v455
    %v494 = vadd.f32 %v323, %v460
    %v495 = vadd.f32 %v328, %v465
    %v496 = vadd.f32 %v333, %v470
    %v497 = vadd.f32 %v338, %v475
    %v498 = vadd.f32 %v343, %v480
    %v499 = vadd.f32 %v348, %v485
    %v500 = vadd.f32 %v353, %v490
    %v501 = vld [vmem:[%s2] sm:$0x1]
    %v503 = vlaneseq
    %v504 = vshrl.u32 %v503, 7
    %v505 = vsub.s32 0, %v504
    %v506 = vrot.slane %v501, %v505
    %v508 = vadd.f32 %v493, %v506
    %v509 = vadd.f32 %v494, %v506
    %v510 = vadd.f32 %v495, %v506
    %v511 = vadd.f32 %v496, %v506
    %v512 = vadd.f32 %v497, %v506
    %v513 = vadd.f32 %v498, %v506
    %v514 = vadd.f32 %v499, %v506
    %v515 = vadd.f32 %v500, %v506
    %v516 = vmax.f32 %v508, 0.0
    %v517 = vmax.f32 %v509, 0.0
    %v518 = vmax.f32 %v510, 0.0
    %v519 = vmax.f32 %v511, 0.0
    %v520 = vmax.f32 %v512, 0.0
    %v521 = vmax.f32 %v513, 0.0
    %v522 = vmax.f32 %v514, 0.0
    %v523 = vmax.f32 %v515, 0.0
    %v524 = vld [vmem:[%s3] sm:$0xff]
    %v525 = vld [vmem:[%s3 + $0x8] sm:$0xff]
    %v526 = vld [vmem:[%s3 + $0x10] sm:$0xff]
    %v527 = vld [vmem:[%s3 + $0x18] sm:$0xff]
    %v528 = vld [vmem:[%s3 + $0x20] sm:$0xff]
    %v529 = vld [vmem:[%s3 + $0x28] sm:$0xff]
    %v530 = vld [vmem:[%s3 + $0x30] sm:$0xff]
    %v531 = vld [vmem:[%s3 + $0x38] sm:$0xff]
    %v532 = vld [vmem:[%s3 + $0x40] sm:$0xff]
    %v533 = vld [vmem:[%s3 + $0x48] sm:$0xff]
    %v534 = vld [vmem:[%s3 + $0x50] sm:$0xff]
    %v535 = vld [vmem:[%s3 + $0x58] sm:$0xff]
    %v536 = vld [vmem:[%s3 + $0x60] sm:$0xff]
    %v537 = vld [vmem:[%s3 + $0x68] sm:$0xff]
    %vm538 = vcmask 916480
    %v540 = vsel %vm538, %v516, 0
    %v543 = vsel %vm538, %v517, 0
    %v546 = vsel %vm538, %v518, 0
    %v549 = vsel %vm538, %v519, 0
    %v552 = vsel %vm538, %v520, 0
    %v555 = vsel %vm538, %v521, 0
    %v558 = vsel %vm538, %v522, 0
    %v561 = vsel %vm538, %v523, 0
    %563 = vmatprep.subr.mxu0 0.0
    %564 = vmatpush1.msra.mxu0 %v524
    %565 = vmatprep.subr.mxu0 0.0
    %566 = vmatpush1.msra.mxu0 %v525
    %567 = vmatprep.subr.mxu0 0.0
    %568 = vmatpush1.msra.mxu0 %v526
    %569 = vmatprep.subr.mxu0 0.0
    %570 = vmatpush1.msra.mxu0 %v527
    %571 = vmatprep.subr.mxu0 0.0
    %572 = vmatpush1.msra.mxu0 %v528
    %573 = vmatprep.subr.mxu0 0.0
    %574 = vmatpush1.msra.mxu0 %v529
    %575 = vmatprep.subr.mxu0 0.0
    %576 = vmatpush1.msra.mxu0 %v530
    %577 = vmatprep.subr.mxu0 0.0
    %578 = vmatpush1.msra.mxu0 %v531
    %579 = vmatprep.subr.mxu0 0.0
    %580 = vmatpush1.msra.mxu0 %v532
    %581 = vmatprep.subr.mxu0 0.0
    %582 = vmatpush1.msra.mxu0 %v533
    %583 = vmatprep.subr.mxu0 0.0
    %584 = vmatpush1.msra.mxu0 %v534
    %585 = vmatprep.subr.mxu0 0.0
    %586 = vmatpush1.msra.mxu0 %v535
    %587 = vmatprep.subr.mxu0 0.0
    %588 = vmatpush1.msra.mxu0 %v536
    %589 = vmatprep.subr.mxu0 0.0
    %590 = vmatpush1.msra.mxu0 %v537
    %591 = vmatprep.subr.mxu0 0.0
    %592 = vmatpush1.msra.mxu0 0.0
    %593 = vmatprep.subr.mxu0 0.0
    %594 = vmatpush1.msra.mxu0 0.0
    %595 = vmatprep.subr.mxu0 0.0
    %596 = vmatpush1.msra.mxu0 0.0
    %597 = vmatprep.subr.mxu0 0.0
    %598 = vmatpush1.msra.mxu0 0.0
    %599 = vmatprep.subr.mxu0 0.0
    %600 = vmatpush1.msra.mxu0 0.0
    %601 = vmatprep.subr.mxu0 0.0
    %602 = vmatpush1.msra.mxu0 0.0
    %603 = vmatprep.subr.mxu0 0.0
    %604 = vmatpush1.msra.mxu0 0.0
    %605 = vmatprep.subr.mxu0 0.0
    %606 = vmatpush1.msra.mxu0 0.0
    %607 = vmatprep.subr.mxu0 0.0
    %608 = vmatpush1.msra.mxu0 0.0
    %609 = vmatprep.subr.mxu0 0.0
    %610 = vmatpush1.msra.mxu0 0.0
    %611 = vmatprep.subr.mxu0 0.0
    %612 = vmatpush1.msra.mxu0 0.0
    %613 = vmatprep.subr.mxu0 0.0
    %614 = vmatpush1.msra.mxu0 0.0
    %615 = vmatprep.subr.mxu0 0.0
    %616 = vmatpush1.msra.mxu0 0.0
    %617 = vmatprep.subr.mxu0 0.0
    %618 = vmatpush1.msra.mxu0 0.0
    %619 = vmatprep.subr.mxu0 0.0
    %620 = vmatpush1.msra.mxu0 0.0
    %621 = vmatprep.subr.mxu0 0.0
    %622 = vmatpush1.msra.mxu0 0.0
    %623 = vmatprep.subr.mxu0 0.0
    %624 = vmatpush1.msra.mxu0 0.0
    %625 = vmatprep.subr.mxu0 0.0
    %626 = vmatpush1.msra.mxu0 0.0
    %627 = vmatprep.mubr.f32.mxu0 0.0
    %628 = vmatmul.mubr.f32.gmra.mrb[0].mxu0 %v540
    %v629 = vpop.f32.mrb[0].mxu0
    %v630 = vadd.f32 0.0, %v629
    %v631 = vpop.f32.mrb[0].mxu0
    %632 = vmatprep.mubr.f32.mxu0 0.0
    %633 = vmatmul.mubr.f32.gmra.mrb[0].mxu0 %v543
    %v634 = vpop.f32.mrb[0].mxu0
    %v635 = vadd.f32 0.0, %v634
    %v636 = vpop.f32.mrb[0].mxu0
    %637 = vmatprep.mubr.f32.mxu0 0.0
    %638 = vmatmul.mubr.f32.gmra.mrb[0].mxu0 %v546
    %v639 = vpop.f32.mrb[0].mxu0
    %v640 = vadd.f32 0.0, %v639
    %v641 = vpop.f32.mrb[0].mxu0
    %642 = vmatprep.mubr.f32.mxu0 0.0
    %643 = vmatmul.mubr.f32.gmra.mrb[0].mxu0 %v549
    %v644 = vpop.f32.mrb[0].mxu0
    %v645 = vadd.f32 0.0, %v644
    %v646 = vpop.f32.mrb[0].mxu0
    %647 = vmatprep.mubr.f32.mxu0 0.0
    %648 = vmatmul.mubr.f32.gmra.mrb[0].mxu0 %v552
    %v649 = vpop.f32.mrb[0].mxu0
    %v650 = vadd.f32 0.0, %v649
    %v651 = vpop.f32.mrb[0].mxu0
    %652 = vmatprep.mubr.f32.mxu0 0.0
    %653 = vmatmul.mubr.f32.gmra.mrb[0].mxu0 %v555
    %v654 = vpop.f32.mrb[0].mxu0
    %v655 = vadd.f32 0.0, %v654
    %v656 = vpop.f32.mrb[0].mxu0
    %657 = vmatprep.mubr.f32.mxu0 0.0
    %658 = vmatmul.mubr.f32.gmra.mrb[0].mxu0 %v558
    %v659 = vpop.f32.mrb[0].mxu0
    %v660 = vadd.f32 0.0, %v659
    %v661 = vpop.f32.mrb[0].mxu0
    %662 = vmatprep.mubr.f32.mxu0 0.0
    %663 = vmatmul.mubr.f32.gmra.mrb[0].mxu0 %v561
    %v664 = vpop.f32.mrb[0].mxu0
    %v665 = vadd.f32 0.0, %v664
    %v666 = vpop.f32.mrb[0].mxu0
    %667 = vdwg.mxu0
    %v668 = vld [vmem:[%s4] sm:$0xff]
    %v669 = vld [vmem:[%s4 + $0x8] sm:$0xff]
    %v670 = vld [vmem:[%s4 + $0x10] sm:$0xff]
    %v671 = vld [vmem:[%s4 + $0x18] sm:$0xff]
    %v672 = vld [vmem:[%s4 + $0x20] sm:$0xff]
    %v673 = vld [vmem:[%s4 + $0x28] sm:$0xff]
    %v674 = vld [vmem:[%s4 + $0x30] sm:$0xff]
    %v675 = vld [vmem:[%s4 + $0x38] sm:$0xff]
    %v676 = vld [vmem:[%s4 + $0x40] sm:$0xff]
    %v677 = vld [vmem:[%s4 + $0x48] sm:$0xff]
    %v678 = vld [vmem:[%s4 + $0x50] sm:$0xff]
    %v679 = vld [vmem:[%s4 + $0x58] sm:$0xff]
    %v680 = vld [vmem:[%s4 + $0x60] sm:$0xff]
    %v681 = vld [vmem:[%s4 + $0x68] sm:$0xff]
    %682 = vmatprep.subr.mxu0 0.0
    %683 = vmatpush1.msra.mxu0 %v668
    %684 = vmatprep.subr.mxu0 0.0
    %685 = vmatpush1.msra.mxu0 %v669
    %686 = vmatprep.subr.mxu0 0.0
    %687 = vmatpush1.msra.mxu0 %v670
    %688 = vmatprep.subr.mxu0 0.0
    %689 = vmatpush1.msra.mxu0 %v671
    %690 = vmatprep.subr.mxu0 0.0
    %691 = vmatpush1.msra.mxu0 %v672
    %692 = vmatprep.subr.mxu0 0.0
    %693 = vmatpush1.msra.mxu0 %v673
    %694 = vmatprep.subr.mxu0 0.0
    %695 = vmatpush1.msra.mxu0 %v674
    %696 = vmatprep.subr.mxu0 0.0
    %697 = vmatpush1.msra.mxu0 %v675
    %698 = vmatprep.subr.mxu0 0.0
    %699 = vmatpush1.msra.mxu0 %v676
    %700 = vmatprep.subr.mxu0 0.0
    %701 = vmatpush1.msra.mxu0 %v677
    %702 = vmatprep.subr.mxu0 0.0
    %703 = vmatpush1.msra.mxu0 %v678
    %704 = vmatprep.subr.mxu0 0.0
    %705 = vmatpush1.msra.mxu0 %v679
    %706 = vmatprep.subr.mxu0 0.0
    %707 = vmatpush1.msra.mxu0 %v680
    %708 = vmatprep.subr.mxu0 0.0
    %709 = vmatpush1.msra.mxu0 %v681
    %710 = vmatprep.subr.mxu0 0.0
    %711 = vmatpush1.msra.mxu0 0.0
    %712 = vmatprep.subr.mxu0 0.0
    %713 = vmatpush1.msra.mxu0 0.0
    %714 = vmatprep.subr.mxu0 0.0
    %715 = vmatpush1.msra.mxu0 0.0
    %716 = vmatprep.subr.mxu0 0.0
    %717 = vmatpush1.msra.mxu0 0.0
    %718 = vmatprep.subr.mxu0 0.0
    %719 = vmatpush1.msra.mxu0 0.0
    %720 = vmatprep.subr.mxu0 0.0
    %721 = vmatpush1.msra.mxu0 0.0
    %722 = vmatprep.subr.mxu0 0.0
    %723 = vmatpush1.msra.mxu0 0.0
    %724 = vmatprep.subr.mxu0 0.0
    %725 = vmatpush1.msra.mxu0 0.0
    %726 = vmatprep.subr.mxu0 0.0
    %727 = vmatpush1.msra.mxu0 0.0
    %728 = vmatprep.subr.mxu0 0.0
    %729 = vmatpush1.msra.mxu0 0.0
    %730 = vmatprep.subr.mxu0 0.0
    %731 = vmatpush1.msra.mxu0 0.0
    %732 = vmatprep.subr.mxu0 0.0
    %733 = vmatpush1.msra.mxu0 0.0
    %734 = vmatprep.subr.mxu0 0.0
    %735 = vmatpush1.msra.mxu0 0.0
    %736 = vmatprep.subr.mxu0 0.0
    %737 = vmatpush1.msra.mxu0 0.0
    %738 = vmatprep.subr.mxu0 0.0
    %739 = vmatpush1.msra.mxu0 0.0
    %740 = vmatprep.subr.mxu0 0.0
    %741 = vmatpush1.msra.mxu0 0.0
    %742 = vmatprep.subr.mxu0 0.0
    %743 = vmatpush1.msra.mxu0 0.0
    %744 = vmatprep.subr.mxu0 0.0
    %745 = vmatpush1.msra.mxu0 0.0
    %746 = vmatprep.mubr.f32.mxu0 0.0
    %747 = vmatmul.mubr.f32.gmra.mrb[0].mxu0 %v540
    %v748 = vpop.f32.mrb[0].mxu0
    %v749 = vadd.f32 0.0, %v748
    %v750 = vpop.f32.mrb[0].mxu0
    %751 = vmatprep.mubr.f32.mxu0 0.0
    %752 = vmatmul.mubr.f32.gmra.mrb[0].mxu0 %v543
    %v753 = vpop.f32.mrb[0].mxu0
    %v754 = vadd.f32 0.0, %v753
    %v755 = vpop.f32.mrb[0].mxu0
    %756 = vmatprep.mubr.f32.mxu0 0.0
    %757 = vmatmul.mubr.f32.gmra.mrb[0].mxu0 %v546
    %v758 = vpop.f32.mrb[0].mxu0
    %v759 = vadd.f32 0.0, %v758
    %v760 = vpop.f32.mrb[0].mxu0
    %761 = vmatprep.mubr.f32.mxu0 0.0
    %762 = vmatmul.mubr.f32.gmra.mrb[0].mxu0 %v549
    %v763 = vpop.f32.mrb[0].mxu0
    %v764 = vadd.f32 0.0, %v763
    %v765 = vpop.f32.mrb[0].mxu0
    %766 = vmatprep.mubr.f32.mxu0 0.0
    %767 = vmatmul.mubr.f32.gmra.mrb[0].mxu0 %v552
    %v768 = vpop.f32.mrb[0].mxu0
    %v769 = vadd.f32 0.0, %v768
    %v770 = vpop.f32.mrb[0].mxu0
    %771 = vmatprep.mubr.f32.mxu0 0.0
    %772 = vmatmul.mubr.f32.gmra.mrb[0].mxu0 %v555
    %v773 = vpop.f32.mrb[0].mxu0
    %v774 = vadd.f32 0.0, %v773
    %v775 = vpop.f32.mrb[0].mxu0
    %776 = vmatprep.mubr.f32.mxu0 0.0
    %777 = vmatmul.mubr.f32.gmra.mrb[0].mxu0 %v558
    %v778 = vpop.f32.mrb[0].mxu0
    %v779 = vadd.f32 0.0, %v778
    %v780 = vpop.f32.mrb[0].mxu0
    %781 = vmatprep.mubr.f32.mxu0 0.0
    %782 = vmatmul.mubr.f32.gmra.mrb[0].mxu0 %v561
    %v783 = vpop.f32.mrb[0].mxu0
    %v784 = vadd.f32 0.0, %v783
    %v785 = vpop.f32.mrb[0].mxu0
    %786 = vdwg.mxu0
    %v787 = vmax.f32 %v630, %v749
    %v788 = vmax.f32 %v635, %v754
    %v789 = vmax.f32 %v640, %v759
    %v790 = vmax.f32 %v645, %v764
    %v791 = vmax.f32 %v650, %v769
    %v792 = vmax.f32 %v655, %v774
    %v793 = vmax.f32 %v660, %v779
    %v794 = vmax.f32 %v665, %v784
    %v795 = vld [vmem:[%s5] sm:$0xff]
    %v796 = vld [vmem:[%s5 + $0x8] sm:$0xff]
    %v797 = vld [vmem:[%s5 + $0x10] sm:$0xff]
    %v798 = vld [vmem:[%s5 + $0x18] sm:$0xf]
    %vm799 = vcmask 490496
    %v801 = vsel %vm799, %v795, 0
    %v804 = vsel %vm799, %v796, 0
    %v807 = vsel %vm799, %v797, 0
    %v810 = vsel %vm799, %v798, 0
    %vm812 = vcmask 1043456
    %v814 = vsel %vm812, %v794, 0
    %816 = vmatprep.subr.mxu0 0.0
    %817 = vmatpush1.msra.mxu0 %v787
    %818 = vmatprep.subr.mxu0 0.0
    %819 = vmatpush1.msra.mxu0 %v788
    %820 = vmatprep.subr.mxu0 0.0
    %821 = vmatpush1.msra.mxu0 %v789
    %822 = vmatprep.subr.mxu0 0.0
    %823 = vmatpush1.msra.mxu0 %v790
    %824 = vmatprep.subr.mxu0 0.0
    %825 = vmatpush1.msra.mxu0 %v791
    %826 = vmatprep.subr.mxu0 0.0
    %827 = vmatpush1.msra.mxu0 %v792
    %828 = vmatprep.subr.mxu0 0.0
    %829 = vmatpush1.msra.mxu0 %v793
    %830 = vmatprep.subr.mxu0 0.0
    %831 = vmatpush1.msra.mxu0 %v814
    %832 = vmatprep.subr.mxu0 0.0
    %833 = vmatpush1.msra.mxu0 0.0
    %834 = vmatprep.subr.mxu0 0.0
    %835 = vmatpush1.msra.mxu0 0.0
    %836 = vmatprep.subr.mxu0 0.0
    %837 = vmatpush1.msra.mxu0 0.0
    %838 = vmatprep.subr.mxu0 0.0
    %839 = vmatpush1.msra.mxu0 0.0
    %840 = vmatprep.subr.mxu0 0.0
    %841 = vmatpush1.msra.mxu0 0.0
    %842 = vmatprep.subr.mxu0 0.0
    %843 = vmatpush1.msra.mxu0 0.0
    %844 = vmatprep.subr.mxu0 0.0
    %845 = vmatpush1.msra.mxu0 0.0
    %846 = vmatprep.subr.mxu0 0.0
    %847 = vmatpush1.msra.mxu0 0.0
    %848 = vmatprep.subr.mxu0 0.0
    %849 = vmatpush1.msra.mxu0 0.0
    %850 = vmatprep.subr.mxu0 0.0
    %851 = vmatpush1.msra.mxu0 0.0
    %852 = vmatprep.subr.mxu0 0.0
    %853 = vmatpush1.msra.mxu0 0.0
    %854 = vmatprep.subr.mxu0 0.0
    %855 = vmatpush1.msra.mxu0 0.0
    %856 = vmatprep.subr.mxu0 0.0
    %857 = vmatpush1.msra.mxu0 0.0
    %858 = vmatprep.subr.mxu0 0.0
    %859 = vmatpush1.msra.mxu0 0.0
    %860 = vmatprep.subr.mxu0 0.0
    %861 = vmatpush1.msra.mxu0 0.0
    %862 = vmatprep.subr.mxu0 0.0
    %863 = vmatpush1.msra.mxu0 0.0
    %864 = vmatprep.subr.mxu0 0.0
    %865 = vmatpush1.msra.mxu0 0.0
    %866 = vmatprep.subr.mxu0 0.0
    %867 = vmatpush1.msra.mxu0 0.0
    %868 = vmatprep.subr.mxu0 0.0
    %869 = vmatpush1.msra.mxu0 0.0
    %870 = vmatprep.subr.mxu0 0.0
    %871 = vmatpush1.msra.mxu0 0.0
    %872 = vmatprep.subr.mxu0 0.0
    %873 = vmatpush1.msra.mxu0 0.0
    %874 = vmatprep.subr.mxu0 0.0
    %875 = vmatpush1.msra.mxu0 0.0
    %876 = vmatprep.subr.mxu0 0.0
    %877 = vmatpush1.msra.mxu0 0.0
    %878 = vmatprep.subr.mxu0 0.0
    %879 = vmatpush1.msra.mxu0 0.0
    %880 = vmatprep.mubr.f32.mxu0 0.0
    %881 = vmatmul.mubr.f32.gmra.mrb[0].mxu0 %v801
    %v882 = vpop.f32.mrb[0].mxu0
    %v883 = vadd.f32 0.0, %v882
    %v884 = vpop.f32.mrb[0].mxu0
    %885 = vmatprep.mubr.f32.mxu0 0.0
    %886 = vmatmul.mubr.f32.gmra.mrb[0].mxu0 %v804
    %v887 = vpop.f32.mrb[0].mxu0
    %v888 = vadd.f32 0.0, %v887
    %v889 = vpop.f32.mrb[0].mxu0
    %890 = vmatprep.mubr.f32.mxu0 0.0
    %891 = vmatmul.mubr.f32.gmra.mrb[0].mxu0 %v807
    %v892 = vpop.f32.mrb[0].mxu0
    %v893 = vadd.f32 0.0, %v892
    %v894 = vpop.f32.mrb[0].mxu0
    %895 = vmatprep.mubr.f32.mxu0 0.0
    %896 = vmatmul.mubr.f32.gmra.mrb[0].mxu0 %v810
    %v897 = vpop.f32.mrb[0].mxu0
    %v898 = vadd.f32 0.0, %v897
    %v899 = vpop.f32.mrb[0].mxu0
    %900 = vdwg.mxu0
    %v901 = vld [vmem:[%s6] sm:$0xff]
    %v902 = vld [vmem:[%s6 + $0x8] sm:$0xff]
    %v903 = vld [vmem:[%s6 + $0x10] sm:$0xff]
    %v904 = vld [vmem:[%s6 + $0x18] sm:$0xf]
    %v906 = vsel %vm799, %v901, 0
    %v909 = vsel %vm799, %v902, 0
    %v912 = vsel %vm799, %v903, 0
    %v915 = vsel %vm799, %v904, 0
    %917 = vmatprep.subr.mxu0 0.0
    %918 = vmatpush1.msra.mxu0 %v787
    %919 = vmatprep.subr.mxu0 0.0
    %920 = vmatpush1.msra.mxu0 %v788
    %921 = vmatprep.subr.mxu0 0.0
    %922 = vmatpush1.msra.mxu0 %v789
    %923 = vmatprep.subr.mxu0 0.0
    %924 = vmatpush1.msra.mxu0 %v790
    %925 = vmatprep.subr.mxu0 0.0
    %926 = vmatpush1.msra.mxu0 %v791
    %927 = vmatprep.subr.mxu0 0.0
    %928 = vmatpush1.msra.mxu0 %v792
    %929 = vmatprep.subr.mxu0 0.0
    %930 = vmatpush1.msra.mxu0 %v793
    %931 = vmatprep.subr.mxu0 0.0
    %932 = vmatpush1.msra.mxu0 %v814
    %933 = vmatprep.subr.mxu0 0.0
    %934 = vmatpush1.msra.mxu0 0.0
    %935 = vmatprep.subr.mxu0 0.0
    %936 = vmatpush1.msra.mxu0 0.0
    %937 = vmatprep.subr.mxu0 0.0
    %938 = vmatpush1.msra.mxu0 0.0
    %939 = vmatprep.subr.mxu0 0.0
    %940 = vmatpush1.msra.mxu0 0.0
    %941 = vmatprep.subr.mxu0 0.0
    %942 = vmatpush1.msra.mxu0 0.0
    %943 = vmatprep.subr.mxu0 0.0
    %944 = vmatpush1.msra.mxu0 0.0
    %945 = vmatprep.subr.mxu0 0.0
    %946 = vmatpush1.msra.mxu0 0.0
    %947 = vmatprep.subr.mxu0 0.0
    %948 = vmatpush1.msra.mxu0 0.0
    %949 = vmatprep.subr.mxu0 0.0
    %950 = vmatpush1.msra.mxu0 0.0
    %951 = vmatprep.subr.mxu0 0.0
    %952 = vmatpush1.msra.mxu0 0.0
    %953 = vmatprep.subr.mxu0 0.0
    %954 = vmatpush1.msra.mxu0 0.0
    %955 = vmatprep.subr.mxu0 0.0
    %956 = vmatpush1.msra.mxu0 0.0
    %957 = vmatprep.subr.mxu0 0.0
    %958 = vmatpush1.msra.mxu0 0.0
    %959 = vmatprep.subr.mxu0 0.0
    %960 = vmatpush1.msra.mxu0 0.0
    %961 = vmatprep.subr.mxu0 0.0
    %962 = vmatpush1.msra.mxu0 0.0
    %963 = vmatprep.subr.mxu0 0.0
    %964 = vmatpush1.msra.mxu0 0.0
    %965 = vmatprep.subr.mxu0 0.0
    %966 = vmatpush1.msra.mxu0 0.0
    %967 = vmatprep.subr.mxu0 0.0
    %968 = vmatpush1.msra.mxu0 0.0
    %969 = vmatprep.subr.mxu0 0.0
    %970 = vmatpush1.msra.mxu0 0.0
    %971 = vmatprep.subr.mxu0 0.0
    %972 = vmatpush1.msra.mxu0 0.0
    %973 = vmatprep.subr.mxu0 0.0
    %974 = vmatpush1.msra.mxu0 0.0
    %975 = vmatprep.subr.mxu0 0.0
    %976 = vmatpush1.msra.mxu0 0.0
    %977 = vmatprep.subr.mxu0 0.0
    %978 = vmatpush1.msra.mxu0 0.0
    %979 = vmatprep.subr.mxu0 0.0
    %980 = vmatpush1.msra.mxu0 0.0
    %981 = vmatprep.mubr.f32.mxu0 0.0
    %982 = vmatmul.mubr.f32.gmra.mrb[0].mxu0 %v906
    %v983 = vpop.f32.mrb[0].mxu0
    %v984 = vadd.f32 0.0, %v983
    %v985 = vpop.f32.mrb[0].mxu0
    %986 = vmatprep.mubr.f32.mxu0 0.0
    %987 = vmatmul.mubr.f32.gmra.mrb[0].mxu0 %v909
    %v988 = vpop.f32.mrb[0].mxu0
    %v989 = vadd.f32 0.0, %v988
    %v990 = vpop.f32.mrb[0].mxu0
    %991 = vmatprep.mubr.f32.mxu0 0.0
    %992 = vmatmul.mubr.f32.gmra.mrb[0].mxu0 %v912
    %v993 = vpop.f32.mrb[0].mxu0
    %v994 = vadd.f32 0.0, %v993
    %v995 = vpop.f32.mrb[0].mxu0
    %996 = vmatprep.mubr.f32.mxu0 0.0
    %997 = vmatmul.mubr.f32.gmra.mrb[0].mxu0 %v915
    %v998 = vpop.f32.mrb[0].mxu0
    %v999 = vadd.f32 0.0, %v998
    %v1000 = vpop.f32.mrb[0].mxu0
    %1001 = vdwg.mxu0
    %v1002 = vmax.f32 %v883, %v984
    %v1003 = vmax.f32 %v888, %v989
    %v1004 = vmax.f32 %v893, %v994
    %v1005 = vmax.f32 %v898, %v999
    %s1006 = scalar_lea.vmem %s5, 32
    %v1007 = vld [vmem:[%s1006] sm:$0xff]
    %v1008 = vld [vmem:[%s1006 + $0x8] sm:$0xff]
    %v1009 = vld [vmem:[%s1006 + $0x10] sm:$0xff]
    %v1010 = vld [vmem:[%s1006 + $0x18] sm:$0xf]
    %v1012 = vsel %vm799, %v1007, 0
    %v1015 = vsel %vm799, %v1008, 0
    %v1018 = vsel %vm799, %v1009, 0
    %v1021 = vsel %vm799, %v1010, 0
    %1023 = vmatprep.subr.mxu0 0.0
    %1024 = vmatpush1.msra.mxu0 %v787
    %1025 = vmatprep.subr.mxu0 0.0
    %1026 = vmatpush1.msra.mxu0 %v788
    %1027 = vmatprep.subr.mxu0 0.0
    %1028 = vmatpush1.msra.mxu0 %v789
    %1029 = vmatprep.subr.mxu0 0.0
    %1030 = vmatpush1.msra.mxu0 %v790
    %1031 = vmatprep.subr.mxu0 0.0
    %1032 = vmatpush1.msra.mxu0 %v791
    %1033 = vmatprep.subr.mxu0 0.0
    %1034 = vmatpush1.msra.mxu0 %v792
    %1035 = vmatprep.subr.mxu0 0.0
    %1036 = vmatpush1.msra.mxu0 %v793
    %1037 = vmatprep.subr.mxu0 0.0
    %1038 = vmatpush1.msra.mxu0 %v814
    %1039 = vmatprep.subr.mxu0 0.0
    %1040 = vmatpush1.msra.mxu0 0.0
    %1041 = vmatprep.subr.mxu0 0.0
    %1042 = vmatpush1.msra.mxu0 0.0
    %1043 = vmatprep.subr.mxu0 0.0
    %1044 = vmatpush1.msra.mxu0 0.0
    %1045 = vmatprep.subr.mxu0 0.0
    %1046 = vmatpush1.msra.mxu0 0.0
    %1047 = vmatprep.subr.mxu0 0.0
    %1048 = vmatpush1.msra.mxu0 0.0
    %1049 = vmatprep.subr.mxu0 0.0
    %1050 = vmatpush1.msra.mxu0 0.0
    %1051 = vmatprep.subr.mxu0 0.0
    %1052 = vmatpush1.msra.mxu0 0.0
    %1053 = vmatprep.subr.mxu0 0.0
    %1054 = vmatpush1.msra.mxu0 0.0
    %1055 = vmatprep.subr.mxu0 0.0
    %1056 = vmatpush1.msra.mxu0 0.0
    %1057 = vmatprep.subr.mxu0 0.0
    %1058 = vmatpush1.msra.mxu0 0.0
    %1059 = vmatprep.subr.mxu0 0.0
    %1060 = vmatpush1.msra.mxu0 0.0
    %1061 = vmatprep.subr.mxu0 0.0
    %1062 = vmatpush1.msra.mxu0 0.0
    %1063 = vmatprep.subr.mxu0 0.0
    %1064 = vmatpush1.msra.mxu0 0.0
    %1065 = vmatprep.subr.mxu0 0.0
    %1066 = vmatpush1.msra.mxu0 0.0
    %1067 = vmatprep.subr.mxu0 0.0
    %1068 = vmatpush1.msra.mxu0 0.0
    %1069 = vmatprep.subr.mxu0 0.0
    %1070 = vmatpush1.msra.mxu0 0.0
    %1071 = vmatprep.subr.mxu0 0.0
    %1072 = vmatpush1.msra.mxu0 0.0
    %1073 = vmatprep.subr.mxu0 0.0
    %1074 = vmatpush1.msra.mxu0 0.0
    %1075 = vmatprep.subr.mxu0 0.0
    %1076 = vmatpush1.msra.mxu0 0.0
    %1077 = vmatprep.subr.mxu0 0.0
    %1078 = vmatpush1.msra.mxu0 0.0
    %1079 = vmatprep.subr.mxu0 0.0
    %1080 = vmatpush1.msra.mxu0 0.0
    %1081 = vmatprep.subr.mxu0 0.0
    %1082 = vmatpush1.msra.mxu0 0.0
    %1083 = vmatprep.subr.mxu0 0.0
    %1084 = vmatpush1.msra.mxu0 0.0
    %1085 = vmatprep.subr.mxu0 0.0
    %1086 = vmatpush1.msra.mxu0 0.0
    %1087 = vmatprep.mubr.f32.mxu0 0.0
    %1088 = vmatmul.mubr.f32.gmra.mrb[0].mxu0 %v1012
    %v1089 = vpop.f32.mrb[0].mxu0
    %v1090 = vadd.f32 0.0, %v1089
    %v1091 = vpop.f32.mrb[0].mxu0
    %1092 = vmatprep.mubr.f32.mxu0 0.0
    %1093 = vmatmul.mubr.f32.gmra.mrb[0].mxu0 %v1015
    %v1094 = vpop.f32.mrb[0].mxu0
    %v1095 = vadd.f32 0.0, %v1094
    %v1096 = vpop.f32.mrb[0].mxu0
    %1097 = vmatprep.mubr.f32.mxu0 0.0
    %1098 = vmatmul.mubr.f32.gmra.mrb[0].mxu0 %v1018
    %v1099 = vpop.f32.mrb[0].mxu0
    %v1100 = vadd.f32 0.0, %v1099
    %v1101 = vpop.f32.mrb[0].mxu0
    %1102 = vmatprep.mubr.f32.mxu0 0.0
    %1103 = vmatmul.mubr.f32.gmra.mrb[0].mxu0 %v1021
    %v1104 = vpop.f32.mrb[0].mxu0
    %v1105 = vadd.f32 0.0, %v1104
    %v1106 = vpop.f32.mrb[0].mxu0
    %1107 = vdwg.mxu0
    %s1108 = scalar_lea.vmem %s6, 32
    %v1109 = vld [vmem:[%s1108] sm:$0xff]
    %v1110 = vld [vmem:[%s1108 + $0x8] sm:$0xff]
    %v1111 = vld [vmem:[%s1108 + $0x10] sm:$0xff]
    %v1112 = vld [vmem:[%s1108 + $0x18] sm:$0xf]
    %v1114 = vsel %vm799, %v1109, 0
    %v1117 = vsel %vm799, %v1110, 0
    %v1120 = vsel %vm799, %v1111, 0
    %v1123 = vsel %vm799, %v1112, 0
    %1125 = vmatprep.subr.mxu0 0.0
    %1126 = vmatpush1.msra.mxu0 %v787
    %1127 = vmatprep.subr.mxu0 0.0
    %1128 = vmatpush1.msra.mxu0 %v788
    %1129 = vmatprep.subr.mxu0 0.0
    %1130 = vmatpush1.msra.mxu0 %v789
    %1131 = vmatprep.subr.mxu0 0.0
    %1132 = vmatpush1.msra.mxu0 %v790
    %1133 = vmatprep.subr.mxu0 0.0
    %1134 = vmatpush1.msra.mxu0 %v791
    %1135 = vmatprep.subr.mxu0 0.0
    %1136 = vmatpush1.msra.mxu0 %v792
    %1137 = vmatprep.subr.mxu0 0.0
    %1138 = vmatpush1.msra.mxu0 %v793
    %1139 = vmatprep.subr.mxu0 0.0
    %1140 = vmatpush1.msra.mxu0 %v814
    %1141 = vmatprep.subr.mxu0 0.0
    %1142 = vmatpush1.msra.mxu0 0.0
    %1143 = vmatprep.subr.mxu0 0.0
    %1144 = vmatpush1.msra.mxu0 0.0
    %1145 = vmatprep.subr.mxu0 0.0
    %1146 = vmatpush1.msra.mxu0 0.0
    %1147 = vmatprep.subr.mxu0 0.0
    %1148 = vmatpush1.msra.mxu0 0.0
    %1149 = vmatprep.subr.mxu0 0.0
    %1150 = vmatpush1.msra.mxu0 0.0
    %1151 = vmatprep.subr.mxu0 0.0
    %1152 = vmatpush1.msra.mxu0 0.0
    %1153 = vmatprep.subr.mxu0 0.0
    %1154 = vmatpush1.msra.mxu0 0.0
    %1155 = vmatprep.subr.mxu0 0.0
    %1156 = vmatpush1.msra.mxu0 0.0
    %1157 = vmatprep.subr.mxu0 0.0
    %1158 = vmatpush1.msra.mxu0 0.0
    %1159 = vmatprep.subr.mxu0 0.0
    %1160 = vmatpush1.msra.mxu0 0.0
    %1161 = vmatprep.subr.mxu0 0.0
    %1162 = vmatpush1.msra.mxu0 0.0
    %1163 = vmatprep.subr.mxu0 0.0
    %1164 = vmatpush1.msra.mxu0 0.0
    %1165 = vmatprep.subr.mxu0 0.0
    %1166 = vmatpush1.msra.mxu0 0.0
    %1167 = vmatprep.subr.mxu0 0.0
    %1168 = vmatpush1.msra.mxu0 0.0
    %1169 = vmatprep.subr.mxu0 0.0
    %1170 = vmatpush1.msra.mxu0 0.0
    %1171 = vmatprep.subr.mxu0 0.0
    %1172 = vmatpush1.msra.mxu0 0.0
    %1173 = vmatprep.subr.mxu0 0.0
    %1174 = vmatpush1.msra.mxu0 0.0
    %1175 = vmatprep.subr.mxu0 0.0
    %1176 = vmatpush1.msra.mxu0 0.0
    %1177 = vmatprep.subr.mxu0 0.0
    %1178 = vmatpush1.msra.mxu0 0.0
    %1179 = vmatprep.subr.mxu0 0.0
    %1180 = vmatpush1.msra.mxu0 0.0
    %1181 = vmatprep.subr.mxu0 0.0
    %1182 = vmatpush1.msra.mxu0 0.0
    %1183 = vmatprep.subr.mxu0 0.0
    %1184 = vmatpush1.msra.mxu0 0.0
    %1185 = vmatprep.subr.mxu0 0.0
    %1186 = vmatpush1.msra.mxu0 0.0
    %1187 = vmatprep.subr.mxu0 0.0
    %1188 = vmatpush1.msra.mxu0 0.0
    %1189 = vmatprep.mubr.f32.mxu0 0.0
    %1190 = vmatmul.mubr.f32.gmra.mrb[0].mxu0 %v1114
    %v1191 = vpop.f32.mrb[0].mxu0
    %v1192 = vadd.f32 0.0, %v1191
    %v1193 = vpop.f32.mrb[0].mxu0
    %1194 = vmatprep.mubr.f32.mxu0 0.0
    %1195 = vmatmul.mubr.f32.gmra.mrb[0].mxu0 %v1117
    %v1196 = vpop.f32.mrb[0].mxu0
    %v1197 = vadd.f32 0.0, %v1196
    %v1198 = vpop.f32.mrb[0].mxu0
    %1199 = vmatprep.mubr.f32.mxu0 0.0
    %1200 = vmatmul.mubr.f32.gmra.mrb[0].mxu0 %v1120
    %v1201 = vpop.f32.mrb[0].mxu0
    %v1202 = vadd.f32 0.0, %v1201
    %v1203 = vpop.f32.mrb[0].mxu0
    %1204 = vmatprep.mubr.f32.mxu0 0.0
    %1205 = vmatmul.mubr.f32.gmra.mrb[0].mxu0 %v1123
    %v1206 = vpop.f32.mrb[0].mxu0
    %v1207 = vadd.f32 0.0, %v1206
    %v1208 = vpop.f32.mrb[0].mxu0
    %1209 = vdwg.mxu0
    %v1210 = vmax.f32 %v1090, %v1192
    %v1211 = vmax.f32 %v1095, %v1197
    %v1212 = vmax.f32 %v1100, %v1202
    %v1213 = vmax.f32 %v1105, %v1207
    %s1214 = scalar_lea.vmem %s5, 64
    %v1215 = vld [vmem:[%s1214] sm:$0xff]
    %v1216 = vld [vmem:[%s1214 + $0x8] sm:$0xff]
    %v1217 = vld [vmem:[%s1214 + $0x10] sm:$0xff]
    %v1218 = vld [vmem:[%s1214 + $0x18] sm:$0xf]
    %v1220 = vsel %vm799, %v1215, 0
    %v1223 = vsel %vm799, %v1216, 0
    %v1226 = vsel %vm799, %v1217, 0
    %v1229 = vsel %vm799, %v1218, 0
    %1231 = vmatprep.subr.mxu0 0.0
    %1232 = vmatpush1.msra.mxu0 %v787
    %1233 = vmatprep.subr.mxu0 0.0
    %1234 = vmatpush1.msra.mxu0 %v788
    %1235 = vmatprep.subr.mxu0 0.0
    %1236 = vmatpush1.msra.mxu0 %v789
    %1237 = vmatprep.subr.mxu0 0.0
    %1238 = vmatpush1.msra.mxu0 %v790
    %1239 = vmatprep.subr.mxu0 0.0
    %1240 = vmatpush1.msra.mxu0 %v791
    %1241 = vmatprep.subr.mxu0 0.0
    %1242 = vmatpush1.msra.mxu0 %v792
    %1243 = vmatprep.subr.mxu0 0.0
    %1244 = vmatpush1.msra.mxu0 %v793
    %1245 = vmatprep.subr.mxu0 0.0
    %1246 = vmatpush1.msra.mxu0 %v814
    %1247 = vmatprep.subr.mxu0 0.0
    %1248 = vmatpush1.msra.mxu0 0.0
    %1249 = vmatprep.subr.mxu0 0.0
    %1250 = vmatpush1.msra.mxu0 0.0
    %1251 = vmatprep.subr.mxu0 0.0
    %1252 = vmatpush1.msra.mxu0 0.0
    %1253 = vmatprep.subr.mxu0 0.0
    %1254 = vmatpush1.msra.mxu0 0.0
    %1255 = vmatprep.subr.mxu0 0.0
    %1256 = vmatpush1.msra.mxu0 0.0
    %1257 = vmatprep.subr.mxu0 0.0
    %1258 = vmatpush1.msra.mxu0 0.0
    %1259 = vmatprep.subr.mxu0 0.0
    %1260 = vmatpush1.msra.mxu0 0.0
    %1261 = vmatprep.subr.mxu0 0.0
    %1262 = vmatpush1.msra.mxu0 0.0
    %1263 = vmatprep.subr.mxu0 0.0
    %1264 = vmatpush1.msra.mxu0 0.0
    %1265 = vmatprep.subr.mxu0 0.0
    %1266 = vmatpush1.msra.mxu0 0.0
    %1267 = vmatprep.subr.mxu0 0.0
    %1268 = vmatpush1.msra.mxu0 0.0
    %1269 = vmatprep.subr.mxu0 0.0
    %1270 = vmatpush1.msra.mxu0 0.0
    %1271 = vmatprep.subr.mxu0 0.0
    %1272 = vmatpush1.msra.mxu0 0.0
    %1273 = vmatprep.subr.mxu0 0.0
    %1274 = vmatpush1.msra.mxu0 0.0
    %1275 = vmatprep.subr.mxu0 0.0
    %1276 = vmatpush1.msra.mxu0 0.0
    %1277 = vmatprep.subr.mxu0 0.0
    %1278 = vmatpush1.msra.mxu0 0.0
    %1279 = vmatprep.subr.mxu0 0.0
    %1280 = vmatpush1.msra.mxu0 0.0
    %1281 = vmatprep.subr.mxu0 0.0
    %1282 = vmatpush1.msra.mxu0 0.0
    %1283 = vmatprep.subr.mxu0 0.0
    %1284 = vmatpush1.msra.mxu0 0.0
    %1285 = vmatprep.subr.mxu0 0.0
    %1286 = vmatpush1.msra.mxu0 0.0
    %1287 = vmatprep.subr.mxu0 0.0
    %1288 = vmatpush1.msra.mxu0 0.0
    %1289 = vmatprep.subr.mxu0 0.0
    %1290 = vmatpush1.msra.mxu0 0.0
    %1291 = vmatprep.subr.mxu0 0.0
    %1292 = vmatpush1.msra.mxu0 0.0
    %1293 = vmatprep.subr.mxu0 0.0
    %1294 = vmatpush1.msra.mxu0 0.0
    %1295 = vmatprep.mubr.f32.mxu0 0.0
    %1296 = vmatmul.mubr.f32.gmra.mrb[0].mxu0 %v1220
    %v1297 = vpop.f32.mrb[0].mxu0
    %v1298 = vadd.f32 0.0, %v1297
    %v1299 = vpop.f32.mrb[0].mxu0
    %1300 = vmatprep.mubr.f32.mxu0 0.0
    %1301 = vmatmul.mubr.f32.gmra.mrb[0].mxu0 %v1223
    %v1302 = vpop.f32.mrb[0].mxu0
    %v1303 = vadd.f32 0.0, %v1302
    %v1304 = vpop.f32.mrb[0].mxu0
    %1305 = vmatprep.mubr.f32.mxu0 0.0
    %1306 = vmatmul.mubr.f32.gmra.mrb[0].mxu0 %v1226
    %v1307 = vpop.f32.mrb[0].mxu0
    %v1308 = vadd.f32 0.0, %v1307
    %v1309 = vpop.f32.mrb[0].mxu0
    %1310 = vmatprep.mubr.f32.mxu0 0.0
    %1311 = vmatmul.mubr.f32.gmra.mrb[0].mxu0 %v1229
    %v1312 = vpop.f32.mrb[0].mxu0
    %v1313 = vadd.f32 0.0, %v1312
    %v1314 = vpop.f32.mrb[0].mxu0
    %1315 = vdwg.mxu0
    %s1316 = scalar_lea.vmem %s6, 64
    %v1317 = vld [vmem:[%s1316] sm:$0xff]
    %v1318 = vld [vmem:[%s1316 + $0x8] sm:$0xff]
    %v1319 = vld [vmem:[%s1316 + $0x10] sm:$0xff]
    %v1320 = vld [vmem:[%s1316 + $0x18] sm:$0xf]
    %v1322 = vsel %vm799, %v1317, 0
    %v1325 = vsel %vm799, %v1318, 0
    %v1328 = vsel %vm799, %v1319, 0
    %v1331 = vsel %vm799, %v1320, 0
    %1333 = vmatprep.subr.mxu0 0.0
    %1334 = vmatpush1.msra.mxu0 %v787
    %1335 = vmatprep.subr.mxu0 0.0
    %1336 = vmatpush1.msra.mxu0 %v788
    %1337 = vmatprep.subr.mxu0 0.0
    %1338 = vmatpush1.msra.mxu0 %v789
    %1339 = vmatprep.subr.mxu0 0.0
    %1340 = vmatpush1.msra.mxu0 %v790
    %1341 = vmatprep.subr.mxu0 0.0
    %1342 = vmatpush1.msra.mxu0 %v791
    %1343 = vmatprep.subr.mxu0 0.0
    %1344 = vmatpush1.msra.mxu0 %v792
    %1345 = vmatprep.subr.mxu0 0.0
    %1346 = vmatpush1.msra.mxu0 %v793
    %1347 = vmatprep.subr.mxu0 0.0
    %1348 = vmatpush1.msra.mxu0 %v814
    %1349 = vmatprep.subr.mxu0 0.0
    %1350 = vmatpush1.msra.mxu0 0.0
    %1351 = vmatprep.subr.mxu0 0.0
    %1352 = vmatpush1.msra.mxu0 0.0
    %1353 = vmatprep.subr.mxu0 0.0
    %1354 = vmatpush1.msra.mxu0 0.0
    %1355 = vmatprep.subr.mxu0 0.0
    %1356 = vmatpush1.msra.mxu0 0.0
    %1357 = vmatprep.subr.mxu0 0.0
    %1358 = vmatpush1.msra.mxu0 0.0
    %1359 = vmatprep.subr.mxu0 0.0
    %1360 = vmatpush1.msra.mxu0 0.0
    %1361 = vmatprep.subr.mxu0 0.0
    %1362 = vmatpush1.msra.mxu0 0.0
    %1363 = vmatprep.subr.mxu0 0.0
    %1364 = vmatpush1.msra.mxu0 0.0
    %1365 = vmatprep.subr.mxu0 0.0
    %1366 = vmatpush1.msra.mxu0 0.0
    %1367 = vmatprep.subr.mxu0 0.0
    %1368 = vmatpush1.msra.mxu0 0.0
    %1369 = vmatprep.subr.mxu0 0.0
    %1370 = vmatpush1.msra.mxu0 0.0
    %1371 = vmatprep.subr.mxu0 0.0
    %1372 = vmatpush1.msra.mxu0 0.0
    %1373 = vmatprep.subr.mxu0 0.0
    %1374 = vmatpush1.msra.mxu0 0.0
    %1375 = vmatprep.subr.mxu0 0.0
    %1376 = vmatpush1.msra.mxu0 0.0
    %1377 = vmatprep.subr.mxu0 0.0
    %1378 = vmatpush1.msra.mxu0 0.0
    %1379 = vmatprep.subr.mxu0 0.0
    %1380 = vmatpush1.msra.mxu0 0.0
    %1381 = vmatprep.subr.mxu0 0.0
    %1382 = vmatpush1.msra.mxu0 0.0
    %1383 = vmatprep.subr.mxu0 0.0
    %1384 = vmatpush1.msra.mxu0 0.0
    %1385 = vmatprep.subr.mxu0 0.0
    %1386 = vmatpush1.msra.mxu0 0.0
    %1387 = vmatprep.subr.mxu0 0.0
    %1388 = vmatpush1.msra.mxu0 0.0
    %1389 = vmatprep.subr.mxu0 0.0
    %1390 = vmatpush1.msra.mxu0 0.0
    %1391 = vmatprep.subr.mxu0 0.0
    %1392 = vmatpush1.msra.mxu0 0.0
    %1393 = vmatprep.subr.mxu0 0.0
    %1394 = vmatpush1.msra.mxu0 0.0
    %1395 = vmatprep.subr.mxu0 0.0
    %1396 = vmatpush1.msra.mxu0 0.0
    %1397 = vmatprep.mubr.f32.mxu0 0.0
    %1398 = vmatmul.mubr.f32.gmra.mrb[0].mxu0 %v1322
    %v1399 = vpop.f32.mrb[0].mxu0
    %v1400 = vadd.f32 0.0, %v1399
    %v1401 = vpop.f32.mrb[0].mxu0
    %1402 = vmatprep.mubr.f32.mxu0 0.0
    %1403 = vmatmul.mubr.f32.gmra.mrb[0].mxu0 %v1325
    %v1404 = vpop.f32.mrb[0].mxu0
    %v1405 = vadd.f32 0.0, %v1404
    %v1406 = vpop.f32.mrb[0].mxu0
    %1407 = vmatprep.mubr.f32.mxu0 0.0
    %1408 = vmatmul.mubr.f32.gmra.mrb[0].mxu0 %v1328
    %v1409 = vpop.f32.mrb[0].mxu0
    %v1410 = vadd.f32 0.0, %v1409
    %v1411 = vpop.f32.mrb[0].mxu0
    %1412 = vmatprep.mubr.f32.mxu0 0.0
    %1413 = vmatmul.mubr.f32.gmra.mrb[0].mxu0 %v1331
    %v1414 = vpop.f32.mrb[0].mxu0
    %v1415 = vadd.f32 0.0, %v1414
    %v1416 = vpop.f32.mrb[0].mxu0
    %1417 = vdwg.mxu0
    %v1418 = vmax.f32 %v1298, %v1400
    %v1419 = vmax.f32 %v1303, %v1405
    %v1420 = vmax.f32 %v1308, %v1410
    %v1421 = vmax.f32 %v1313, %v1415
    %v1422 = vld [vmem:[%s7] sm:$0xff]
    %v1423 = vld [vmem:[%s7 + $0x8] sm:$0xff]
    %v1424 = vld [vmem:[%s7 + $0x10] sm:$0xff]
    %v1425 = vld [vmem:[%s7 + $0x18] sm:$0xff]
    %v1426 = vld [vmem:[%s7 + $0x20] sm:$0xff]
    %v1427 = vld [vmem:[%s7 + $0x28] sm:$0xff]
    %v1428 = vld [vmem:[%s7 + $0x30] sm:$0xff]
    %v1429 = vld [vmem:[%s7 + $0x38] sm:$0xff]
    %s1430 = scalar_lea.vmem %s7, 64
    %v1431 = vld [vmem:[%s1430] sm:$0xff]
    %v1432 = vld [vmem:[%s1430 + $0x8] sm:$0xff]
    %v1433 = vld [vmem:[%s1430 + $0x10] sm:$0xff]
    %v1434 = vld [vmem:[%s1430 + $0x18] sm:$0xff]
    %v1435 = vld [vmem:[%s1430 + $0x20] sm:$0xff]
    %v1436 = vld [vmem:[%s1430 + $0x28] sm:$0xff]
    %v1437 = vld [vmem:[%s1430 + $0x30] sm:$0xff]
    %v1438 = vld [vmem:[%s1430 + $0x38] sm:$0xff]
    %vm1439 = vcmask 523264
    %v1441 = vsel %vm1439, %v1210, 0
    %v1444 = vsel %vm1439, %v1211, 0
    %v1447 = vsel %vm1439, %v1212, 0
    %v1450 = vsel %vm1439, %v1213, 0
    %1452 = vmatprep.subr.mxu0 0.0
    %1453 = vmatpush1.msra.mxu0 %v1431
    %1454 = vmatprep.subr.mxu0 0.0
    %1455 = vmatpush1.msra.mxu0 %v1432
    %1456 = vmatprep.subr.mxu0 0.0
    %1457 = vmatpush1.msra.mxu0 %v1433
    %1458 = vmatprep.subr.mxu0 0.0
    %1459 = vmatpush1.msra.mxu0 %v1434
    %1460 = vmatprep.subr.mxu0 0.0
    %1461 = vmatpush1.msra.mxu0 %v1435
    %1462 = vmatprep.subr.mxu0 0.0
    %1463 = vmatpush1.msra.mxu0 %v1436
    %1464 = vmatprep.subr.mxu0 0.0
    %1465 = vmatpush1.msra.mxu0 %v1437
    %1466 = vmatprep.subr.mxu0 0.0
    %1467 = vmatpush1.msra.mxu0 %v1438
    %1468 = vmatprep.subr.mxu0 0.0
    %1469 = vmatpush1.msra.mxu0 0.0
    %1470 = vmatprep.subr.mxu0 0.0
    %1471 = vmatpush1.msra.mxu0 0.0
    %1472 = vmatprep.subr.mxu0 0.0
    %1473 = vmatpush1.msra.mxu0 0.0
    %1474 = vmatprep.subr.mxu0 0.0
    %1475 = vmatpush1.msra.mxu0 0.0
    %1476 = vmatprep.subr.mxu0 0.0
    %1477 = vmatpush1.msra.mxu0 0.0
    %1478 = vmatprep.subr.mxu0 0.0
    %1479 = vmatpush1.msra.mxu0 0.0
    %1480 = vmatprep.subr.mxu0 0.0
    %1481 = vmatpush1.msra.mxu0 0.0
    %1482 = vmatprep.subr.mxu0 0.0
    %1483 = vmatpush1.msra.mxu0 0.0
    %1484 = vmatprep.subr.mxu0 0.0
    %1485 = vmatpush1.msra.mxu0 0.0
    %1486 = vmatprep.subr.mxu0 0.0
    %1487 = vmatpush1.msra.mxu0 0.0
    %1488 = vmatprep.subr.mxu0 0.0
    %1489 = vmatpush1.msra.mxu0 0.0
    %1490 = vmatprep.subr.mxu0 0.0
    %1491 = vmatpush1.msra.mxu0 0.0
    %1492 = vmatprep.subr.mxu0 0.0
    %1493 = vmatpush1.msra.mxu0 0.0
    %1494 = vmatprep.subr.mxu0 0.0
    %1495 = vmatpush1.msra.mxu0 0.0
    %1496 = vmatprep.subr.mxu0 0.0
    %1497 = vmatpush1.msra.mxu0 0.0
    %1498 = vmatprep.subr.mxu0 0.0
    %1499 = vmatpush1.msra.mxu0 0.0
    %1500 = vmatprep.subr.mxu0 0.0
    %1501 = vmatpush1.msra.mxu0 0.0
    %1502 = vmatprep.subr.mxu0 0.0
    %1503 = vmatpush1.msra.mxu0 0.0
    %1504 = vmatprep.subr.mxu0 0.0
    %1505 = vmatpush1.msra.mxu0 0.0
    %1506 = vmatprep.subr.mxu0 0.0
    %1507 = vmatpush1.msra.mxu0 0.0
    %1508 = vmatprep.subr.mxu0 0.0
    %1509 = vmatpush1.msra.mxu0 0.0
    %1510 = vmatprep.subr.mxu0 0.0
    %1511 = vmatpush1.msra.mxu0 0.0
    %1512 = vmatprep.subr.mxu0 0.0
    %1513 = vmatpush1.msra.mxu0 0.0
    %1514 = vmatprep.subr.mxu0 0.0
    %1515 = vmatpush1.msra.mxu0 0.0
    %1516 = vmatprep.mubr.f32.mxu0 0.0
    %1517 = vmatmul.mubr.f32.gmra.mrb[0].mxu0 %v1441
    %v1518 = vpop.f32.mrb[0].mxu0
    %v1519 = vadd.f32 0.0, %v1518
    %v1520 = vpop.f32.mrb[0].mxu0
    %1521 = vmatprep.mubr.f32.mxu0 0.0
    %1522 = vmatmul.mubr.f32.gmra.mrb[0].mxu0 %v1444
    %v1523 = vpop.f32.mrb[0].mxu0
    %v1524 = vadd.f32 0.0, %v1523
    %v1525 = vpop.f32.mrb[0].mxu0
    %1526 = vmatprep.mubr.f32.mxu0 0.0
    %1527 = vmatmul.mubr.f32.gmra.mrb[0].mxu0 %v1447
    %v1528 = vpop.f32.mrb[0].mxu0
    %v1529 = vadd.f32 0.0, %v1528
    %v1530 = vpop.f32.mrb[0].mxu0
    %1531 = vmatprep.mubr.f32.mxu0 0.0
    %1532 = vmatmul.mubr.f32.gmra.mrb[0].mxu0 %v1450
    %v1533 = vpop.f32.mrb[0].mxu0
    %v1534 = vadd.f32 0.0, %v1533
    %v1535 = vpop.f32.mrb[0].mxu0
    %1536 = vdwg.mxu0
    %v1538 = vsel %vm1439, %v1002, 0
    %v1541 = vsel %vm1439, %v1003, 0
    %v1544 = vsel %vm1439, %v1004, 0
    %v1547 = vsel %vm1439, %v1005, 0
    %1549 = vmatprep.subr.mxu0 0.0
    %1550 = vmatpush1.msra.mxu0 %v1422
    %1551 = vmatprep.subr.mxu0 0.0
    %1552 = vmatpush1.msra.mxu0 %v1423
    %1553 = vmatprep.subr.mxu0 0.0
    %1554 = vmatpush1.msra.mxu0 %v1424
    %1555 = vmatprep.subr.mxu0 0.0
    %1556 = vmatpush1.msra.mxu0 %v1425
    %1557 = vmatprep.subr.mxu0 0.0
    %1558 = vmatpush1.msra.mxu0 %v1426
    %1559 = vmatprep.subr.mxu0 0.0
    %1560 = vmatpush1.msra.mxu0 %v1427
    %1561 = vmatprep.subr.mxu0 0.0
    %1562 = vmatpush1.msra.mxu0 %v1428
    %1563 = vmatprep.subr.mxu0 0.0
    %1564 = vmatpush1.msra.mxu0 %v1429
    %1565 = vmatprep.subr.mxu0 0.0
    %1566 = vmatpush1.msra.mxu0 0.0
    %1567 = vmatprep.subr.mxu0 0.0
    %1568 = vmatpush1.msra.mxu0 0.0
    %1569 = vmatprep.subr.mxu0 0.0
    %1570 = vmatpush1.msra.mxu0 0.0
    %1571 = vmatprep.subr.mxu0 0.0
    %1572 = vmatpush1.msra.mxu0 0.0
    %1573 = vmatprep.subr.mxu0 0.0
    %1574 = vmatpush1.msra.mxu0 0.0
    %1575 = vmatprep.subr.mxu0 0.0
    %1576 = vmatpush1.msra.mxu0 0.0
    %1577 = vmatprep.subr.mxu0 0.0
    %1578 = vmatpush1.msra.mxu0 0.0
    %1579 = vmatprep.subr.mxu0 0.0
    %1580 = vmatpush1.msra.mxu0 0.0
    %1581 = vmatprep.subr.mxu0 0.0
    %1582 = vmatpush1.msra.mxu0 0.0
    %1583 = vmatprep.subr.mxu0 0.0
    %1584 = vmatpush1.msra.mxu0 0.0
    %1585 = vmatprep.subr.mxu0 0.0
    %1586 = vmatpush1.msra.mxu0 0.0
    %1587 = vmatprep.subr.mxu0 0.0
    %1588 = vmatpush1.msra.mxu0 0.0
    %1589 = vmatprep.subr.mxu0 0.0
    %1590 = vmatpush1.msra.mxu0 0.0
    %1591 = vmatprep.subr.mxu0 0.0
    %1592 = vmatpush1.msra.mxu0 0.0
    %1593 = vmatprep.subr.mxu0 0.0
    %1594 = vmatpush1.msra.mxu0 0.0
    %1595 = vmatprep.subr.mxu0 0.0
    %1596 = vmatpush1.msra.mxu0 0.0
    %1597 = vmatprep.subr.mxu0 0.0
    %1598 = vmatpush1.msra.mxu0 0.0
    %1599 = vmatprep.subr.mxu0 0.0
    %1600 = vmatpush1.msra.mxu0 0.0
    %1601 = vmatprep.subr.mxu0 0.0
    %1602 = vmatpush1.msra.mxu0 0.0
    %1603 = vmatprep.subr.mxu0 0.0
    %1604 = vmatpush1.msra.mxu0 0.0
    %1605 = vmatprep.subr.mxu0 0.0
    %1606 = vmatpush1.msra.mxu0 0.0
    %1607 = vmatprep.subr.mxu0 0.0
    %1608 = vmatpush1.msra.mxu0 0.0
    %1609 = vmatprep.subr.mxu0 0.0
    %1610 = vmatpush1.msra.mxu0 0.0
    %1611 = vmatprep.subr.mxu0 0.0
    %1612 = vmatpush1.msra.mxu0 0.0
    %1613 = vmatprep.mubr.f32.mxu0 0.0
    %1614 = vmatmul.mubr.f32.gmra.mrb[0].mxu0 %v1538
    %v1615 = vpop.f32.mrb[0].mxu0
    %v1616 = vadd.f32 %v1519, %v1615
    %v1617 = vpop.f32.mrb[0].mxu0
    %1618 = vmatprep.mubr.f32.mxu0 0.0
    %1619 = vmatmul.mubr.f32.gmra.mrb[0].mxu0 %v1541
    %v1620 = vpop.f32.mrb[0].mxu0
    %v1621 = vadd.f32 %v1524, %v1620
    %v1622 = vpop.f32.mrb[0].mxu0
    %1623 = vmatprep.mubr.f32.mxu0 0.0
    %1624 = vmatmul.mubr.f32.gmra.mrb[0].mxu0 %v1544
    %v1625 = vpop.f32.mrb[0].mxu0
    %v1626 = vadd.f32 %v1529, %v1625
    %v1627 = vpop.f32.mrb[0].mxu0
    %1628 = vmatprep.mubr.f32.mxu0 0.0
    %1629 = vmatmul.mubr.f32.gmra.mrb[0].mxu0 %v1547
    %v1630 = vpop.f32.mrb[0].mxu0
    %v1631 = vadd.f32 %v1534, %v1630
    %v1632 = vpop.f32.mrb[0].mxu0
    %1633 = vdwg.mxu0
    %s1634 = scalar_lea.vmem %s7, 128
    %v1635 = vld [vmem:[%s1634] sm:$0xff]
    %v1636 = vld [vmem:[%s1634 + $0x8] sm:$0xff]
    %v1637 = vld [vmem:[%s1634 + $0x10] sm:$0xff]
    %v1638 = vld [vmem:[%s1634 + $0x18] sm:$0xff]
    %v1639 = vld [vmem:[%s1634 + $0x20] sm:$0xff]
    %v1640 = vld [vmem:[%s1634 + $0x28] sm:$0xff]
    %v1641 = vld [vmem:[%s1634 + $0x30] sm:$0xff]
    %v1642 = vld [vmem:[%s1634 + $0x38] sm:$0xff]
    %v1644 = vsel %vm1439, %v1418, 0
    %v1647 = vsel %vm1439, %v1419, 0
    %v1650 = vsel %vm1439, %v1420, 0
    %v1653 = vsel %vm1439, %v1421, 0
    %1655 = vmatprep.subr.mxu0 0.0
    %1656 = vmatpush1.msra.mxu0 %v1635
    %1657 = vmatprep.subr.mxu0 0.0
    %1658 = vmatpush1.msra.mxu0 %v1636
    %1659 = vmatprep.subr.mxu0 0.0
    %1660 = vmatpush1.msra.mxu0 %v1637
    %1661 = vmatprep.subr.mxu0 0.0
    %1662 = vmatpush1.msra.mxu0 %v1638
    %1663 = vmatprep.subr.mxu0 0.0
    %1664 = vmatpush1.msra.mxu0 %v1639
    %1665 = vmatprep.subr.mxu0 0.0
    %1666 = vmatpush1.msra.mxu0 %v1640
    %1667 = vmatprep.subr.mxu0 0.0
    %1668 = vmatpush1.msra.mxu0 %v1641
    %1669 = vmatprep.subr.mxu0 0.0
    %1670 = vmatpush1.msra.mxu0 %v1642
    %1671 = vmatprep.subr.mxu0 0.0
    %1672 = vmatpush1.msra.mxu0 0.0
    %1673 = vmatprep.subr.mxu0 0.0
    %1674 = vmatpush1.msra.mxu0 0.0
    %1675 = vmatprep.subr.mxu0 0.0
    %1676 = vmatpush1.msra.mxu0 0.0
    %1677 = vmatprep.subr.mxu0 0.0
    %1678 = vmatpush1.msra.mxu0 0.0
    %1679 = vmatprep.subr.mxu0 0.0
    %1680 = vmatpush1.msra.mxu0 0.0
    %1681 = vmatprep.subr.mxu0 0.0
    %1682 = vmatpush1.msra.mxu0 0.0
    %1683 = vmatprep.subr.mxu0 0.0
    %1684 = vmatpush1.msra.mxu0 0.0
    %1685 = vmatprep.subr.mxu0 0.0
    %1686 = vmatpush1.msra.mxu0 0.0
    %1687 = vmatprep.subr.mxu0 0.0
    %1688 = vmatpush1.msra.mxu0 0.0
    %1689 = vmatprep.subr.mxu0 0.0
    %1690 = vmatpush1.msra.mxu0 0.0
    %1691 = vmatprep.subr.mxu0 0.0
    %1692 = vmatpush1.msra.mxu0 0.0
    %1693 = vmatprep.subr.mxu0 0.0
    %1694 = vmatpush1.msra.mxu0 0.0
    %1695 = vmatprep.subr.mxu0 0.0
    %1696 = vmatpush1.msra.mxu0 0.0
    %1697 = vmatprep.subr.mxu0 0.0
    %1698 = vmatpush1.msra.mxu0 0.0
    %1699 = vmatprep.subr.mxu0 0.0
    %1700 = vmatpush1.msra.mxu0 0.0
    %1701 = vmatprep.subr.mxu0 0.0
    %1702 = vmatpush1.msra.mxu0 0.0
    %1703 = vmatprep.subr.mxu0 0.0
    %1704 = vmatpush1.msra.mxu0 0.0
    %1705 = vmatprep.subr.mxu0 0.0
    %1706 = vmatpush1.msra.mxu0 0.0
    %1707 = vmatprep.subr.mxu0 0.0
    %1708 = vmatpush1.msra.mxu0 0.0
    %1709 = vmatprep.subr.mxu0 0.0
    %1710 = vmatpush1.msra.mxu0 0.0
    %1711 = vmatprep.subr.mxu0 0.0
    %1712 = vmatpush1.msra.mxu0 0.0
    %1713 = vmatprep.subr.mxu0 0.0
    %1714 = vmatpush1.msra.mxu0 0.0
    %1715 = vmatprep.subr.mxu0 0.0
    %1716 = vmatpush1.msra.mxu0 0.0
    %1717 = vmatprep.subr.mxu0 0.0
    %1718 = vmatpush1.msra.mxu0 0.0
    %1719 = vmatprep.mubr.f32.mxu0 0.0
    %1720 = vmatmul.mubr.f32.gmra.mrb[0].mxu0 %v1644
    %v1721 = vpop.f32.mrb[0].mxu0
    %v1722 = vadd.f32 0.0, %v1721
    %v1723 = vpop.f32.mrb[0].mxu0
    %1724 = vmatprep.mubr.f32.mxu0 0.0
    %1725 = vmatmul.mubr.f32.gmra.mrb[0].mxu0 %v1647
    %v1726 = vpop.f32.mrb[0].mxu0
    %v1727 = vadd.f32 0.0, %v1726
    %v1728 = vpop.f32.mrb[0].mxu0
    %1729 = vmatprep.mubr.f32.mxu0 0.0
    %1730 = vmatmul.mubr.f32.gmra.mrb[0].mxu0 %v1650
    %v1731 = vpop.f32.mrb[0].mxu0
    %v1732 = vadd.f32 0.0, %v1731
    %v1733 = vpop.f32.mrb[0].mxu0
    %1734 = vmatprep.mubr.f32.mxu0 0.0
    %1735 = vmatmul.mubr.f32.gmra.mrb[0].mxu0 %v1653
    %v1736 = vpop.f32.mrb[0].mxu0
    %v1737 = vadd.f32 0.0, %v1736
    %v1738 = vpop.f32.mrb[0].mxu0
    %1739 = vdwg.mxu0
    %v1740 = vadd.f32 %v1616, %v1722
    %v1741 = vadd.f32 %v1621, %v1727
    %v1742 = vadd.f32 %v1626, %v1732
    %v1743 = vadd.f32 %v1631, %v1737
    %v1744 = vld [vmem:[%s8] sm:$0x1]
    %v1746 = vlaneseq
    %v1747 = vshrl.u32 %v1746, 7
    %v1748 = vsub.s32 0, %v1747
    %v1749 = vrot.slane %v1744, %v1748
    %v1751 = vadd.f32 %v1740, %v1749
    %v1752 = vadd.f32 %v1741, %v1749
    %v1753 = vadd.f32 %v1742, %v1749
    %v1754 = vadd.f32 %v1743, %v1749
    %v1755 = vmax.f32 %v1751, 0.0
    %v1756 = vmax.f32 %v1752, 0.0
    %v1757 = vmax.f32 %v1753, 0.0
    %v1758 = vmax.f32 %v1754, 0.0
    %v1759 = vld [vmem:[%s9] sm:$0xff]
    %v1760 = vld [vmem:[%s9 + $0x8] sm:$0xff]
    %v1761 = vld [vmem:[%s9 + $0x10] sm:$0xff]
    %v1762 = vld [vmem:[%s9 + $0x18] sm:$0xff]
    %v1763 = vld [vmem:[%s9 + $0x20] sm:$0xff]
    %v1764 = vld [vmem:[%s9 + $0x28] sm:$0xff]
    %v1765 = vld [vmem:[%s9 + $0x30] sm:$0xff]
    %v1766 = vld [vmem:[%s9 + $0x38] sm:$0xff]
    %v1767 = vld [vmem:[%s9 + $0x40] sm:$0xff]
    %v1768 = vld [vmem:[%s9 + $0x48] sm:$0xff]
    %v1769 = vld [vmem:[%s9 + $0x50] sm:$0xff]
    %v1770 = vld [vmem:[%s9 + $0x58] sm:$0xff]
    %v1771 = vld [vmem:[%s9 + $0x60] sm:$0xff]
    %v1772 = vld [vmem:[%s9 + $0x68] sm:$0xff]
    %v1774 = vsel %vm538, %v1755, 0
    %v1777 = vsel %vm538, %v1756, 0
    %v1780 = vsel %vm538, %v1757, 0
    %v1783 = vsel %vm538, %v1758, 0
    %1785 = vmatprep.subr.mxu0 0.0
    %1786 = vmatpush1.msra.mxu0 %v1759
    %1787 = vmatprep.subr.mxu0 0.0
    %1788 = vmatpush1.msra.mxu0 %v1760
    %1789 = vmatprep.subr.mxu0 0.0
    %1790 = vmatpush1.msra.mxu0 %v1761
    %1791 = vmatprep.subr.mxu0 0.0
    %1792 = vmatpush1.msra.mxu0 %v1762
    %1793 = vmatprep.subr.mxu0 0.0
    %1794 = vmatpush1.msra.mxu0 %v1763
    %1795 = vmatprep.subr.mxu0 0.0
    %1796 = vmatpush1.msra.mxu0 %v1764
    %1797 = vmatprep.subr.mxu0 0.0
    %1798 = vmatpush1.msra.mxu0 %v1765
    %1799 = vmatprep.subr.mxu0 0.0
    %1800 = vmatpush1.msra.mxu0 %v1766
    %1801 = vmatprep.subr.mxu0 0.0
    %1802 = vmatpush1.msra.mxu0 %v1767
    %1803 = vmatprep.subr.mxu0 0.0
    %1804 = vmatpush1.msra.mxu0 %v1768
    %1805 = vmatprep.subr.mxu0 0.0
    %1806 = vmatpush1.msra.mxu0 %v1769
    %1807 = vmatprep.subr.mxu0 0.0
    %1808 = vmatpush1.msra.mxu0 %v1770
    %1809 = vmatprep.subr.mxu0 0.0
    %1810 = vmatpush1.msra.mxu0 %v1771
    %1811 = vmatprep.subr.mxu0 0.0
    %1812 = vmatpush1.msra.mxu0 %v1772
    %1813 = vmatprep.subr.mxu0 0.0
    %1814 = vmatpush1.msra.mxu0 0.0
    %1815 = vmatprep.subr.mxu0 0.0
    %1816 = vmatpush1.msra.mxu0 0.0
    %1817 = vmatprep.subr.mxu0 0.0
    %1818 = vmatpush1.msra.mxu0 0.0
    %1819 = vmatprep.subr.mxu0 0.0
    %1820 = vmatpush1.msra.mxu0 0.0
    %1821 = vmatprep.subr.mxu0 0.0
    %1822 = vmatpush1.msra.mxu0 0.0
    %1823 = vmatprep.subr.mxu0 0.0
    %1824 = vmatpush1.msra.mxu0 0.0
    %1825 = vmatprep.subr.mxu0 0.0
    %1826 = vmatpush1.msra.mxu0 0.0
    %1827 = vmatprep.subr.mxu0 0.0
    %1828 = vmatpush1.msra.mxu0 0.0
    %1829 = vmatprep.subr.mxu0 0.0
    %1830 = vmatpush1.msra.mxu0 0.0
    %1831 = vmatprep.subr.mxu0 0.0
    %1832 = vmatpush1.msra.mxu0 0.0
    %1833 = vmatprep.subr.mxu0 0.0
    %1834 = vmatpush1.msra.mxu0 0.0
    %1835 = vmatprep.subr.mxu0 0.0
    %1836 = vmatpush1.msra.mxu0 0.0
    %1837 = vmatprep.subr.mxu0 0.0
    %1838 = vmatpush1.msra.mxu0 0.0
    %1839 = vmatprep.subr.mxu0 0.0
    %1840 = vmatpush1.msra.mxu0 0.0
    %1841 = vmatprep.subr.mxu0 0.0
    %1842 = vmatpush1.msra.mxu0 0.0
    %1843 = vmatprep.subr.mxu0 0.0
    %1844 = vmatpush1.msra.mxu0 0.0
    %1845 = vmatprep.subr.mxu0 0.0
    %1846 = vmatpush1.msra.mxu0 0.0
    %1847 = vmatprep.subr.mxu0 0.0
    %1848 = vmatpush1.msra.mxu0 0.0
    %1849 = vmatprep.mubr.f32.mxu0 0.0
    %1850 = vmatmul.mubr.f32.gmra.mrb[0].mxu0 %v1774
    %v1851 = vpop.f32.mrb[0].mxu0
    %v1852 = vadd.f32 0.0, %v1851
    %v1853 = vpop.f32.mrb[0].mxu0
    %1854 = vmatprep.mubr.f32.mxu0 0.0
    %1855 = vmatmul.mubr.f32.gmra.mrb[0].mxu0 %v1777
    %v1856 = vpop.f32.mrb[0].mxu0
    %v1857 = vadd.f32 0.0, %v1856
    %v1858 = vpop.f32.mrb[0].mxu0
    %1859 = vmatprep.mubr.f32.mxu0 0.0
    %1860 = vmatmul.mubr.f32.gmra.mrb[0].mxu0 %v1780
    %v1861 = vpop.f32.mrb[0].mxu0
    %v1862 = vadd.f32 0.0, %v1861
    %v1863 = vpop.f32.mrb[0].mxu0
    %1864 = vmatprep.mubr.f32.mxu0 0.0
    %1865 = vmatmul.mubr.f32.gmra.mrb[0].mxu0 %v1783
    %v1866 = vpop.f32.mrb[0].mxu0
    %v1867 = vadd.f32 0.0, %v1866
    %v1868 = vpop.f32.mrb[0].mxu0
    %1869 = vdwg.mxu0
    %v1870 = vld [vmem:[%s10] sm:$0xff]
    %v1871 = vld [vmem:[%s10 + $0x8] sm:$0xff]
    %v1872 = vld [vmem:[%s10 + $0x10] sm:$0xff]
    %v1873 = vld [vmem:[%s10 + $0x18] sm:$0xff]
    %v1874 = vld [vmem:[%s10 + $0x20] sm:$0xff]
    %v1875 = vld [vmem:[%s10 + $0x28] sm:$0xff]
    %v1876 = vld [vmem:[%s10 + $0x30] sm:$0xff]
    %v1877 = vld [vmem:[%s10 + $0x38] sm:$0xff]
    %v1878 = vld [vmem:[%s10 + $0x40] sm:$0xff]
    %v1879 = vld [vmem:[%s10 + $0x48] sm:$0xff]
    %v1880 = vld [vmem:[%s10 + $0x50] sm:$0xff]
    %v1881 = vld [vmem:[%s10 + $0x58] sm:$0xff]
    %v1882 = vld [vmem:[%s10 + $0x60] sm:$0xff]
    %v1883 = vld [vmem:[%s10 + $0x68] sm:$0xff]
    %1884 = vmatprep.subr.mxu0 0.0
    %1885 = vmatpush1.msra.mxu0 %v1870
    %1886 = vmatprep.subr.mxu0 0.0
    %1887 = vmatpush1.msra.mxu0 %v1871
    %1888 = vmatprep.subr.mxu0 0.0
    %1889 = vmatpush1.msra.mxu0 %v1872
    %1890 = vmatprep.subr.mxu0 0.0
    %1891 = vmatpush1.msra.mxu0 %v1873
    %1892 = vmatprep.subr.mxu0 0.0
    %1893 = vmatpush1.msra.mxu0 %v1874
    %1894 = vmatprep.subr.mxu0 0.0
    %1895 = vmatpush1.msra.mxu0 %v1875
    %1896 = vmatprep.subr.mxu0 0.0
    %1897 = vmatpush1.msra.mxu0 %v1876
    %1898 = vmatprep.subr.mxu0 0.0
    %1899 = vmatpush1.msra.mxu0 %v1877
    %1900 = vmatprep.subr.mxu0 0.0
    %1901 = vmatpush1.msra.mxu0 %v1878
    %1902 = vmatprep.subr.mxu0 0.0
    %1903 = vmatpush1.msra.mxu0 %v1879
    %1904 = vmatprep.subr.mxu0 0.0
    %1905 = vmatpush1.msra.mxu0 %v1880
    %1906 = vmatprep.subr.mxu0 0.0
    %1907 = vmatpush1.msra.mxu0 %v1881
    %1908 = vmatprep.subr.mxu0 0.0
    %1909 = vmatpush1.msra.mxu0 %v1882
    %1910 = vmatprep.subr.mxu0 0.0
    %1911 = vmatpush1.msra.mxu0 %v1883
    %1912 = vmatprep.subr.mxu0 0.0
    %1913 = vmatpush1.msra.mxu0 0.0
    %1914 = vmatprep.subr.mxu0 0.0
    %1915 = vmatpush1.msra.mxu0 0.0
    %1916 = vmatprep.subr.mxu0 0.0
    %1917 = vmatpush1.msra.mxu0 0.0
    %1918 = vmatprep.subr.mxu0 0.0
    %1919 = vmatpush1.msra.mxu0 0.0
    %1920 = vmatprep.subr.mxu0 0.0
    %1921 = vmatpush1.msra.mxu0 0.0
    %1922 = vmatprep.subr.mxu0 0.0
    %1923 = vmatpush1.msra.mxu0 0.0
    %1924 = vmatprep.subr.mxu0 0.0
    %1925 = vmatpush1.msra.mxu0 0.0
    %1926 = vmatprep.subr.mxu0 0.0
    %1927 = vmatpush1.msra.mxu0 0.0
    %1928 = vmatprep.subr.mxu0 0.0
    %1929 = vmatpush1.msra.mxu0 0.0
    %1930 = vmatprep.subr.mxu0 0.0
    %1931 = vmatpush1.msra.mxu0 0.0
    %1932 = vmatprep.subr.mxu0 0.0
    %1933 = vmatpush1.msra.mxu0 0.0
    %1934 = vmatprep.subr.mxu0 0.0
    %1935 = vmatpush1.msra.mxu0 0.0
    %1936 = vmatprep.subr.mxu0 0.0
    %1937 = vmatpush1.msra.mxu0 0.0
    %1938 = vmatprep.subr.mxu0 0.0
    %1939 = vmatpush1.msra.mxu0 0.0
    %1940 = vmatprep.subr.mxu0 0.0
    %1941 = vmatpush1.msra.mxu0 0.0
    %1942 = vmatprep.subr.mxu0 0.0
    %1943 = vmatpush1.msra.mxu0 0.0
    %1944 = vmatprep.subr.mxu0 0.0
    %1945 = vmatpush1.msra.mxu0 0.0
    %1946 = vmatprep.subr.mxu0 0.0
    %1947 = vmatpush1.msra.mxu0 0.0
    %1948 = vmatprep.mubr.f32.mxu0 0.0
    %1949 = vmatmul.mubr.f32.gmra.mrb[0].mxu0 %v1774
    %v1950 = vpop.f32.mrb[0].mxu0
    %v1951 = vadd.f32 0.0, %v1950
    %v1952 = vpop.f32.mrb[0].mxu0
    %1953 = vmatprep.mubr.f32.mxu0 0.0
    %1954 = vmatmul.mubr.f32.gmra.mrb[0].mxu0 %v1777
    %v1955 = vpop.f32.mrb[0].mxu0
    %v1956 = vadd.f32 0.0, %v1955
    %v1957 = vpop.f32.mrb[0].mxu0
    %1958 = vmatprep.mubr.f32.mxu0 0.0
    %1959 = vmatmul.mubr.f32.gmra.mrb[0].mxu0 %v1780
    %v1960 = vpop.f32.mrb[0].mxu0
    %v1961 = vadd.f32 0.0, %v1960
    %v1962 = vpop.f32.mrb[0].mxu0
    %1963 = vmatprep.mubr.f32.mxu0 0.0
    %1964 = vmatmul.mubr.f32.gmra.mrb[0].mxu0 %v1783
    %v1965 = vpop.f32.mrb[0].mxu0
    %v1966 = vadd.f32 0.0, %v1965
    %v1967 = vpop.f32.mrb[0].mxu0
    %1968 = vdwg.mxu0
    %v1969 = vmax.f32 %v1852, %v1951
    %v1970 = vmax.f32 %v1857, %v1956
    %v1971 = vmax.f32 %v1862, %v1961
    %v1972 = vmax.f32 %v1867, %v1966
    %v1973 = vld [vmem:[%s11] sm:$0xff]
    %v1974 = vld [vmem:[%s11 + $0x8] sm:$0x3f]
    %vm1975 = vcmask 228352
    %v1977 = vsel %vm1975, %v1973, 0
    %v1980 = vsel %vm1975, %v1974, 0
    %v1983 = vsel %vm812, %v1972, 0
    %1985 = vmatprep.subr.mxu0 0.0
    %1986 = vmatpush1.msra.mxu0 %v1969
    %1987 = vmatprep.subr.mxu0 0.0
    %1988 = vmatpush1.msra.mxu0 %v1970
    %1989 = vmatprep.subr.mxu0 0.0
    %1990 = vmatpush1.msra.mxu0 %v1971
    %1991 = vmatprep.subr.mxu0 0.0
    %1992 = vmatpush1.msra.mxu0 %v1983
    %1993 = vmatprep.subr.mxu0 0.0
    %1994 = vmatpush1.msra.mxu0 0.0
    %1995 = vmatprep.subr.mxu0 0.0
    %1996 = vmatpush1.msra.mxu0 0.0
    %1997 = vmatprep.subr.mxu0 0.0
    %1998 = vmatpush1.msra.mxu0 0.0
    %1999 = vmatprep.subr.mxu0 0.0
    %2000 = vmatpush1.msra.mxu0 0.0
    %2001 = vmatprep.subr.mxu0 0.0
    %2002 = vmatpush1.msra.mxu0 0.0
    %2003 = vmatprep.subr.mxu0 0.0
    %2004 = vmatpush1.msra.mxu0 0.0
    %2005 = vmatprep.subr.mxu0 0.0
    %2006 = vmatpush1.msra.mxu0 0.0
    %2007 = vmatprep.subr.mxu0 0.0
    %2008 = vmatpush1.msra.mxu0 0.0
    %2009 = vmatprep.subr.mxu0 0.0
    %2010 = vmatpush1.msra.mxu0 0.0
    %2011 = vmatprep.subr.mxu0 0.0
    %2012 = vmatpush1.msra.mxu0 0.0
    %2013 = vmatprep.subr.mxu0 0.0
    %2014 = vmatpush1.msra.mxu0 0.0
    %2015 = vmatprep.subr.mxu0 0.0
    %2016 = vmatpush1.msra.mxu0 0.0
    %2017 = vmatprep.subr.mxu0 0.0
    %2018 = vmatpush1.msra.mxu0 0.0
    %2019 = vmatprep.subr.mxu0 0.0
    %2020 = vmatpush1.msra.mxu0 0.0
    %2021 = vmatprep.subr.mxu0 0.0
    %2022 = vmatpush1.msra.mxu0 0.0
    %2023 = vmatprep.subr.mxu0 0.0
    %2024 = vmatpush1.msra.mxu0 0.0
    %2025 = vmatprep.subr.mxu0 0.0
    %2026 = vmatpush1.msra.mxu0 0.0
    %2027 = vmatprep.subr.mxu0 0.0
    %2028 = vmatpush1.msra.mxu0 0.0
    %2029 = vmatprep.subr.mxu0 0.0
    %2030 = vmatpush1.msra.mxu0 0.0
    %2031 = vmatprep.subr.mxu0 0.0
    %2032 = vmatpush1.msra.mxu0 0.0
    %2033 = vmatprep.subr.mxu0 0.0
    %2034 = vmatpush1.msra.mxu0 0.0
    %2035 = vmatprep.subr.mxu0 0.0
    %2036 = vmatpush1.msra.mxu0 0.0
    %2037 = vmatprep.subr.mxu0 0.0
    %2038 = vmatpush1.msra.mxu0 0.0
    %2039 = vmatprep.subr.mxu0 0.0
    %2040 = vmatpush1.msra.mxu0 0.0
    %2041 = vmatprep.subr.mxu0 0.0
    %2042 = vmatpush1.msra.mxu0 0.0
    %2043 = vmatprep.subr.mxu0 0.0
    %2044 = vmatpush1.msra.mxu0 0.0
    %2045 = vmatprep.subr.mxu0 0.0
    %2046 = vmatpush1.msra.mxu0 0.0
    %2047 = vmatprep.subr.mxu0 0.0
    %2048 = vmatpush1.msra.mxu0 0.0
    %2049 = vmatprep.mubr.f32.mxu0 0.0
    %2050 = vmatmul.mubr.f32.gmra.mrb[0].mxu0 %v1977
    %v2051 = vpop.f32.mrb[0].mxu0
    %v2052 = vadd.f32 0.0, %v2051
    %v2053 = vpop.f32.mrb[0].mxu0
    %2054 = vmatprep.mubr.f32.mxu0 0.0
    %2055 = vmatmul.mubr.f32.gmra.mrb[0].mxu0 %v1980
    %v2056 = vpop.f32.mrb[0].mxu0
    %v2057 = vadd.f32 0.0, %v2056
    %v2058 = vpop.f32.mrb[0].mxu0
    %2059 = vdwg.mxu0
    %v2060 = vld [vmem:[%s12] sm:$0xff]
    %v2061 = vld [vmem:[%s12 + $0x8] sm:$0x3f]
    %v2063 = vsel %vm1975, %v2060, 0
    %v2066 = vsel %vm1975, %v2061, 0
    %2068 = vmatprep.subr.mxu0 0.0
    %2069 = vmatpush1.msra.mxu0 %v1969
    %2070 = vmatprep.subr.mxu0 0.0
    %2071 = vmatpush1.msra.mxu0 %v1970
    %2072 = vmatprep.subr.mxu0 0.0
    %2073 = vmatpush1.msra.mxu0 %v1971
    %2074 = vmatprep.subr.mxu0 0.0
    %2075 = vmatpush1.msra.mxu0 %v1983
    %2076 = vmatprep.subr.mxu0 0.0
    %2077 = vmatpush1.msra.mxu0 0.0
    %2078 = vmatprep.subr.mxu0 0.0
    %2079 = vmatpush1.msra.mxu0 0.0
    %2080 = vmatprep.subr.mxu0 0.0
    %2081 = vmatpush1.msra.mxu0 0.0
    %2082 = vmatprep.subr.mxu0 0.0
    %2083 = vmatpush1.msra.mxu0 0.0
    %2084 = vmatprep.subr.mxu0 0.0
    %2085 = vmatpush1.msra.mxu0 0.0
    %2086 = vmatprep.subr.mxu0 0.0
    %2087 = vmatpush1.msra.mxu0 0.0
    %2088 = vmatprep.subr.mxu0 0.0
    %2089 = vmatpush1.msra.mxu0 0.0
    %2090 = vmatprep.subr.mxu0 0.0
    %2091 = vmatpush1.msra.mxu0 0.0
    %2092 = vmatprep.subr.mxu0 0.0
    %2093 = vmatpush1.msra.mxu0 0.0
    %2094 = vmatprep.subr.mxu0 0.0
    %2095 = vmatpush1.msra.mxu0 0.0
    %2096 = vmatprep.subr.mxu0 0.0
    %2097 = vmatpush1.msra.mxu0 0.0
    %2098 = vmatprep.subr.mxu0 0.0
    %2099 = vmatpush1.msra.mxu0 0.0
    %2100 = vmatprep.subr.mxu0 0.0
    %2101 = vmatpush1.msra.mxu0 0.0
    %2102 = vmatprep.subr.mxu0 0.0
    %2103 = vmatpush1.msra.mxu0 0.0
    %2104 = vmatprep.subr.mxu0 0.0
    %2105 = vmatpush1.msra.mxu0 0.0
    %2106 = vmatprep.subr.mxu0 0.0
    %2107 = vmatpush1.msra.mxu0 0.0
    %2108 = vmatprep.subr.mxu0 0.0
    %2109 = vmatpush1.msra.mxu0 0.0
    %2110 = vmatprep.subr.mxu0 0.0
    %2111 = vmatpush1.msra.mxu0 0.0
    %2112 = vmatprep.subr.mxu0 0.0
    %2113 = vmatpush1.msra.mxu0 0.0
    %2114 = vmatprep.subr.mxu0 0.0
    %2115 = vmatpush1.msra.mxu0 0.0
    %2116 = vmatprep.subr.mxu0 0.0
    %2117 = vmatpush1.msra.mxu0 0.0
    %2118 = vmatprep.subr.mxu0 0.0
    %2119 = vmatpush1.msra.mxu0 0.0
    %2120 = vmatprep.subr.mxu0 0.0
    %2121 = vmatpush1.msra.mxu0 0.0
    %2122 = vmatprep.subr.mxu0 0.0
    %2123 = vmatpush1.msra.mxu0 0.0
    %2124 = vmatprep.subr.mxu0 0.0
    %2125 = vmatpush1.msra.mxu0 0.0
    %2126 = vmatprep.subr.mxu0 0.0
    %2127 = vmatpush1.msra.mxu0 0.0
    %2128 = vmatprep.subr.mxu0 0.0
    %2129 = vmatpush1.msra.mxu0 0.0
    %2130 = vmatprep.subr.mxu0 0.0
    %2131 = vmatpush1.msra.mxu0 0.0
    %2132 = vmatprep.mubr.f32.mxu0 0.0
    %2133 = vmatmul.mubr.f32.gmra.mrb[0].mxu0 %v2063
    %v2134 = vpop.f32.mrb[0].mxu0
    %v2135 = vadd.f32 0.0, %v2134
    %v2136 = vpop.f32.mrb[0].mxu0
    %2137 = vmatprep.mubr.f32.mxu0 0.0
    %2138 = vmatmul.mubr.f32.gmra.mrb[0].mxu0 %v2066
    %v2139 = vpop.f32.mrb[0].mxu0
    %v2140 = vadd.f32 0.0, %v2139
    %v2141 = vpop.f32.mrb[0].mxu0
    %2142 = vdwg.mxu0
    %v2143 = vmax.f32 %v2052, %v2135
    %v2144 = vmax.f32 %v2057, %v2140
    %v2145 = vld [vmem:[%s13] sm:$0xff]
    %v2146 = vld [vmem:[%s13 + $0x8] sm:$0xff]
    %v2147 = vld [vmem:[%s13 + $0x10] sm:$0xff]
    %v2148 = vld [vmem:[%s13 + $0x18] sm:$0xff]
    %v2149 = vld [vmem:[%s13 + $0x20] sm:$0xff]
    %v2150 = vld [vmem:[%s13 + $0x28] sm:$0xff]
    %v2151 = vld [vmem:[%s13 + $0x30] sm:$0xff]
    %v2152 = vld [vmem:[%s13 + $0x38] sm:$0xff]
    %v2153 = vld [vmem:[%s13 + $0x40] sm:$0xff]
    %v2154 = vld [vmem:[%s13 + $0x48] sm:$0xff]
    %v2155 = vld [vmem:[%s13 + $0x50] sm:$0xff]
    %v2156 = vld [vmem:[%s13 + $0x58] sm:$0xff]
    %v2157 = vld [vmem:[%s13 + $0x60] sm:$0xff]
    %v2158 = vld [vmem:[%s13 + $0x68] sm:$0xff]
    %v2159 = vld [vmem:[%s13 + $0x70] sm:$0xff]
    %v2160 = vld [vmem:[%s13 + $0x78] sm:$0xff]
    %v2161 = vld [vmem:[%s13 + $0x80] sm:$0xff]
    %v2162 = vld [vmem:[%s13 + $0x88] sm:$0xff]
    %v2163 = vld [vmem:[%s13 + $0x90] sm:$0xff]
    %v2164 = vld [vmem:[%s13 + $0x98] sm:$0xff]
    %v2165 = vld [vmem:[%s13 + $0xa0] sm:$0xff]
    %v2166 = vld [vmem:[%s13 + $0xa8] sm:$0xff]
    %v2167 = vld [vmem:[%s13 + $0xb0] sm:$0xff]
    %v2168 = vld [vmem:[%s13 + $0xb8] sm:$0xff]
    %v2169 = vld [vmem:[%s13 + $0xc0] sm:$0xff]
    %v2170 = vld [vmem:[%s13 + $0xc8] sm:$0xff]
    %v2171 = vld [vmem:[%s13 + $0xd0] sm:$0xff]
    %v2172 = vld [vmem:[%s13 + $0xd8] sm:$0xff]
    %v2173 = vld [vmem:[%s13 + $0xe0] sm:$0xff]
    %v2174 = vld [vmem:[%s13 + $0xe8] sm:$0xff]
    %v2175 = vld [vmem:[%s13 + $0xf0] sm:$0xff]
    %v2176 = vld [vmem:[%s13 + $0xf8] sm:$0xff]
    %v2177 = vld [vmem:[%s13 + $0x100] sm:$0xff]
    %v2178 = vld [vmem:[%s13 + $0x108] sm:$0xff]
    %v2179 = vld [vmem:[%s13 + $0x110] sm:$0xff]
    %v2180 = vld [vmem:[%s13 + $0x118] sm:$0xff]
    %v2181 = vld [vmem:[%s13 + $0x120] sm:$0xff]
    %v2182 = vld [vmem:[%s13 + $0x128] sm:$0xff]
    %v2183 = vld [vmem:[%s13 + $0x130] sm:$0xff]
    %v2184 = vld [vmem:[%s13 + $0x138] sm:$0xff]
    %v2185 = vld [vmem:[%s13 + $0x140] sm:$0xff]
    %v2186 = vld [vmem:[%s13 + $0x148] sm:$0xff]
    %v2187 = vld [vmem:[%s13 + $0x150] sm:$0xff]
    %v2188 = vld [vmem:[%s13 + $0x158] sm:$0xff]
    %v2189 = vld [vmem:[%s13 + $0x160] sm:$0xff]
    %v2190 = vld [vmem:[%s13 + $0x168] sm:$0xff]
    %v2191 = vld [vmem:[%s13 + $0x170] sm:$0xff]
    %v2192 = vld [vmem:[%s13 + $0x178] sm:$0xff]
    %v2193 = vld [vmem:[%s13 + $0x180] sm:$0xff]
    %v2194 = vld [vmem:[%s13 + $0x188] sm:$0xff]
    %v2195 = vld [vmem:[%s13 + $0x190] sm:$0xff]
    %v2196 = vld [vmem:[%s13 + $0x198] sm:$0xff]
    %v2197 = vld [vmem:[%s13 + $0x1a0] sm:$0xff]
    %v2198 = vld [vmem:[%s13 + $0x1a8] sm:$0xff]
    %v2199 = vld [vmem:[%s13 + $0x1b0] sm:$0xff]
    %v2200 = vld [vmem:[%s13 + $0x1b8] sm:$0xff]
    %v2201 = vld [vmem:[%s13 + $0x1c0] sm:$0xff]
    %v2202 = vld [vmem:[%s13 + $0x1c8] sm:$0xff]
    %v2203 = vld [vmem:[%s13 + $0x1d0] sm:$0xff]
    %v2204 = vld [vmem:[%s13 + $0x1d8] sm:$0xff]
    %v2205 = vld [vmem:[%s13 + $0x1e0] sm:$0xff]
    %v2206 = vld [vmem:[%s13 + $0x1e8] sm:$0xff]
    %v2207 = vld [vmem:[%s13 + $0x1f0] sm:$0xff]
    %v2208 = vld [vmem:[%s13 + $0x1f8] sm:$0xff]
    %v2209 = vld [vmem:[%s13 + $0x200] sm:$0xff]
    %v2210 = vld [vmem:[%s13 + $0x208] sm:$0xff]
    %v2211 = vld [vmem:[%s13 + $0x210] sm:$0xff]
    %v2212 = vld [vmem:[%s13 + $0x218] sm:$0xff]
    %v2213 = vld [vmem:[%s13 + $0x220] sm:$0xff]
    %v2214 = vld [vmem:[%s13 + $0x228] sm:$0xff]
    %v2215 = vld [vmem:[%s13 + $0x230] sm:$0xff]
    %v2216 = vld [vmem:[%s13 + $0x238] sm:$0xff]
    %v2217 = vld [vmem:[%s13 + $0x240] sm:$0xff]
    %v2218 = vld [vmem:[%s13 + $0x248] sm:$0xff]
    %v2219 = vld [vmem:[%s13 + $0x250] sm:$0xff]
    %v2220 = vld [vmem:[%s13 + $0x258] sm:$0xff]
    %v2221 = vld [vmem:[%s13 + $0x260] sm:$0xff]
    %v2222 = vld [vmem:[%s13 + $0x268] sm:$0xff]
    %v2223 = vld [vmem:[%s13 + $0x270] sm:$0xff]
    %v2224 = vld [vmem:[%s13 + $0x278] sm:$0xff]
    %v2225 = vld [vmem:[%s13 + $0x280] sm:$0xff]
    %v2226 = vld [vmem:[%s13 + $0x288] sm:$0xff]
    %v2227 = vld [vmem:[%s13 + $0x290] sm:$0xff]
    %v2228 = vld [vmem:[%s13 + $0x298] sm:$0xff]
    %v2229 = vld [vmem:[%s13 + $0x2a0] sm:$0xff]
    %v2230 = vld [vmem:[%s13 + $0x2a8] sm:$0xff]
    %v2231 = vld [vmem:[%s13 + $0x2b0] sm:$0xff]
    %v2232 = vld [vmem:[%s13 + $0x2b8] sm:$0xff]
    %v2233 = vld [vmem:[%s13 + $0x2c0] sm:$0xff]
    %v2234 = vld [vmem:[%s13 + $0x2c8] sm:$0xff]
    %v2235 = vld [vmem:[%s13 + $0x2d0] sm:$0xff]
    %v2236 = vld [vmem:[%s13 + $0x2d8] sm:$0xff]
    %v2237 = vld [vmem:[%s13 + $0x2e0] sm:$0xff]
    %v2238 = vld [vmem:[%s13 + $0x2e8] sm:$0xff]
    %v2239 = vld [vmem:[%s13 + $0x2f0] sm:$0xff]
    %v2240 = vld [vmem:[%s13 + $0x2f8] sm:$0xff]
    %v2241 = vld [vmem:[%s13 + $0x300] sm:$0xff]
    %v2242 = vld [vmem:[%s13 + $0x308] sm:$0xff]
    %vm2243 = vcmask 457728
    %v2245 = vsel %vm2243, %v2143, 0
    %v2248 = vsel %vm2243, %v2144, 0
    %2250 = vmatprep.subr.mxu0 %v2146
    %2251 = vmatpush1.msra.mxu0 %v2145
    %2252 = vmatprep.subr.mxu0 %v2160
    %2253 = vmatpush1.msra.mxu0 %v2159
    %2254 = vmatprep.subr.mxu0 %v2174
    %2255 = vmatpush1.msra.mxu0 %v2173
    %2256 = vmatprep.subr.mxu0 %v2188
    %2257 = vmatpush1.msra.mxu0 %v2187
    %2258 = vmatprep.subr.mxu0 %v2202
    %2259 = vmatpush1.msra.mxu0 %v2201
    %2260 = vmatprep.subr.mxu0 %v2216
    %2261 = vmatpush1.msra.mxu0 %v2215
    %2262 = vmatprep.subr.mxu0 %v2230
    %2263 = vmatpush1.msra.mxu0 %v2229
    %2264 = vmatprep.subr.mxu0 0.0
    %2265 = vmatpush1.msra.mxu0 0.0
    %2266 = vmatprep.subr.mxu0 0.0
    %2267 = vmatpush1.msra.mxu0 0.0
    %2268 = vmatprep.subr.mxu0 0.0
    %2269 = vmatpush1.msra.mxu0 0.0
    %2270 = vmatprep.subr.mxu0 0.0
    %2271 = vmatpush1.msra.mxu0 0.0
    %2272 = vmatprep.subr.mxu0 0.0
    %2273 = vmatpush1.msra.mxu0 0.0
    %2274 = vmatprep.subr.mxu0 0.0
    %2275 = vmatpush1.msra.mxu0 0.0
    %2276 = vmatprep.subr.mxu0 0.0
    %2277 = vmatpush1.msra.mxu0 0.0
    %2278 = vmatprep.subr.mxu0 0.0
    %2279 = vmatpush1.msra.mxu0 0.0
    %2280 = vmatprep.subr.mxu0 0.0
    %2281 = vmatpush1.msra.mxu0 0.0
    %2282 = vmatprep.subr.mxu0 0.0
    %2283 = vmatpush1.msra.mxu0 0.0
    %2284 = vmatprep.subr.mxu0 0.0
    %2285 = vmatpush1.msra.mxu0 0.0
    %2286 = vmatprep.subr.mxu0 0.0
    %2287 = vmatpush1.msra.mxu0 0.0
    %2288 = vmatprep.subr.mxu0 0.0
    %2289 = vmatpush1.msra.mxu0 0.0
    %2290 = vmatprep.subr.mxu0 0.0
    %2291 = vmatpush1.msra.mxu0 0.0
    %2292 = vmatprep.subr.mxu0 0.0
    %2293 = vmatpush1.msra.mxu0 0.0
    %2294 = vmatprep.subr.mxu0 0.0
    %2295 = vmatpush1.msra.mxu0 0.0
    %2296 = vmatprep.subr.mxu0 0.0
    %2297 = vmatpush1.msra.mxu0 0.0
    %2298 = vmatprep.subr.mxu0 0.0
    %2299 = vmatpush1.msra.mxu0 0.0
    %2300 = vmatprep.subr.mxu0 0.0
    %2301 = vmatpush1.msra.mxu0 0.0
    %2302 = vmatprep.subr.mxu0 0.0
    %2303 = vmatpush1.msra.mxu0 0.0
    %2304 = vmatprep.subr.mxu0 0.0
    %2305 = vmatpush1.msra.mxu0 0.0
    %2306 = vmatprep.subr.mxu0 0.0
    %2307 = vmatpush1.msra.mxu0 0.0
    %2308 = vmatprep.subr.mxu0 0.0
    %2309 = vmatpush1.msra.mxu0 0.0
    %2310 = vmatprep.subr.mxu0 0.0
    %2311 = vmatpush1.msra.mxu0 0.0
    %2312 = vmatprep.subr.mxu0 0.0
    %2313 = vmatpush1.msra.mxu0 0.0
    %2314 = vmatprep.mubr.f32.mxu0 0.0
    %2315 = vmatmul.mubr.f32.gmra.mrb[0].mxu0 %v2245
    %v2316 = vpop.f32.mrb[0].mxu0
    %v2317 = vadd.f32 0.0, %v2316
    %v2318 = vpop.f32.mrb[0].mxu0
    %v2319 = vadd.f32 0.0, %v2318
    %2320 = vmatprep.mubr.f32.mxu0 0.0
    %2321 = vmatmul.mubr.f32.gmra.mrb[0].mxu0 %v2248
    %v2322 = vpop.f32.mrb[0].mxu0
    %v2323 = vpop.f32.mrb[0].mxu0
    %2324 = vdwg.mxu0
    %2325 = vmatprep.subr.mxu0 %v2148
    %2326 = vmatpush1.msra.mxu0 %v2147
    %2327 = vmatprep.subr.mxu0 %v2162
    %2328 = vmatpush1.msra.mxu0 %v2161
    %2329 = vmatprep.subr.mxu0 %v2176
    %2330 = vmatpush1.msra.mxu0 %v2175
    %2331 = vmatprep.subr.mxu0 %v2190
    %2332 = vmatpush1.msra.mxu0 %v2189
    %2333 = vmatprep.subr.mxu0 %v2204
    %2334 = vmatpush1.msra.mxu0 %v2203
    %2335 = vmatprep.subr.mxu0 %v2218
    %2336 = vmatpush1.msra.mxu0 %v2217
    %2337 = vmatprep.subr.mxu0 %v2232
    %2338 = vmatpush1.msra.mxu0 %v2231
    %2339 = vmatprep.subr.mxu0 0.0
    %2340 = vmatpush1.msra.mxu0 0.0
    %2341 = vmatprep.subr.mxu0 0.0
    %2342 = vmatpush1.msra.mxu0 0.0
    %2343 = vmatprep.subr.mxu0 0.0
    %2344 = vmatpush1.msra.mxu0 0.0
    %2345 = vmatprep.subr.mxu0 0.0
    %2346 = vmatpush1.msra.mxu0 0.0
    %2347 = vmatprep.subr.mxu0 0.0
    %2348 = vmatpush1.msra.mxu0 0.0
    %2349 = vmatprep.subr.mxu0 0.0
    %2350 = vmatpush1.msra.mxu0 0.0
    %2351 = vmatprep.subr.mxu0 0.0
    %2352 = vmatpush1.msra.mxu0 0.0
    %2353 = vmatprep.subr.mxu0 0.0
    %2354 = vmatpush1.msra.mxu0 0.0
    %2355 = vmatprep.subr.mxu0 0.0
    %2356 = vmatpush1.msra.mxu0 0.0
    %2357 = vmatprep.subr.mxu0 0.0
    %2358 = vmatpush1.msra.mxu0 0.0
    %2359 = vmatprep.subr.mxu0 0.0
    %2360 = vmatpush1.msra.mxu0 0.0
    %2361 = vmatprep.subr.mxu0 0.0
    %2362 = vmatpush1.msra.mxu0 0.0
    %2363 = vmatprep.subr.mxu0 0.0
    %2364 = vmatpush1.msra.mxu0 0.0
    %2365 = vmatprep.subr.mxu0 0.0
    %2366 = vmatpush1.msra.mxu0 0.0
    %2367 = vmatprep.subr.mxu0 0.0
    %2368 = vmatpush1.msra.mxu0 0.0
    %2369 = vmatprep.subr.mxu0 0.0
    %2370 = vmatpush1.msra.mxu0 0.0
    %2371 = vmatprep.subr.mxu0 0.0
    %2372 = vmatpush1.msra.mxu0 0.0
    %2373 = vmatprep.subr.mxu0 0.0
    %2374 = vmatpush1.msra.mxu0 0.0
    %2375 = vmatprep.subr.mxu0 0.0
    %2376 = vmatpush1.msra.mxu0 0.0
    %2377 = vmatprep.subr.mxu0 0.0
    %2378 = vmatpush1.msra.mxu0 0.0
    %2379 = vmatprep.subr.mxu0 0.0
    %2380 = vmatpush1.msra.mxu0 0.0
    %2381 = vmatprep.subr.mxu0 0.0
    %2382 = vmatpush1.msra.mxu0 0.0
    %2383 = vmatprep.subr.mxu0 0.0
    %2384 = vmatpush1.msra.mxu0 0.0
    %2385 = vmatprep.subr.mxu0 0.0
    %2386 = vmatpush1.msra.mxu0 0.0
    %2387 = vmatprep.subr.mxu0 0.0
    %2388 = vmatpush1.msra.mxu0 0.0
    %2389 = vmatprep.mubr.f32.mxu0 0.0
    %2390 = vmatmul.mubr.f32.gmra.mrb[0].mxu0 %v2245
    %v2391 = vpop.f32.mrb[0].mxu0
    %v2392 = vadd.f32 0.0, %v2391
    %v2393 = vpop.f32.mrb[0].mxu0
    %v2394 = vadd.f32 0.0, %v2393
    %2395 = vmatprep.mubr.f32.mxu0 0.0
    %2396 = vmatmul.mubr.f32.gmra.mrb[0].mxu0 %v2248
    %v2397 = vpop.f32.mrb[0].mxu0
    %v2398 = vpop.f32.mrb[0].mxu0
    %2399 = vdwg.mxu0
    %2400 = vmatprep.subr.mxu0 %v2150
    %2401 = vmatpush1.msra.mxu0 %v2149
    %2402 = vmatprep.subr.mxu0 %v2164
    %2403 = vmatpush1.msra.mxu0 %v2163
    %2404 = vmatprep.subr.mxu0 %v2178
    %2405 = vmatpush1.msra.mxu0 %v2177
    %2406 = vmatprep.subr.mxu0 %v2192
    %2407 = vmatpush1.msra.mxu0 %v2191
    %2408 = vmatprep.subr.mxu0 %v2206
    %2409 = vmatpush1.msra.mxu0 %v2205
    %2410 = vmatprep.subr.mxu0 %v2220
    %2411 = vmatpush1.msra.mxu0 %v2219
    %2412 = vmatprep.subr.mxu0 %v2234
    %2413 = vmatpush1.msra.mxu0 %v2233
    %2414 = vmatprep.subr.mxu0 0.0
    %2415 = vmatpush1.msra.mxu0 0.0
    %2416 = vmatprep.subr.mxu0 0.0
    %2417 = vmatpush1.msra.mxu0 0.0
    %2418 = vmatprep.subr.mxu0 0.0
    %2419 = vmatpush1.msra.mxu0 0.0
    %2420 = vmatprep.subr.mxu0 0.0
    %2421 = vmatpush1.msra.mxu0 0.0
    %2422 = vmatprep.subr.mxu0 0.0
    %2423 = vmatpush1.msra.mxu0 0.0
    %2424 = vmatprep.subr.mxu0 0.0
    %2425 = vmatpush1.msra.mxu0 0.0
    %2426 = vmatprep.subr.mxu0 0.0
    %2427 = vmatpush1.msra.mxu0 0.0
    %2428 = vmatprep.subr.mxu0 0.0
    %2429 = vmatpush1.msra.mxu0 0.0
    %2430 = vmatprep.subr.mxu0 0.0
    %2431 = vmatpush1.msra.mxu0 0.0
    %2432 = vmatprep.subr.mxu0 0.0
    %2433 = vmatpush1.msra.mxu0 0.0
    %2434 = vmatprep.subr.mxu0 0.0
    %2435 = vmatpush1.msra.mxu0 0.0
    %2436 = vmatprep.subr.mxu0 0.0
    %2437 = vmatpush1.msra.mxu0 0.0
    %2438 = vmatprep.subr.mxu0 0.0
    %2439 = vmatpush1.msra.mxu0 0.0
    %2440 = vmatprep.subr.mxu0 0.0
    %2441 = vmatpush1.msra.mxu0 0.0
    %2442 = vmatprep.subr.mxu0 0.0
    %2443 = vmatpush1.msra.mxu0 0.0
    %2444 = vmatprep.subr.mxu0 0.0
    %2445 = vmatpush1.msra.mxu0 0.0
    %2446 = vmatprep.subr.mxu0 0.0
    %2447 = vmatpush1.msra.mxu0 0.0
    %2448 = vmatprep.subr.mxu0 0.0
    %2449 = vmatpush1.msra.mxu0 0.0
    %2450 = vmatprep.subr.mxu0 0.0
    %2451 = vmatpush1.msra.mxu0 0.0
    %2452 = vmatprep.subr.mxu0 0.0
    %2453 = vmatpush1.msra.mxu0 0.0
    %2454 = vmatprep.subr.mxu0 0.0
    %2455 = vmatpush1.msra.mxu0 0.0
    %2456 = vmatprep.subr.mxu0 0.0
    %2457 = vmatpush1.msra.mxu0 0.0
    %2458 = vmatprep.subr.mxu0 0.0
    %2459 = vmatpush1.msra.mxu0 0.0
    %2460 = vmatprep.subr.mxu0 0.0
    %2461 = vmatpush1.msra.mxu0 0.0
    %2462 = vmatprep.subr.mxu0 0.0
    %2463 = vmatpush1.msra.mxu0 0.0
    %2464 = vmatprep.mubr.f32.mxu0 0.0
    %2465 = vmatmul.mubr.f32.gmra.mrb[0].mxu0 %v2245
    %v2466 = vpop.f32.mrb[0].mxu0
    %v2467 = vadd.f32 0.0, %v2466
    %v2468 = vpop.f32.mrb[0].mxu0
    %v2469 = vadd.f32 0.0, %v2468
    %2470 = vmatprep.mubr.f32.mxu0 0.0
    %2471 = vmatmul.mubr.f32.gmra.mrb[0].mxu0 %v2248
    %v2472 = vpop.f32.mrb[0].mxu0
    %v2473 = vpop.f32.mrb[0].mxu0
    %2474 = vdwg.mxu0
    %2475 = vmatprep.subr.mxu0 %v2152
    %2476 = vmatpush1.msra.mxu0 %v2151
    %2477 = vmatprep.subr.mxu0 %v2166
    %2478 = vmatpush1.msra.mxu0 %v2165
    %2479 = vmatprep.subr.mxu0 %v2180
    %2480 = vmatpush1.msra.mxu0 %v2179
    %2481 = vmatprep.subr.mxu0 %v2194
    %2482 = vmatpush1.msra.mxu0 %v2193
    %2483 = vmatprep.subr.mxu0 %v2208
    %2484 = vmatpush1.msra.mxu0 %v2207
    %2485 = vmatprep.subr.mxu0 %v2222
    %2486 = vmatpush1.msra.mxu0 %v2221
    %2487 = vmatprep.subr.mxu0 %v2236
    %2488 = vmatpush1.msra.mxu0 %v2235
    %2489 = vmatprep.subr.mxu0 0.0
    %2490 = vmatpush1.msra.mxu0 0.0
    %2491 = vmatprep.subr.mxu0 0.0
    %2492 = vmatpush1.msra.mxu0 0.0
    %2493 = vmatprep.subr.mxu0 0.0
    %2494 = vmatpush1.msra.mxu0 0.0
    %2495 = vmatprep.subr.mxu0 0.0
    %2496 = vmatpush1.msra.mxu0 0.0
    %2497 = vmatprep.subr.mxu0 0.0
    %2498 = vmatpush1.msra.mxu0 0.0
    %2499 = vmatprep.subr.mxu0 0.0
    %2500 = vmatpush1.msra.mxu0 0.0
    %2501 = vmatprep.subr.mxu0 0.0
    %2502 = vmatpush1.msra.mxu0 0.0
    %2503 = vmatprep.subr.mxu0 0.0
    %2504 = vmatpush1.msra.mxu0 0.0
    %2505 = vmatprep.subr.mxu0 0.0
    %2506 = vmatpush1.msra.mxu0 0.0
    %2507 = vmatprep.subr.mxu0 0.0
    %2508 = vmatpush1.msra.mxu0 0.0
    %2509 = vmatprep.subr.mxu0 0.0
    %2510 = vmatpush1.msra.mxu0 0.0
    %2511 = vmatprep.subr.mxu0 0.0
    %2512 = vmatpush1.msra.mxu0 0.0
    %2513 = vmatprep.subr.mxu0 0.0
    %2514 = vmatpush1.msra.mxu0 0.0
    %2515 = vmatprep.subr.mxu0 0.0
    %2516 = vmatpush1.msra.mxu0 0.0
    %2517 = vmatprep.subr.mxu0 0.0
    %2518 = vmatpush1.msra.mxu0 0.0
    %2519 = vmatprep.subr.mxu0 0.0
    %2520 = vmatpush1.msra.mxu0 0.0
    %2521 = vmatprep.subr.mxu0 0.0
    %2522 = vmatpush1.msra.mxu0 0.0
    %2523 = vmatprep.subr.mxu0 0.0
    %2524 = vmatpush1.msra.mxu0 0.0
    %2525 = vmatprep.subr.mxu0 0.0
    %2526 = vmatpush1.msra.mxu0 0.0
    %2527 = vmatprep.subr.mxu0 0.0
    %2528 = vmatpush1.msra.mxu0 0.0
    %2529 = vmatprep.subr.mxu0 0.0
    %2530 = vmatpush1.msra.mxu0 0.0
    %2531 = vmatprep.subr.mxu0 0.0
    %2532 = vmatpush1.msra.mxu0 0.0
    %2533 = vmatprep.subr.mxu0 0.0
    %2534 = vmatpush1.msra.mxu0 0.0
    %2535 = vmatprep.subr.mxu0 0.0
    %2536 = vmatpush1.msra.mxu0 0.0
    %2537 = vmatprep.subr.mxu0 0.0
    %2538 = vmatpush1.msra.mxu0 0.0
    %2539 = vmatprep.mubr.f32.mxu0 0.0
    %2540 = vmatmul.mubr.f32.gmra.mrb[0].mxu0 %v2245
    %v2541 = vpop.f32.mrb[0].mxu0
    %v2542 = vadd.f32 0.0, %v2541
    %v2543 = vpop.f32.mrb[0].mxu0
    %v2544 = vadd.f32 0.0, %v2543
    %2545 = vmatprep.mubr.f32.mxu0 0.0
    %2546 = vmatmul.mubr.f32.gmra.mrb[0].mxu0 %v2248
    %v2547 = vpop.f32.mrb[0].mxu0
    %v2548 = vpop.f32.mrb[0].mxu0
    %2549 = vdwg.mxu0
    %2550 = vmatprep.subr.mxu0 %v2154
    %2551 = vmatpush1.msra.mxu0 %v2153
    %2552 = vmatprep.subr.mxu0 %v2168
    %2553 = vmatpush1.msra.mxu0 %v2167
    %2554 = vmatprep.subr.mxu0 %v2182
    %2555 = vmatpush1.msra.mxu0 %v2181
    %2556 = vmatprep.subr.mxu0 %v2196
    %2557 = vmatpush1.msra.mxu0 %v2195
    %2558 = vmatprep.subr.mxu0 %v2210
    %2559 = vmatpush1.msra.mxu0 %v2209
    %2560 = vmatprep.subr.mxu0 %v2224
    %2561 = vmatpush1.msra.mxu0 %v2223
    %2562 = vmatprep.subr.mxu0 %v2238
    %2563 = vmatpush1.msra.mxu0 %v2237
    %2564 = vmatprep.subr.mxu0 0.0
    %2565 = vmatpush1.msra.mxu0 0.0
    %2566 = vmatprep.subr.mxu0 0.0
    %2567 = vmatpush1.msra.mxu0 0.0
    %2568 = vmatprep.subr.mxu0 0.0
    %2569 = vmatpush1.msra.mxu0 0.0
    %2570 = vmatprep.subr.mxu0 0.0
    %2571 = vmatpush1.msra.mxu0 0.0
    %2572 = vmatprep.subr.mxu0 0.0
    %2573 = vmatpush1.msra.mxu0 0.0
    %2574 = vmatprep.subr.mxu0 0.0
    %2575 = vmatpush1.msra.mxu0 0.0
    %2576 = vmatprep.subr.mxu0 0.0
    %2577 = vmatpush1.msra.mxu0 0.0
    %2578 = vmatprep.subr.mxu0 0.0
    %2579 = vmatpush1.msra.mxu0 0.0
    %2580 = vmatprep.subr.mxu0 0.0
    %2581 = vmatpush1.msra.mxu0 0.0
    %2582 = vmatprep.subr.mxu0 0.0
    %2583 = vmatpush1.msra.mxu0 0.0
    %2584 = vmatprep.subr.mxu0 0.0
    %2585 = vmatpush1.msra.mxu0 0.0
    %2586 = vmatprep.subr.mxu0 0.0
    %2587 = vmatpush1.msra.mxu0 0.0
    %2588 = vmatprep.subr.mxu0 0.0
    %2589 = vmatpush1.msra.mxu0 0.0
    %2590 = vmatprep.subr.mxu0 0.0
    %2591 = vmatpush1.msra.mxu0 0.0
    %2592 = vmatprep.subr.mxu0 0.0
    %2593 = vmatpush1.msra.mxu0 0.0
    %2594 = vmatprep.subr.mxu0 0.0
    %2595 = vmatpush1.msra.mxu0 0.0
    %2596 = vmatprep.subr.mxu0 0.0
    %2597 = vmatpush1.msra.mxu0 0.0
    %2598 = vmatprep.subr.mxu0 0.0
    %2599 = vmatpush1.msra.mxu0 0.0
    %2600 = vmatprep.subr.mxu0 0.0
    %2601 = vmatpush1.msra.mxu0 0.0
    %2602 = vmatprep.subr.mxu0 0.0
    %2603 = vmatpush1.msra.mxu0 0.0
    %2604 = vmatprep.subr.mxu0 0.0
    %2605 = vmatpush1.msra.mxu0 0.0
    %2606 = vmatprep.subr.mxu0 0.0
    %2607 = vmatpush1.msra.mxu0 0.0
    %2608 = vmatprep.subr.mxu0 0.0
    %2609 = vmatpush1.msra.mxu0 0.0
    %2610 = vmatprep.subr.mxu0 0.0
    %2611 = vmatpush1.msra.mxu0 0.0
    %2612 = vmatprep.subr.mxu0 0.0
    %2613 = vmatpush1.msra.mxu0 0.0
    %2614 = vmatprep.mubr.f32.mxu0 0.0
    %2615 = vmatmul.mubr.f32.gmra.mrb[0].mxu0 %v2245
    %v2616 = vpop.f32.mrb[0].mxu0
    %v2617 = vpop.f32.mrb[0].mxu0
    %2618 = vmatprep.mubr.f32.mxu0 0.0
    %2619 = vmatmul.mubr.f32.gmra.mrb[0].mxu0 %v2248
    %v2620 = vpop.f32.mrb[0].mxu0
    %v2621 = vadd.f32 0.0, %v2620
    %v2622 = vpop.f32.mrb[0].mxu0
    %v2623 = vadd.f32 0.0, %v2622
    %2624 = vdwg.mxu0
    %2625 = vmatprep.subr.mxu0 %v2156
    %2626 = vmatpush1.msra.mxu0 %v2155
    %2627 = vmatprep.subr.mxu0 %v2170
    %2628 = vmatpush1.msra.mxu0 %v2169
    %2629 = vmatprep.subr.mxu0 %v2184
    %2630 = vmatpush1.msra.mxu0 %v2183
    %2631 = vmatprep.subr.mxu0 %v2198
    %2632 = vmatpush1.msra.mxu0 %v2197
    %2633 = vmatprep.subr.mxu0 %v2212
    %2634 = vmatpush1.msra.mxu0 %v2211
    %2635 = vmatprep.subr.mxu0 %v2226
    %2636 = vmatpush1.msra.mxu0 %v2225
    %2637 = vmatprep.subr.mxu0 %v2240
    %2638 = vmatpush1.msra.mxu0 %v2239
    %2639 = vmatprep.subr.mxu0 0.0
    %2640 = vmatpush1.msra.mxu0 0.0
    %2641 = vmatprep.subr.mxu0 0.0
    %2642 = vmatpush1.msra.mxu0 0.0
    %2643 = vmatprep.subr.mxu0 0.0
    %2644 = vmatpush1.msra.mxu0 0.0
    %2645 = vmatprep.subr.mxu0 0.0
    %2646 = vmatpush1.msra.mxu0 0.0
    %2647 = vmatprep.subr.mxu0 0.0
    %2648 = vmatpush1.msra.mxu0 0.0
    %2649 = vmatprep.subr.mxu0 0.0
    %2650 = vmatpush1.msra.mxu0 0.0
    %2651 = vmatprep.subr.mxu0 0.0
    %2652 = vmatpush1.msra.mxu0 0.0
    %2653 = vmatprep.subr.mxu0 0.0
    %2654 = vmatpush1.msra.mxu0 0.0
    %2655 = vmatprep.subr.mxu0 0.0
    %2656 = vmatpush1.msra.mxu0 0.0
    %2657 = vmatprep.subr.mxu0 0.0
    %2658 = vmatpush1.msra.mxu0 0.0
    %2659 = vmatprep.subr.mxu0 0.0
    %2660 = vmatpush1.msra.mxu0 0.0
    %2661 = vmatprep.subr.mxu0 0.0
    %2662 = vmatpush1.msra.mxu0 0.0
    %2663 = vmatprep.subr.mxu0 0.0
    %2664 = vmatpush1.msra.mxu0 0.0
    %2665 = vmatprep.subr.mxu0 0.0
    %2666 = vmatpush1.msra.mxu0 0.0
    %2667 = vmatprep.subr.mxu0 0.0
    %2668 = vmatpush1.msra.mxu0 0.0
    %2669 = vmatprep.subr.mxu0 0.0
    %2670 = vmatpush1.msra.mxu0 0.0
    %2671 = vmatprep.subr.mxu0 0.0
    %2672 = vmatpush1.msra.mxu0 0.0
    %2673 = vmatprep.subr.mxu0 0.0
    %2674 = vmatpush1.msra.mxu0 0.0
    %2675 = vmatprep.subr.mxu0 0.0
    %2676 = vmatpush1.msra.mxu0 0.0
    %2677 = vmatprep.subr.mxu0 0.0
    %2678 = vmatpush1.msra.mxu0 0.0
    %2679 = vmatprep.subr.mxu0 0.0
    %2680 = vmatpush1.msra.mxu0 0.0
    %2681 = vmatprep.subr.mxu0 0.0
    %2682 = vmatpush1.msra.mxu0 0.0
    %2683 = vmatprep.subr.mxu0 0.0
    %2684 = vmatpush1.msra.mxu0 0.0
    %2685 = vmatprep.subr.mxu0 0.0
    %2686 = vmatpush1.msra.mxu0 0.0
    %2687 = vmatprep.subr.mxu0 0.0
    %2688 = vmatpush1.msra.mxu0 0.0
    %2689 = vmatprep.mubr.f32.mxu0 0.0
    %2690 = vmatmul.mubr.f32.gmra.mrb[0].mxu0 %v2245
    %v2691 = vpop.f32.mrb[0].mxu0
    %v2692 = vpop.f32.mrb[0].mxu0
    %2693 = vmatprep.mubr.f32.mxu0 0.0
    %2694 = vmatmul.mubr.f32.gmra.mrb[0].mxu0 %v2248
    %v2695 = vpop.f32.mrb[0].mxu0
    %v2696 = vadd.f32 0.0, %v2695
    %v2697 = vpop.f32.mrb[0].mxu0
    %v2698 = vadd.f32 0.0, %v2697
    %2699 = vdwg.mxu0
    %2700 = vmatprep.subr.mxu0 %v2158
    %2701 = vmatpush1.msra.mxu0 %v2157
    %2702 = vmatprep.subr.mxu0 %v2172
    %2703 = vmatpush1.msra.mxu0 %v2171
    %2704 = vmatprep.subr.mxu0 %v2186
    %2705 = vmatpush1.msra.mxu0 %v2185
    %2706 = vmatprep.subr.mxu0 %v2200
    %2707 = vmatpush1.msra.mxu0 %v2199
    %2708 = vmatprep.subr.mxu0 %v2214
    %2709 = vmatpush1.msra.mxu0 %v2213
    %2710 = vmatprep.subr.mxu0 %v2228
    %2711 = vmatpush1.msra.mxu0 %v2227
    %2712 = vmatprep.subr.mxu0 %v2242
    %2713 = vmatpush1.msra.mxu0 %v2241
    %2714 = vmatprep.subr.mxu0 0.0
    %2715 = vmatpush1.msra.mxu0 0.0
    %2716 = vmatprep.subr.mxu0 0.0
    %2717 = vmatpush1.msra.mxu0 0.0
    %2718 = vmatprep.subr.mxu0 0.0
    %2719 = vmatpush1.msra.mxu0 0.0
    %2720 = vmatprep.subr.mxu0 0.0
    %2721 = vmatpush1.msra.mxu0 0.0
    %2722 = vmatprep.subr.mxu0 0.0
    %2723 = vmatpush1.msra.mxu0 0.0
    %2724 = vmatprep.subr.mxu0 0.0
    %2725 = vmatpush1.msra.mxu0 0.0
    %2726 = vmatprep.subr.mxu0 0.0
    %2727 = vmatpush1.msra.mxu0 0.0
    %2728 = vmatprep.subr.mxu0 0.0
    %2729 = vmatpush1.msra.mxu0 0.0
    %2730 = vmatprep.subr.mxu0 0.0
    %2731 = vmatpush1.msra.mxu0 0.0
    %2732 = vmatprep.subr.mxu0 0.0
    %2733 = vmatpush1.msra.mxu0 0.0
    %2734 = vmatprep.subr.mxu0 0.0
    %2735 = vmatpush1.msra.mxu0 0.0
    %2736 = vmatprep.subr.mxu0 0.0
    %2737 = vmatpush1.msra.mxu0 0.0
    %2738 = vmatprep.subr.mxu0 0.0
    %2739 = vmatpush1.msra.mxu0 0.0
    %2740 = vmatprep.subr.mxu0 0.0
    %2741 = vmatpush1.msra.mxu0 0.0
    %2742 = vmatprep.subr.mxu0 0.0
    %2743 = vmatpush1.msra.mxu0 0.0
    %2744 = vmatprep.subr.mxu0 0.0
    %2745 = vmatpush1.msra.mxu0 0.0
    %2746 = vmatprep.subr.mxu0 0.0
    %2747 = vmatpush1.msra.mxu0 0.0
    %2748 = vmatprep.subr.mxu0 0.0
    %2749 = vmatpush1.msra.mxu0 0.0
    %2750 = vmatprep.subr.mxu0 0.0
    %2751 = vmatpush1.msra.mxu0 0.0
    %2752 = vmatprep.subr.mxu0 0.0
    %2753 = vmatpush1.msra.mxu0 0.0
    %2754 = vmatprep.subr.mxu0 0.0
    %2755 = vmatpush1.msra.mxu0 0.0
    %2756 = vmatprep.subr.mxu0 0.0
    %2757 = vmatpush1.msra.mxu0 0.0
    %2758 = vmatprep.subr.mxu0 0.0
    %2759 = vmatpush1.msra.mxu0 0.0
    %2760 = vmatprep.subr.mxu0 0.0
    %2761 = vmatpush1.msra.mxu0 0.0
    %2762 = vmatprep.subr.mxu0 0.0
    %2763 = vmatpush1.msra.mxu0 0.0
    %2764 = vmatprep.mubr.f32.mxu0 0.0
    %2765 = vmatmul.mubr.f32.gmra.mrb[0].mxu0 %v2245
    %v2766 = vpop.f32.mrb[0].mxu0
    %v2767 = vpop.f32.mrb[0].mxu0
    %2768 = vmatprep.mubr.f32.mxu0 0.0
    %2769 = vmatmul.mubr.f32.gmra.mrb[0].mxu0 %v2248
    %v2770 = vpop.f32.mrb[0].mxu0
    %v2771 = vadd.f32 0.0, %v2770
    %v2772 = vpop.f32.mrb[0].mxu0
    %v2773 = vadd.f32 0.0, %v2772
    %2774 = vdwg.mxu0
    %v2777 = vrot.slane %v2392, 2
    %v2778 = vrot.slane %v2394, 2
    %v2781 = vadd.f32 %v2317, %v2777
    %v2782 = vadd.f32 %v2319, %v2778
    %v2785 = vrot.slane %v2467, 4
    %v2786 = vrot.slane %v2469, 4
    %v2789 = vadd.f32 %v2781, %v2785
    %v2790 = vadd.f32 %v2782, %v2786
    %v2793 = vrot.slane %v2542, 6
    %v2794 = vrot.slane %v2544, 6
    %v2797 = vadd.f32 %v2789, %v2793
    %v2798 = vadd.f32 %v2790, %v2794
    %v2799 = vadd.f32 %v2797, %v2621
    %v2800 = vadd.f32 %v2798, %v2623
    %v2803 = vrot.slane %v2696, 2
    %v2804 = vrot.slane %v2698, 2
    %v2807 = vadd.f32 %v2799, %v2803
    %v2808 = vadd.f32 %v2800, %v2804
    %v2811 = vrot.slane %v2771, 4
    %v2812 = vrot.slane %v2773, 4
    %v2815 = vadd.f32 %v2807, %v2811
    %v2816 = vadd.f32 %v2808, %v2812
    %v2817 = vld [vmem:[%s14] sm:$0x3]
    %v2819 = vlaneseq
    %v2820 = vshrl.u32 %v2819, 7
    %v2821 = vsub.s32 0, %v2820
    %v2822 = vrot.slane %v2817, %v2821
    %v2823 = vlaneseq
    %v2824 = vshrl.u32 %v2823, 7
    %v2825 = vsub.s32 1, %v2824
    %v2826 = vrot.slane %v2817, %v2825
    %v2829 = vadd.f32 %v2815, %v2822
    %v2830 = vadd.f32 %v2816, %v2826
    %v2831 = vld [vmem:[%s15] sm:$0xff]
    %v2832 = vld [vmem:[%s15 + $0x8] sm:$0xff]
    %v2833 = vld [vmem:[%s15 + $0x10] sm:$0xff]
    %v2834 = vld [vmem:[%s15 + $0x18] sm:$0xff]
    %v2835 = vld [vmem:[%s15 + $0x20] sm:$0xff]
    %v2836 = vld [vmem:[%s15 + $0x28] sm:$0xff]
    %v2837 = vld [vmem:[%s15 + $0x30] sm:$0xff]
    %v2838 = vld [vmem:[%s15 + $0x38] sm:$0xff]
    %v2839 = vld [vmem:[%s15 + $0x40] sm:$0xff]
    %v2840 = vld [vmem:[%s15 + $0x48] sm:$0xff]
    %v2841 = vld [vmem:[%s15 + $0x50] sm:$0xff]
    %v2842 = vld [vmem:[%s15 + $0x58] sm:$0xff]
    %v2843 = vld [vmem:[%s15 + $0x60] sm:$0xff]
    %v2844 = vld [vmem:[%s15 + $0x68] sm:$0xff]
    %v2845 = vld [vmem:[%s15 + $0x70] sm:$0xff]
    %v2846 = vld [vmem:[%s15 + $0x78] sm:$0xff]
    %v2847 = vld [vmem:[%s15 + $0x80] sm:$0xff]
    %v2848 = vld [vmem:[%s15 + $0x88] sm:$0xff]
    %v2849 = vld [vmem:[%s15 + $0x90] sm:$0xff]
    %v2850 = vld [vmem:[%s15 + $0x98] sm:$0xff]
    %v2851 = vld [vmem:[%s15 + $0xa0] sm:$0xff]
    %v2852 = vld [vmem:[%s15 + $0xa8] sm:$0xff]
    %v2853 = vld [vmem:[%s15 + $0xb0] sm:$0xff]
    %v2854 = vld [vmem:[%s15 + $0xb8] sm:$0xff]
    %v2855 = vld [vmem:[%s15 + $0xc0] sm:$0xff]
    %v2856 = vld [vmem:[%s15 + $0xc8] sm:$0xff]
    %v2857 = vld [vmem:[%s15 + $0xd0] sm:$0xff]
    %v2858 = vld [vmem:[%s15 + $0xd8] sm:$0xff]
    %v2859 = vld [vmem:[%s15 + $0xe0] sm:$0xff]
    %v2860 = vld [vmem:[%s15 + $0xe8] sm:$0xff]
    %v2861 = vld [vmem:[%s15 + $0xf0] sm:$0xff]
    %v2862 = vld [vmem:[%s15 + $0xf8] sm:$0xff]
    %v2863 = vld [vmem:[%s16] sm:$0x1]
    %v2865 = vlaneseq
    %v2866 = vshrl.u32 %v2865, 7
    %v2867 = vsub.s32 0, %v2866
    %v2868 = vrot.slane %v2863, %v2867
    %2870 = vmatprep.subr.mxu0 0.0
    %2871 = vmatpush1.msra.mxu0 %v2831
    %2872 = vmatprep.subr.mxu0 0.0
    %2873 = vmatpush1.msra.mxu0 %v2832
    %2874 = vmatprep.subr.mxu0 0.0
    %2875 = vmatpush1.msra.mxu0 %v2833
    %2876 = vmatprep.subr.mxu0 0.0
    %2877 = vmatpush1.msra.mxu0 %v2834
    %2878 = vmatprep.subr.mxu0 0.0
    %2879 = vmatpush1.msra.mxu0 %v2835
    %2880 = vmatprep.subr.mxu0 0.0
    %2881 = vmatpush1.msra.mxu0 %v2836
    %2882 = vmatprep.subr.mxu0 0.0
    %2883 = vmatpush1.msra.mxu0 %v2837
    %2884 = vmatprep.subr.mxu0 0.0
    %2885 = vmatpush1.msra.mxu0 %v2838
    %2886 = vmatprep.subr.mxu0 0.0
    %2887 = vmatpush1.msra.mxu0 %v2839
    %2888 = vmatprep.subr.mxu0 0.0
    %2889 = vmatpush1.msra.mxu0 %v2840
    %2890 = vmatprep.subr.mxu0 0.0
    %2891 = vmatpush1.msra.mxu0 %v2841
    %2892 = vmatprep.subr.mxu0 0.0
    %2893 = vmatpush1.msra.mxu0 %v2842
    %2894 = vmatprep.subr.mxu0 0.0
    %2895 = vmatpush1.msra.mxu0 %v2843
    %2896 = vmatprep.subr.mxu0 0.0
    %2897 = vmatpush1.msra.mxu0 %v2844
    %2898 = vmatprep.subr.mxu0 0.0
    %2899 = vmatpush1.msra.mxu0 %v2845
    %2900 = vmatprep.subr.mxu0 0.0
    %2901 = vmatpush1.msra.mxu0 %v2846
    %2902 = vmatprep.subr.mxu0 0.0
    %2903 = vmatpush1.msra.mxu0 %v2847
    %2904 = vmatprep.subr.mxu0 0.0
    %2905 = vmatpush1.msra.mxu0 %v2848
    %2906 = vmatprep.subr.mxu0 0.0
    %2907 = vmatpush1.msra.mxu0 %v2849
    %2908 = vmatprep.subr.mxu0 0.0
    %2909 = vmatpush1.msra.mxu0 %v2850
    %2910 = vmatprep.subr.mxu0 0.0
    %2911 = vmatpush1.msra.mxu0 %v2851
    %2912 = vmatprep.subr.mxu0 0.0
    %2913 = vmatpush1.msra.mxu0 %v2852
    %2914 = vmatprep.subr.mxu0 0.0
    %2915 = vmatpush1.msra.mxu0 %v2853
    %2916 = vmatprep.subr.mxu0 0.0
    %2917 = vmatpush1.msra.mxu0 %v2854
    %2918 = vmatprep.subr.mxu0 0.0
    %2919 = vmatpush1.msra.mxu0 %v2855
    %2920 = vmatprep.subr.mxu0 0.0
    %2921 = vmatpush1.msra.mxu0 %v2856
    %2922 = vmatprep.subr.mxu0 0.0
    %2923 = vmatpush1.msra.mxu0 %v2857
    %2924 = vmatprep.subr.mxu0 0.0
    %2925 = vmatpush1.msra.mxu0 %v2858
    %2926 = vmatprep.subr.mxu0 0.0
    %2927 = vmatpush1.msra.mxu0 %v2859
    %2928 = vmatprep.subr.mxu0 0.0
    %2929 = vmatpush1.msra.mxu0 %v2860
    %2930 = vmatprep.subr.mxu0 0.0
    %2931 = vmatpush1.msra.mxu0 %v2861
    %2932 = vmatprep.subr.mxu0 0.0
    %2933 = vmatpush1.msra.mxu0 %v2862
    %2934 = vmatprep.mubr.f32.mxu0 %v2830
    %2935 = vmatmul.mubr.f32.gmra.mrb[0].mxu0 %v2829
    %v2936 = vpop.f32.mrb[0].mxu0
    %v2937 = vadd.f32 %v2868, %v2936
    %v2938 = vpop.f32.mrb[0].mxu0
    %2939 = vdwg.mxu0
    %vm2940 = vcmask 74752
    %2941 = vst.msk [vmem:[#allocation2] sm:$0x3] %vm2940, %v2937
    // Predicated region
    $region70: #{mnist_forward.1} parent=1 // pred_check
      _
    $region71: #{mnist_forward.1} parent=1 // pred_check_branch
      %2943 = sbr.rel (0) target = $region73
    $region72: #{mnist_forward.1} parent=1 // pred_region
      %s2945 = ssub.s32 32, 32
      %2946 = vsyncadd [#allocation3], %s2945
      %s2948 = sshll.u32 [#allocation2], 4
      %s2949 = int_to_ptr.vmem [resolvable:$true] %s2948
      %2951 = dma.vmem_to_hbm [thread:$0]  %s2949, 32, %s17, [#allocation3]
    $region73: #{mnist_forward.1} parent=1 // pred_fallthru
      _
    // Predicated region
    $region74: #{mnist_forward.1} parent=1 // pred_check
      _
    $region75: #{mnist_forward.1} parent=1 // pred_check_branch
      %2953 = sbr.rel (0) target = $region77
    $region76: #{mnist_forward.1} parent=1 // pred_region
      %2954 = dma.done [#allocation3], 32
    $region77: #{mnist_forward.1} parent=1 // pred_fallthru
      _
    %2955 = vsyncpa [#allocation3], 1

</llo_original>
